<compile_context>
chip_gen: v7x
topology: tpu7x:2x2x1
jax: 0.10.0
libtpu: 0.0.40
codegen_flags: <defaults>
</compile_context>

<pallas_src>
import math

import jax
import jax.numpy as jnp
from jax.experimental import pallas as pl
from jax.experimental.pallas import tpu as pltpu


def _round_up(x: int, m: int) -> int:
    return (x + m - 1) // m * m


def _silu(x):
    # exp routes to the EUP (free slot while MXU/VALU are busy); keep it f32.
    return x * (1.0 / (1.0 + jnp.exp(-x)))


def _resident_spec(arr):
    """Whole-array block that stays put across the N grid (weights stay in VMEM)."""
    ndim = arr.ndim
    return pl.BlockSpec(tuple(arr.shape), lambda i, _n=ndim: (0,) * _n)


def _make_kernel(n_i: int, ff_dim: int, eps: float, matmul_dtype):
    def kernel(h_ref, v_ref,
               w1_ref, w2_ref,
               fwh_ref, fwv_ref, fb1_ref,
               f1w2_ref, f1b2_ref, f2w2_ref, f2b2_ref,
               lng_ref, lnb_ref,
               dh_ref, dv_ref):
        tn, d = h_ref.shape

        h = h_ref[...]                                   # (TN, D) f32
        v = v_ref[...]                                   # (I, TN, D)
        # Stack the I axis into M of the matmul (free reshape: TN % 8 == 0).
        v_flat = v.reshape(n_i * tn, d)

        hm = h.astype(matmul_dtype)
        vm = v_flat.astype(matmul_dtype)

        # ---- v1 = einsum('ndi,df->nfi'): one (I*TN, D) x (D, D) matmul ----
        v1 = jnp.dot(vm, w1_ref[...], preferred_element_type=jnp.float32)
        v1 = v1.reshape(n_i, tn, d)
        v1_norm = jnp.sqrt(jnp.sum(v1 * v1, axis=0))     # (TN, D) f32

        # ---- both MLP first layers fused:  cat([h, v1_norm]) @ [Wh; Wv] ----
        # fwh/fwv are (D, 2F) = [ffn1 | ffn2] fused along the output axis.
        pre = (jnp.dot(hm, fwh_ref[...], preferred_element_type=jnp.float32)
               + jnp.dot(v1_norm.astype(matmul_dtype), fwv_ref[...],
                         preferred_element_type=jnp.float32)
               + fb1_ref[...])                           # (TN, 2F) f32
        act = _silu(pre)
        a1 = act[:, :ff_dim]                             # ffn1 hidden
        a2 = act[:, ff_dim:]                             # ffn2 hidden

        dh = (jnp.dot(a1.astype(matmul_dtype), f1w2_ref[...],
                      preferred_element_type=jnp.float32) + f1b2_ref[...])
        dh_ref[...] = dh.astype(dh_ref.dtype)

        u = (jnp.dot(a2.astype(matmul_dtype), f2w2_ref[...],
                     preferred_element_type=jnp.float32) + f2b2_ref[...])

        # ---- LayerNorm(u) over last dim (biased variance, affine) ----
        mu = jnp.mean(u, axis=-1, keepdims=True)
        var = jnp.mean((u - mu) * (u - mu), axis=-1, keepdims=True)
        u_n = (u - mu) * jax.lax.rsqrt(var + eps) * lng_ref[...] + lnb_ref[...]

        # ---- v2 computed late (short live range), dv = LN(u)[..,None] * v2 ----
        v2 = jnp.dot(vm, w2_ref[...], preferred_element_type=jnp.float32)
        v2 = v2.reshape(n_i, tn, d)
        dv_ref[...] = (u_n[None, :, :] * v2).astype(dv_ref.dtype)

    return kernel


def equivariant_feedforward(h, v, params, *, block_n: int = 128,
                            matmul_dtype=jnp.bfloat16, v_layout: str = "ndi",
                            eps: float = 1e-5):
    """h: (N, D).  v: (N, D, I) if v_layout=='ndi' (PyTorch layout) or (I, N, D)
    if v_layout=='ind' (kernel-native, skips both HBM transposes).
    Returns (dh, dv) with dv in the same layout as v."""
    N, D = h.shape
    if v_layout == "ndi":
        assert v.shape[0] == N and v.shape[1] == D
        I = v.shape[2]
        # TODO(synk): have upstream producers feed v as (I, N, D) ("ind") to avoid
        # this full HBM pass over v (and the matching one on dv).
        v_t = jnp.transpose(v, (2, 0, 1))
    else:
        I = v.shape[0]
        assert v.shape == (I, N, D)
        v_t = v

    F = params["f1_w2"].shape[0]

    # --- tile over N; pad N to a multiple of the tile ---
    tn = min(block_n, _round_up(N, 8))
    Np = _round_up(N, tn)
    if Np != N:
        h_p = jnp.pad(h, ((0, Np - N), (0, 0)))
        v_p = jnp.pad(v_t, ((0, 0), (0, Np - N), (0, 0)))
    else:
        h_p, v_p = h, v_t
    num_tiles = Np // tn

    # Matmul weights in matmul_dtype (bf16 halves weight DMA + doubles MXU rate);
    # biases / LayerNorm params stay f32 (added to f32 accumulators).
    w1 = params["W1"].astype(matmul_dtype)
    w2 = params["W2"].astype(matmul_dtype)
    fwh = params["fwh"].astype(matmul_dtype)
    fwv = params["fwv"].astype(matmul_dtype)
    f1w2 = params["f1_w2"].astype(matmul_dtype)
    f2w2 = params["f2_w2"].astype(matmul_dtype)
    fb1 = params["fb1"].astype(jnp.float32)
    f1b2 = params["f1_b2"].astype(jnp.float32)
    f2b2 = params["f2_b2"].astype(jnp.float32)
    ln_g = params["ln_g"].astype(jnp.float32)
    ln_b = params["ln_b"].astype(jnp.float32)

    weights = (w1, w2, fwh, fwv, fb1, f1w2, f1b2, f2w2, f2b2, ln_g, ln_b)

    in_specs = [
        pl.BlockSpec((tn, D), lambda i: (i, 0)),        # h tile
        pl.BlockSpec((I, tn, D), lambda i: (0, i, 0)),  # v tile
    ] + [_resident_spec(w) for w in weights]
    out_specs = (
        pl.BlockSpec((tn, D), lambda i: (i, 0)),        # dh tile
        pl.BlockSpec((I, tn, D), lambda i: (0, i, 0)),  # dv tile
    )

    # --- VMEM budget estimate (weights + double-buffered act tiles + temporaries) ---
    weight_bytes = sum(int(a.size) * a.dtype.itemsize for a in weights)
    act_bytes = 2 * 2 * (tn * D + I * tn * D) * 4           # in+out, 2 buffers, f32
    tmp_bytes = (tn * 2 * F + 2 * I * tn * D + 4 * tn * D) * 4
    est = 2 * weight_bytes + act_bytes + tmp_bytes
    vmem_limit = int(min(max(2 * est, 32 * 1024 * 1024), 64 * 1024 * 1024))

    flops = int(2 * Np * (2 * I * D * D + 4 * D * F + 2 * F * D))
    transcendentals = int(Np * (4 * F + D + 2))
    bytes_accessed = int(2 * Np * D * 4 + 2 * I * Np * D * 4 + weight_bytes)

    dh, dv_t = pl.pallas_call(
        _make_kernel(I, F, eps, matmul_dtype),
        out_shape=(
            jax.ShapeDtypeStruct((Np, D), h.dtype),
            jax.ShapeDtypeStruct((I, Np, D), v.dtype),
        ),
        grid=(num_tiles,),
        in_specs=in_specs,
        out_specs=out_specs,
        compiler_params=pltpu.CompilerParams(
            dimension_semantics=("parallel",),
            vmem_limit_bytes=vmem_limit,
        ),
        cost_estimate=pl.CostEstimate(
            flops=flops, transcendentals=transcendentals,
            bytes_accessed=bytes_accessed),
    )(h_p, v_p, *weights)

    if Np != N:
        dh = dh[:N]
        dv_t = dv_t[:, :N, :]
    if v_layout == "ndi":
        return dh, jnp.transpose(dv_t, (1, 2, 0))
    return dh, dv_t


def _init_params(key, dim, ff_dim, dtype=jnp.float32):
    """Deterministic synthetic init (kaiming-uniform-like bounds).
    The two MLP first layers are stored fused along the output axis:
      fwh[:, :F] / fwv[:, :F] / fb1[:, :F]  -> ffn1,   [:, F:] -> ffn2."""
    ks = jax.random.split(key, 12)

    def unif(k, shape, fan_in):
        bound = 1.0 / math.sqrt(fan_in)
        return jax.random.uniform(k, shape, dtype, minval=-bound, maxval=bound)

    d2 = 2 * dim
    return {
        "W1": unif(ks[0], (dim, dim), dim),
        "W2": unif(ks[1], (dim, dim), dim),
        "fwh": unif(ks[2], (dim, 2 * ff_dim), d2),
        "fwv": unif(ks[3], (dim, 2 * ff_dim), d2),
        "fb1": unif(ks[4], (1, 2 * ff_dim), d2),
        "f1_w2": unif(ks[5], (ff_dim, dim), ff_dim),
        "f1_b2": unif(ks[6], (1, dim), ff_dim),
        "f2_w2": unif(ks[7], (ff_dim, dim), ff_dim),
        "f2_b2": unif(ks[8], (1, dim), ff_dim),
        "ln_g": jnp.ones((1, dim), dtype),
        "ln_b": jnp.zeros((1, dim), dtype),
    }


def _reference(h, v, p, eps=1e-5):
    """Plain-JAX reference of the PyTorch forward (same fused params)."""
    F = p["f1_w2"].shape[0]
    v1 = jnp.einsum("ndi,df->nfi", v, p["W1"])
    v2 = jnp.einsum("ndi,df->nfi", v, p["W2"])
    v1_norm = jnp.linalg.norm(v1, axis=-1)
    x = jnp.concatenate([h, v1_norm], axis=-1)

    w1_full = jnp.concatenate([p["fwh"][:, :F], p["fwv"][:, :F]], axis=0)
    dh = jax.nn.silu(x @ w1_full + p["fb1"][:, :F]) @ p["f1_w2"] + p["f1_b2"]

    w2_full = jnp.concatenate([p["fwh"][:, F:], p["fwv"][:, F:]], axis=0)
    u = jax.nn.silu(x @ w2_full + p["fb1"][:, F:]) @ p["f2_w2"] + p["f2_b2"]

    mu = u.mean(-1, keepdims=True)
    var = ((u - mu) ** 2).mean(-1, keepdims=True)
    u_n = (u - mu) / jnp.sqrt(var + eps) * p["ln_g"] + p["ln_b"]
    dv = u_n[..., None] * v2
    return dh, dv


def _max_rel_err(a, b):
    return float(jnp.max(jnp.abs(a - b)) / (jnp.max(jnp.abs(b)) + 1e-12))


if __name__ == "__main__":
    # Lane-dense demo shapes (D, F multiples of 128; two N tiles -> grid of 2).
    N, DIM, FF_DIM, I = 256, 128, 128, 3

    key = jax.random.PRNGKey(0)
    k_h, k_v, k_p = jax.random.split(key, 3)
    h = jax.random.normal(k_h, (N, DIM), jnp.float32)
    v = jax.random.normal(k_v, (N, DIM, I), jnp.float32)
    params = _init_params(k_p, DIM, FF_DIM)

    dh_ref, dv_ref = _reference(h, v, params)

    fwd_f32 = jax.jit(lambda a, b, p: equivariant_feedforward(
        a, b, p, matmul_dtype=jnp.float32))
    fwd_bf16 = jax.jit(lambda a, b, p: equivariant_feedforward(
        a, b, p, matmul_dtype=jnp.bfloat16))

    # f32 matmul path: tight check.
    dh32, dv32 = jax.block_until_ready(fwd_f32(h, v, params))
    assert dh32.shape == (N, DIM) and dv32.shape == (N, DIM, I)
    assert _max_rel_err(dh32, dh_ref) < 5e-3
    assert _max_rel_err(dv32, dv_ref) < 5e-3

    # bf16 matmul path (default, MXU-native): loose check.
    dh16, dv16 = jax.block_until_ready(fwd_bf16(h, v, params))
    assert dh16.shape == (N, DIM) and dv16.shape == (N, DIM, I)
    assert _max_rel_err(dh16, dh_ref) < 5e-2
    assert _max_rel_err(dv16, dv_ref) < 5e-2

    print("KERNEL_OK")
</pallas_src>

<mosaic_0001>
module attributes {stable_mosaic.version = 11 : i64} {
  func.func @kernel(%arg0: i32, %arg1: memref<128x128xf32, #tpu.memory_space<vmem>>, %arg2: memref<3x128x128xf32, #tpu.memory_space<vmem>>, %arg3: memref<128x128xf32, #tpu.memory_space<vmem>>, %arg4: memref<128x128xf32, #tpu.memory_space<vmem>>, %arg5: memref<128x256xf32, #tpu.memory_space<vmem>>, %arg6: memref<128x256xf32, #tpu.memory_space<vmem>>, %arg7: memref<1x256xf32, #tpu.memory_space<vmem>>, %arg8: memref<128x128xf32, #tpu.memory_space<vmem>>, %arg9: memref<1x128xf32, #tpu.memory_space<vmem>>, %arg10: memref<128x128xf32, #tpu.memory_space<vmem>>, %arg11: memref<1x128xf32, #tpu.memory_space<vmem>>, %arg12: memref<1x128xf32, #tpu.memory_space<vmem>>, %arg13: memref<1x128xf32, #tpu.memory_space<vmem>>, %arg14: memref<128x128xf32, #tpu.memory_space<vmem>>, %arg15: memref<3x128x128xf32, #tpu.memory_space<vmem>>) attributes {dimension_semantics = [#tpu.dimension_semantics<parallel>], iteration_bounds = array<i64: 2>, scalar_prefetch = 0 : i64, scratch_operands = 0 : i64, tpu.core_type = #tpu.core_type<tc>, window_params = [{transform_indices = @transform_0, window_bounds = array<i64: 128, 128>}, {transform_indices = @transform_1, window_bounds = array<i64: 3, 128, 128>}, {pipeline_mode = #tpu.pipeline_mode<synchronous>, transform_indices = @transform_2, window_bounds = array<i64: 128, 128>}, {pipeline_mode = #tpu.pipeline_mode<synchronous>, transform_indices = @transform_3, window_bounds = array<i64: 128, 128>}, {pipeline_mode = #tpu.pipeline_mode<synchronous>, transform_indices = @transform_4, window_bounds = array<i64: 128, 256>}, {pipeline_mode = #tpu.pipeline_mode<synchronous>, transform_indices = @transform_5, window_bounds = array<i64: 128, 256>}, {pipeline_mode = #tpu.pipeline_mode<synchronous>, transform_indices = @transform_6, window_bounds = array<i64: 1, 256>}, {pipeline_mode = #tpu.pipeline_mode<synchronous>, transform_indices = @transform_7, window_bounds = array<i64: 128, 128>}, {pipeline_mode = #tpu.pipeline_mode<synchronous>, transform_indices = @transform_8, window_bounds = array<i64: 1, 128>}, {pipeline_mode = #tpu.pipeline_mode<synchronous>, transform_indices = @transform_9, window_bounds = array<i64: 128, 128>}, {pipeline_mode = #tpu.pipeline_mode<synchronous>, transform_indices = @transform_10, window_bounds = array<i64: 1, 128>}, {pipeline_mode = #tpu.pipeline_mode<synchronous>, transform_indices = @transform_11, window_bounds = array<i64: 1, 128>}, {pipeline_mode = #tpu.pipeline_mode<synchronous>, transform_indices = @transform_12, window_bounds = array<i64: 1, 128>}, {transform_indices = @transform_13, window_bounds = array<i64: 128, 128>}, {transform_indices = @transform_14, window_bounds = array<i64: 3, 128, 128>}]} {
    %c0 = arith.constant 0 : index
    %c0_0 = arith.constant 0 : index
    %0 = vector.load %arg1[%c0, %c0_0] : memref<128x128xf32, #tpu.memory_space<vmem>>, vector<128x128xf32>
    %c0_1 = arith.constant 0 : index
    %c0_2 = arith.constant 0 : index
    %c0_3 = arith.constant 0 : index
    %1 = vector.load %arg2[%c0_1, %c0_2, %c0_3] : memref<3x128x128xf32, #tpu.memory_space<vmem>>, vector<3x128x128xf32>
    %2 = vector.shape_cast %1 : vector<3x128x128xf32> to vector<384x128xf32>
    %c0_4 = arith.constant 0 : index
    %c0_5 = arith.constant 0 : index
    %3 = vector.load %arg3[%c0_4, %c0_5] : memref<128x128xf32, #tpu.memory_space<vmem>>, vector<128x128xf32>
    %cst = arith.constant dense<0.000000e+00> : vector<384x128xf32>
    %4 = tpu.matmul %2, %3, %cst {dimension_numbers = #tpu.dot_dimension_numbers<[1], [0], [0], [1], [0, 0, 1, 1], [], []>} : vector<384x128xf32>, vector<128x128xf32>, vector<384x128xf32> -> vector<384x128xf32>
    %5 = vector.shape_cast %4 : vector<384x128xf32> to vector<3x128x128xf32>
    %6 = arith.mulf %5, %5 : vector<3x128x128xf32>
    %cst_6 = arith.constant dense<0.000000e+00> : vector<128x128xf32>
    %7 = vector.multi_reduction <add>, %6, %cst_6 [0] : vector<3x128x128xf32> to vector<128x128xf32>
    %8 = math.sqrt %7 : vector<128x128xf32>
    %c0_7 = arith.constant 0 : index
    %c0_8 = arith.constant 0 : index
    %9 = vector.load %arg5[%c0_7, %c0_8] : memref<128x256xf32, #tpu.memory_space<vmem>>, vector<128x256xf32>
    %cst_9 = arith.constant dense<0.000000e+00> : vector<128x256xf32>
    %10 = tpu.matmul %0, %9, %cst_9 {dimension_numbers = #tpu.dot_dimension_numbers<[1], [0], [0], [1], [0, 0, 1, 1], [], []>} : vector<128x128xf32>, vector<128x256xf32>, vector<128x256xf32> -> vector<128x256xf32>
    %c0_10 = arith.constant 0 : index
    %c0_11 = arith.constant 0 : index
    %11 = vector.load %arg6[%c0_10, %c0_11] : memref<128x256xf32, #tpu.memory_space<vmem>>, vector<128x256xf32>
    %cst_12 = arith.constant dense<0.000000e+00> : vector<128x256xf32>
    %12 = tpu.matmul %8, %11, %cst_12 {dimension_numbers = #tpu.dot_dimension_numbers<[1], [0], [0], [1], [0, 0, 1, 1], [], []>} : vector<128x128xf32>, vector<128x256xf32>, vector<128x256xf32> -> vector<128x256xf32>
    %13 = arith.addf %10, %12 : vector<128x256xf32>
    %c0_13 = arith.constant 0 : index
    %c0_14 = arith.constant 0 : index
    %14 = vector.load %arg7[%c0_13, %c0_14] : memref<1x256xf32, #tpu.memory_space<vmem>>, vector<1x256xf32>
    %15 = vector.broadcast %14 : vector<1x256xf32> to vector<128x256xf32>
    %16 = arith.addf %13, %15 : vector<128x256xf32>
    %cst_15 = arith.constant 0.000000e+00 : f32
    %17 = vector.broadcast %cst_15 : f32 to vector<128x256xf32>
    %18 = arith.subf %17, %16 : vector<128x256xf32>
    %19 = math.exp %18 : vector<128x256xf32>
    %cst_16 = arith.constant 1.000000e+00 : f32
    %20 = vector.broadcast %cst_16 : f32 to vector<128x256xf32>
    %21 = arith.addf %20, %19 : vector<128x256xf32>
    %cst_17 = arith.constant 1.000000e+00 : f32
    %22 = vector.broadcast %cst_17 : f32 to vector<128x256xf32>
    %23 = arith.divf %22, %21 : vector<128x256xf32>
    %24 = arith.mulf %16, %23 : vector<128x256xf32>
    %25 = vector.extract_strided_slice %24 {offsets = [0, 0], sizes = [128, 128], strides = [1, 1]} : vector<128x256xf32> to vector<128x128xf32>
    %26 = vector.extract_strided_slice %24 {offsets = [0, 128], sizes = [128, 128], strides = [1, 1]} : vector<128x256xf32> to vector<128x128xf32>
    %c0_18 = arith.constant 0 : index
    %c0_19 = arith.constant 0 : index
    %27 = vector.load %arg8[%c0_18, %c0_19] : memref<128x128xf32, #tpu.memory_space<vmem>>, vector<128x128xf32>
    %cst_20 = arith.constant dense<0.000000e+00> : vector<128x128xf32>
    %28 = tpu.matmul %25, %27, %cst_20 {dimension_numbers = #tpu.dot_dimension_numbers<[1], [0], [0], [1], [0, 0, 1, 1], [], []>} : vector<128x128xf32>, vector<128x128xf32>, vector<128x128xf32> -> vector<128x128xf32>
    %c0_21 = arith.constant 0 : index
    %c0_22 = arith.constant 0 : index
    %29 = vector.load %arg9[%c0_21, %c0_22] : memref<1x128xf32, #tpu.memory_space<vmem>>, vector<1x128xf32>
    %30 = vector.broadcast %29 : vector<1x128xf32> to vector<128x128xf32>
    %31 = arith.addf %28, %30 : vector<128x128xf32>
    %c0_23 = arith.constant 0 : index
    %c0_24 = arith.constant 0 : index
    %32 = vector.load %arg14[%c0_23, %c0_24] : memref<128x128xf32, #tpu.memory_space<vmem>>, vector<128x128xf32>
    tpu.vector_store %arg14[%c0_23, %c0_24], %31 {strides = array<i32>} : memref<128x128xf32, #tpu.memory_space<vmem>>, vector<128x128xf32>,
    %c0_25 = arith.constant 0 : index
    %c0_26 = arith.constant 0 : index
    %33 = vector.load %arg10[%c0_25, %c0_26] : memref<128x128xf32, #tpu.memory_space<vmem>>, vector<128x128xf32>
    %cst_27 = arith.constant dense<0.000000e+00> : vector<128x128xf32>
    %34 = tpu.matmul %26, %33, %cst_27 {dimension_numbers = #tpu.dot_dimension_numbers<[1], [0], [0], [1], [0, 0, 1, 1], [], []>} : vector<128x128xf32>, vector<128x128xf32>, vector<128x128xf32> -> vector<128x128xf32>
    %c0_28 = arith.constant 0 : index
    %c0_29 = arith.constant 0 : index
    %35 = vector.load %arg11[%c0_28, %c0_29] : memref<1x128xf32, #tpu.memory_space<vmem>>, vector<1x128xf32>
    %36 = vector.broadcast %35 : vector<1x128xf32> to vector<128x128xf32>
    %37 = arith.addf %34, %36 : vector<128x128xf32>
    %cst_30 = arith.constant dense<0.000000e+00> : vector<128xf32>
    %38 = vector.multi_reduction <add>, %37, %cst_30 [1] : vector<128x128xf32> to vector<128xf32>
    %39 = vector.shape_cast %38 : vector<128xf32> to vector<128x1xf32>
    %cst_31 = arith.constant 1.280000e+02 : f32
    %40 = vector.broadcast %cst_31 : f32 to vector<128x1xf32>
    %41 = arith.divf %39, %40 : vector<128x1xf32>
    %42 = vector.broadcast %41 : vector<128x1xf32> to vector<128x128xf32>
    %43 = arith.subf %37, %42 : vector<128x128xf32>
    %44 = vector.broadcast %41 : vector<128x1xf32> to vector<128x128xf32>
    %45 = arith.subf %37, %44 : vector<128x128xf32>
    %46 = arith.mulf %43, %45 : vector<128x128xf32>
    %cst_32 = arith.constant dense<0.000000e+00> : vector<128xf32>
    %47 = vector.multi_reduction <add>, %46, %cst_32 [1] : vector<128x128xf32> to vector<128xf32>
    %48 = vector.shape_cast %47 : vector<128xf32> to vector<128x1xf32>
    %cst_33 = arith.constant 1.280000e+02 : f32
    %49 = vector.broadcast %cst_33 : f32 to vector<128x1xf32>
    %50 = arith.divf %48, %49 : vector<128x1xf32>
    %51 = vector.broadcast %41 : vector<128x1xf32> to vector<128x128xf32>
    %52 = arith.subf %37, %51 : vector<128x128xf32>
    %cst_34 = arith.constant 9.99999974E-6 : f32
    %53 = vector.broadcast %cst_34 : f32 to vector<128x1xf32>
    %54 = arith.addf %50, %53 : vector<128x1xf32>
    %55 = math.rsqrt %54 : vector<128x1xf32>
    %56 = vector.broadcast %55 : vector<128x1xf32> to vector<128x128xf32>
    %57 = arith.mulf %52, %56 : vector<128x128xf32>
    %c0_35 = arith.constant 0 : index
    %c0_36 = arith.constant 0 : index
    %58 = vector.load %arg12[%c0_35, %c0_36] : memref<1x128xf32, #tpu.memory_space<vmem>>, vector<1x128xf32>
    %59 = vector.broadcast %58 : vector<1x128xf32> to vector<128x128xf32>
    %60 = arith.mulf %57, %59 : vector<128x128xf32>
    %c0_37 = arith.constant 0 : index
    %c0_38 = arith.constant 0 : index
    %61 = vector.load %arg13[%c0_37, %c0_38] : memref<1x128xf32, #tpu.memory_space<vmem>>, vector<1x128xf32>
    %62 = vector.broadcast %61 : vector<1x128xf32> to vector<128x128xf32>
    %63 = arith.addf %60, %62 : vector<128x128xf32>
    %c0_39 = arith.constant 0 : index
    %c0_40 = arith.constant 0 : index
    %64 = vector.load %arg4[%c0_39, %c0_40] : memref<128x128xf32, #tpu.memory_space<vmem>>, vector<128x128xf32>
    %cst_41 = arith.constant dense<0.000000e+00> : vector<384x128xf32>
    %65 = tpu.matmul %2, %64, %cst_41 {dimension_numbers = #tpu.dot_dimension_numbers<[1], [0], [0], [1], [0, 0, 1, 1], [], []>} : vector<384x128xf32>, vector<128x128xf32>, vector<384x128xf32> -> vector<384x128xf32>
    %66 = vector.shape_cast %65 : vector<384x128xf32> to vector<3x128x128xf32>
    %67 = vector.shape_cast %63 : vector<128x128xf32> to vector<1x128x128xf32>
    %68 = vector.broadcast %67 : vector<1x128x128xf32> to vector<3x128x128xf32>
    %69 = arith.mulf %68, %66 : vector<3x128x128xf32>
    %c0_42 = arith.constant 0 : index
    %c0_43 = arith.constant 0 : index
    %c0_44 = arith.constant 0 : index
    %70 = vector.load %arg15[%c0_42, %c0_43, %c0_44] : memref<3x128x128xf32, #tpu.memory_space<vmem>>, vector<3x128x128xf32>
    tpu.vector_store %arg15[%c0_42, %c0_43, %c0_44], %69 {strides = array<i32>} : memref<3x128x128xf32, #tpu.memory_space<vmem>>, vector<3x128x128xf32>,
    return
  }
  func.func @transform_0(%arg0: i32) -> (i32, i32) {
    %c0_i32 = arith.constant 0 : i32
    %c0_i32_0 = arith.constant 0 : i32
    return %arg0, %c0_i32 : i32, i32
  }
  func.func @transform_1(%arg0: i32) -> (i32, i32, i32) {
    %c0_i32 = arith.constant 0 : i32
    %c0_i32_0 = arith.constant 0 : i32
    %c0_i32_1 = arith.constant 0 : i32
    return %c0_i32, %arg0, %c0_i32_0 : i32, i32, i32
  }
  func.func @transform_2(%arg0: i32) -> (i32, i32) {
    %c0_i32 = arith.constant 0 : i32
    %c0_i32_0 = arith.constant 0 : i32
    %c0_i32_1 = arith.constant 0 : i32
    return %c0_i32, %c0_i32_0 : i32, i32
  }
  func.func @transform_3(%arg0: i32) -> (i32, i32) {
    %c0_i32 = arith.constant 0 : i32
    %c0_i32_0 = arith.constant 0 : i32
    %c0_i32_1 = arith.constant 0 : i32
    return %c0_i32, %c0_i32_0 : i32, i32
  }
  func.func @transform_4(%arg0: i32) -> (i32, i32) {
    %c0_i32 = arith.constant 0 : i32
    %c0_i32_0 = arith.constant 0 : i32
    %c0_i32_1 = arith.constant 0 : i32
    return %c0_i32, %c0_i32_0 : i32, i32
  }
  func.func @transform_5(%arg0: i32) -> (i32, i32) {
    %c0_i32 = arith.constant 0 : i32
    %c0_i32_0 = arith.constant 0 : i32
    %c0_i32_1 = arith.constant 0 : i32
    return %c0_i32, %c0_i32_0 : i32, i32
  }
  func.func @transform_6(%arg0: i32) -> (i32, i32) {
    %c0_i32 = arith.constant 0 : i32
    %c0_i32_0 = arith.constant 0 : i32
    %c0_i32_1 = arith.constant 0 : i32
    return %c0_i32, %c0_i32_0 : i32, i32
  }
  func.func @transform_7(%arg0: i32) -> (i32, i32) {
    %c0_i32 = arith.constant 0 : i32
    %c0_i32_0 = arith.constant 0 : i32
    %c0_i32_1 = arith.constant 0 : i32
    return %c0_i32, %c0_i32_0 : i32, i32
  }
  func.func @transform_8(%arg0: i32) -> (i32, i32) {
    %c0_i32 = arith.constant 0 : i32
    %c0_i32_0 = arith.constant 0 : i32
    %c0_i32_1 = arith.constant 0 : i32
    return %c0_i32, %c0_i32_0 : i32, i32
  }
  func.func @transform_9(%arg0: i32) -> (i32, i32) {
    %c0_i32 = arith.constant 0 : i32
    %c0_i32_0 = arith.constant 0 : i32
    %c0_i32_1 = arith.constant 0 : i32
    return %c0_i32, %c0_i32_0 : i32, i32
  }
  func.func @transform_10(%arg0: i32) -> (i32, i32) {
    %c0_i32 = arith.constant 0 : i32
    %c0_i32_0 = arith.constant 0 : i32
    %c0_i32_1 = arith.constant 0 : i32
    return %c0_i32, %c0_i32_0 : i32, i32
  }
  func.func @transform_11(%arg0: i32) -> (i32, i32) {
    %c0_i32 = arith.constant 0 : i32
    %c0_i32_0 = arith.constant 0 : i32
    %c0_i32_1 = arith.constant 0 : i32
    return %c0_i32, %c0_i32_0 : i32, i32
  }
  func.func @transform_12(%arg0: i32) -> (i32, i32) {
    %c0_i32 = arith.constant 0 : i32
    %c0_i32_0 = arith.constant 0 : i32
    %c0_i32_1 = arith.constant 0 : i32
    return %c0_i32, %c0_i32_0 : i32, i32
  }
  func.func @transform_13(%arg0: i32) -> (i32, i32) {
    %c0_i32 = arith.constant 0 : i32
    %c0_i32_0 = arith.constant 0 : i32
    return %arg0, %c0_i32 : i32, i32
  }
  func.func @transform_14(%arg0: i32) -> (i32, i32, i32) {
    %c0_i32 = arith.constant 0 : i32
    %c0_i32_0 = arith.constant 0 : i32
    %c0_i32_1 = arith.constant 0 : i32
    return %c0_i32, %arg0, %c0_i32_0 : i32, i32, i32
  }
}

</mosaic_0001>

<llo_original>
// kernel: _lambda_.1
$region0: #{_lambda_.1}
  #allocation0 [shape = 'u32[]', space=smem, size = 0x4, offset = 0x4, fixed_abs, tag = 'smem constant byte address 0x4 - core index']
  #allocation1 [shape = 'u32[144,128]{1,0:T(1,128)}', space=vmem, size = 0x12000, scoped, tag = 'internal scratch']
  #allocation19 [shape = 's32[]', space=sflag, size = 0x4, offset = 0, fixed_abs, tag = 'sflag constant byte address 0x0 - dummy sync flag']
  #allocation21 [shape = 's32[]', space=sflag, size = 0x4, offset = 0, fixed_abs, tag = 'sflag constant byte address 0x0 - dummy sync flag']
  %s0 = inlined_call_operand.hbm [shape: f32[256,128], index: 0, kind: input, shape index: {}]
  %s1 = inlined_call_operand.hbm [shape: f32[3,256,128], index: 1, kind: input, shape index: {}]
  %s2 = inlined_call_operand.hbm [shape: f32[128,128], index: 2, kind: input, shape index: {}]
  %s3 = inlined_call_operand.hbm [shape: f32[128,128], index: 3, kind: input, shape index: {}]
  %s4 = inlined_call_operand.hbm [shape: f32[128,256], index: 4, kind: input, shape index: {}]
  %s5 = inlined_call_operand.hbm [shape: f32[128,256], index: 5, kind: input, shape index: {}]
  %s6 = inlined_call_operand.vmem [shape: f32[1,256], index: 6, kind: input, shape index: {}]
  %s7 = inlined_call_operand.hbm [shape: f32[128,128], index: 7, kind: input, shape index: {}]
  %s8 = inlined_call_operand.vmem [shape: f32[1,128], index: 8, kind: input, shape index: {}]
  %s9 = inlined_call_operand.hbm [shape: f32[128,128], index: 9, kind: input, shape index: {}]
  %s10 = inlined_call_operand.vmem [shape: f32[1,128], index: 10, kind: input, shape index: {}]
  %s11 = inlined_call_operand.vmem [shape: f32[1,128], index: 11, kind: input, shape index: {}]
  %s12 = inlined_call_operand.vmem [shape: f32[1,128], index: 12, kind: input, shape index: {}]
  %s13 = inlined_call_operand.hbm [shape: f32[256,128], index: 13, kind: output, shape index: {0}]
  %s14 = inlined_call_operand.hbm [shape: f32[3,256,128], index: 14, kind: output, shape index: {1}]
  %15 = xla_tuple %s13, %s14
  %s16 = sld [smem:[#allocation0]]
  $region125: #{_lambda_.1} parent=0
    _
  %s18 = ssub.s32 1, %s16
  %s19 = scalar_select 0, %s18, %s16
  $region1: #{_lambda_.1} parent=0
    #allocation2 [shape = 'u8[131072]{0}', space=vmem, size = 0x20000, scoped, tag = 'input window, operand 0']
    #allocation3 [shape = 's32[2]{0}', space=sflag, size = 0x8, scoped, tag = 'scoped memory for _lambda_.1']
    #allocation4 [shape = 's32[2]{0}', space=sflag, size = 0x8, scoped, tag = 'scoped memory for _lambda_.1']
    #allocation5 [shape = 'u8[393216]{0}', space=vmem, size = 0x60000, scoped, tag = 'input window, operand 1']
    #allocation6 [shape = 's32[2]{0}', space=sflag, size = 0x8, scoped, tag = 'scoped memory for _lambda_.1']
    #allocation7 [shape = 'u8[65536]{0}', space=vmem, size = 0x10000, scoped, tag = 'input window, operand 2, single buffered']
    #allocation8 [shape = 'u8[65536]{0}', space=vmem, size = 0x10000, scoped, tag = 'input window, operand 3, single buffered']
    #allocation9 [shape = 's32[1]{0}', space=sflag, size = 0x4, scoped, tag = 'scoped memory for _lambda_.1']
    #allocation10 [shape = 'u8[131072]{0}', space=vmem, size = 0x20000, scoped, tag = 'input window, operand 4, single buffered']
    #allocation11 [shape = 'u8[131072]{0}', space=vmem, size = 0x20000, scoped, tag = 'input window, operand 5, single buffered']
    #allocation12 [shape = 's32[1]{0}', space=sflag, size = 0x4, scoped, tag = 'scoped memory for _lambda_.1']
    #allocation13 [shape = 'u8[65536]{0}', space=vmem, size = 0x10000, scoped, tag = 'input window, operand 7, single buffered']
    #allocation14 [shape = 'u8[65536]{0}', space=vmem, size = 0x10000, scoped, tag = 'input window, operand 9, single buffered']
    #allocation15 [shape = 's32[1]{0}', space=sflag, size = 0x4, scoped, tag = 'scoped memory for _lambda_.1']
    #allocation16 [shape = 'u8[131072]{0}', space=vmem, size = 0x20000, scoped, tag = 'output window, operand 0']
    #allocation17 [shape = 'u8[393216]{0}', space=vmem, size = 0x60000, scoped, tag = 'output window, operand 1']
    #allocation18 [shape = 's32[2]{0}', space=sflag, size = 0x8, scoped, tag = 'scoped memory for _lambda_.1']
    %20 = vsyncpa [#allocation3], 0
    %s21 = scalar_lea.sflag [#allocation3], 1
    %22 = vsyncpa %s21, 0
    %23 = vsyncpa [#allocation6], 0
    %s24 = scalar_lea.sflag [#allocation6], 1
    %25 = vsyncpa %s24, 0
    %26 = vsyncpa [#allocation9], 0
    %27 = vsyncpa [#allocation12], 0
    %28 = vsyncpa [#allocation15], 0
    %29 = vsyncpa [#allocation4], 0
    %s30 = scalar_lea.sflag [#allocation4], 1
    %31 = vsyncpa %s30, 0
    %32 = vsyncpa [#allocation18], 0
    %s33 = scalar_lea.sflag [#allocation18], 1
    %34 = vsyncpa %s33, 0
    loop: start=0, step=1, limit=4
    $region2: #{_lambda_.1} parent=1 // loop_pre_header
      _
    $region3: #{_lambda_.1} parent=1 // loop_header
      %s36 = sphi 0, %s40
      %p37 = scmp.ge.s32.totalorder %s36, 4
      %s46 = sphi 0, %s48
      %s49 = sphi 0, %s46
      %s50 = sphi 0, %s49
      %s66 = sphi 0, %s50
      %s72 = sphi 0, %s74
      %s75 = sphi 0, %s72
      %s76 = sphi 0, %s75
      %s92 = sphi 0, %s76
      %s96 = sphi 0, %s96
      %s98 = sphi 0, %s96
      %s99 = sphi 0, %s98
      %s113 = sphi 0, %s99
      %s117 = sphi 0, %s117
      %s119 = sphi 0, %s117
      %s120 = sphi 0, %s119
      %s134 = sphi 0, %s120
      %s138 = sphi 0, %s138
      %s140 = sphi 0, %s138
      %s141 = sphi 0, %s140
      %s155 = sphi 0, %s141
      %s159 = sphi 0, %s159
      %s161 = sphi 0, %s159
      %s162 = sphi 0, %s161
      %s176 = sphi 0, %s162
      %s180 = sphi 0, %s180
      %s182 = sphi 0, %s180
      %s183 = sphi 0, %s182
      %s197 = sphi 0, %s183
      %s201 = sphi 0, %s201
      %s203 = sphi 0, %s201
      %s204 = sphi 0, %s203
      %s218 = sphi 0, %s204
      %s222 = sphi 0, %s222
      %s224 = sphi 0, %s222
      %s225 = sphi 0, %s224
      %s239 = sphi 0, %s225
      %s243 = sphi 0, %s243
      %s245 = sphi 0, %s243
      %s246 = sphi 0, %s245
      %s260 = sphi 0, %s246
      %s264 = sphi 0, %s264
      %s266 = sphi 0, %s264
      %s267 = sphi 0, %s266
      %s281 = sphi 0, %s267
      %s285 = sphi 0, %s285
      %s287 = sphi 0, %s285
      %s288 = sphi 0, %s287
      %s302 = sphi 0, %s288
      %s306 = sphi 0, %s306
      %s308 = sphi 0, %s306
      %s309 = sphi 0, %s308
      %s323 = sphi 0, %s309
      %s329 = sphi 0, %s331
      %s332 = sphi 0, %s329
      %s333 = sphi 0, %s332
      %s349 = sphi 0, %s333
      %s355 = sphi 0, %s357
      %s358 = sphi 0, %s355
      %s359 = sphi 0, %s358
      %s375 = sphi 0, %s359
    $region4: #{_lambda_.1} parent=1 // loop_header_branch
      %39 = sbr.rel (%p37) target = $region8
    $region5: #{_lambda_.1} parent=1 // loop_body
      %s41 = ssub.s32 %s36, 1
      %s42 = ssub.s32 %s36, 2
      %s43 = sadd.s32 %s36, 1
      %s44 = ssub.s32 %s36, %s43
      %p45 = scmp.eq.s32.totalorder %s44, 0
      %s47 = sadd.s32 %s46, 1
      %s48 = scalar_select %p45, %s46, %s47
      %p51 = pneg %p45
      %p52 = scmp.eq.s32.totalorder %s36, 1
      %p53 = por %p51, %p52
      %p54 = scmp.ne.s32.totalorder %s46, %s49
      %p55 = scmp.eq.s32.totalorder %s36, 0
      %p56 = por %p54, %p55
      %p57 = scmp.ne.s32.totalorder %s46, %s49
      %p58 = scmp.eq.s32.totalorder %s41, 1
      %p59 = por %p57, %p58
      %p60 = scmp.ne.s32.totalorder %s49, %s50
      %p61 = scmp.eq.s32.totalorder %s41, 0
      %p62 = por %p60, %p61
      %p63 = scmp.ne.s32.totalorder %s49, %s50
      %p64 = scmp.eq.s32.totalorder %s42, 1
      %p65 = por %p63, %p64
      %p67 = scmp.ne.s32.totalorder %s50, %s66
      %p68 = scmp.eq.s32.totalorder %s42, 0
      %p69 = por %p67, %p68
      %s70 = ssub.s32 %s36, %s43
      %p71 = scmp.eq.s32.totalorder %s70, 0
      %s73 = sadd.s32 %s72, 1
      %s74 = scalar_select %p71, %s72, %s73
      %p77 = pneg %p71
      %p78 = scmp.eq.s32.totalorder %s36, 1
      %p79 = por %p77, %p78
      %p80 = scmp.ne.s32.totalorder %s72, %s75
      %p81 = scmp.eq.s32.totalorder %s36, 0
      %p82 = por %p80, %p81
      %p83 = scmp.ne.s32.totalorder %s72, %s75
      %p84 = scmp.eq.s32.totalorder %s41, 1
      %p85 = por %p83, %p84
      %p86 = scmp.ne.s32.totalorder %s75, %s76
      %p87 = scmp.eq.s32.totalorder %s41, 0
      %p88 = por %p86, %p87
      %p89 = scmp.ne.s32.totalorder %s75, %s76
      %p90 = scmp.eq.s32.totalorder %s42, 1
      %p91 = por %p89, %p90
      %p93 = scmp.ne.s32.totalorder %s76, %s92
      %p94 = scmp.eq.s32.totalorder %s42, 0
      %p95 = por %p93, %p94
      %s97 = sadd.s32 %s96, 1
      %p100 = scmp.eq.s32.totalorder %s36, 1
      %p101 = scmp.ne.s32.totalorder %s96, %s98
      %p102 = scmp.eq.s32.totalorder %s36, 0
      %p103 = por %p101, %p102
      %p104 = scmp.ne.s32.totalorder %s96, %s98
      %p105 = scmp.eq.s32.totalorder %s41, 1
      %p106 = por %p104, %p105
      %p107 = scmp.ne.s32.totalorder %s98, %s99
      %p108 = scmp.eq.s32.totalorder %s41, 0
      %p109 = por %p107, %p108
      %p110 = scmp.ne.s32.totalorder %s98, %s99
      %p111 = scmp.eq.s32.totalorder %s42, 1
      %p112 = por %p110, %p111
      %p114 = scmp.ne.s32.totalorder %s99, %s113
      %p115 = scmp.eq.s32.totalorder %s42, 0
      %p116 = por %p114, %p115
      %s118 = sadd.s32 %s117, 1
      %p121 = scmp.eq.s32.totalorder %s36, 1
      %p122 = scmp.ne.s32.totalorder %s117, %s119
      %p123 = scmp.eq.s32.totalorder %s36, 0
      %p124 = por %p122, %p123
      %p125 = scmp.ne.s32.totalorder %s117, %s119
      %p126 = scmp.eq.s32.totalorder %s41, 1
      %p127 = por %p125, %p126
      %p128 = scmp.ne.s32.totalorder %s119, %s120
      %p129 = scmp.eq.s32.totalorder %s41, 0
      %p130 = por %p128, %p129
      %p131 = scmp.ne.s32.totalorder %s119, %s120
      %p132 = scmp.eq.s32.totalorder %s42, 1
      %p133 = por %p131, %p132
      %p135 = scmp.ne.s32.totalorder %s120, %s134
      %p136 = scmp.eq.s32.totalorder %s42, 0
      %p137 = por %p135, %p136
      %s139 = sadd.s32 %s138, 1
      %p142 = scmp.eq.s32.totalorder %s36, 1
      %p143 = scmp.ne.s32.totalorder %s138, %s140
      %p144 = scmp.eq.s32.totalorder %s36, 0
      %p145 = por %p143, %p144
      %p146 = scmp.ne.s32.totalorder %s138, %s140
      %p147 = scmp.eq.s32.totalorder %s41, 1
      %p148 = por %p146, %p147
      %p149 = scmp.ne.s32.totalorder %s140, %s141
      %p150 = scmp.eq.s32.totalorder %s41, 0
      %p151 = por %p149, %p150
      %p152 = scmp.ne.s32.totalorder %s140, %s141
      %p153 = scmp.eq.s32.totalorder %s42, 1
      %p154 = por %p152, %p153
      %p156 = scmp.ne.s32.totalorder %s141, %s155
      %p157 = scmp.eq.s32.totalorder %s42, 0
      %p158 = por %p156, %p157
      %s160 = sadd.s32 %s159, 1
      %p163 = scmp.eq.s32.totalorder %s36, 1
      %p164 = scmp.ne.s32.totalorder %s159, %s161
      %p165 = scmp.eq.s32.totalorder %s36, 0
      %p166 = por %p164, %p165
      %p167 = scmp.ne.s32.totalorder %s159, %s161
      %p168 = scmp.eq.s32.totalorder %s41, 1
      %p169 = por %p167, %p168
      %p170 = scmp.ne.s32.totalorder %s161, %s162
      %p171 = scmp.eq.s32.totalorder %s41, 0
      %p172 = por %p170, %p171
      %p173 = scmp.ne.s32.totalorder %s161, %s162
      %p174 = scmp.eq.s32.totalorder %s42, 1
      %p175 = por %p173, %p174
      %p177 = scmp.ne.s32.totalorder %s162, %s176
      %p178 = scmp.eq.s32.totalorder %s42, 0
      %p179 = por %p177, %p178
      %s181 = sadd.s32 %s180, 1
      %p184 = scmp.eq.s32.totalorder %s36, 1
      %p185 = scmp.ne.s32.totalorder %s180, %s182
      %p186 = scmp.eq.s32.totalorder %s36, 0
      %p187 = por %p185, %p186
      %p188 = scmp.ne.s32.totalorder %s180, %s182
      %p189 = scmp.eq.s32.totalorder %s41, 1
      %p190 = por %p188, %p189
      %p191 = scmp.ne.s32.totalorder %s182, %s183
      %p192 = scmp.eq.s32.totalorder %s41, 0
      %p193 = por %p191, %p192
      %p194 = scmp.ne.s32.totalorder %s182, %s183
      %p195 = scmp.eq.s32.totalorder %s42, 1
      %p196 = por %p194, %p195
      %p198 = scmp.ne.s32.totalorder %s183, %s197
      %p199 = scmp.eq.s32.totalorder %s42, 0
      %p200 = por %p198, %p199
      %s202 = sadd.s32 %s201, 1
      %p205 = scmp.eq.s32.totalorder %s36, 1
      %p206 = scmp.ne.s32.totalorder %s201, %s203
      %p207 = scmp.eq.s32.totalorder %s36, 0
      %p208 = por %p206, %p207
      %p209 = scmp.ne.s32.totalorder %s201, %s203
      %p210 = scmp.eq.s32.totalorder %s41, 1
      %p211 = por %p209, %p210
      %p212 = scmp.ne.s32.totalorder %s203, %s204
      %p213 = scmp.eq.s32.totalorder %s41, 0
      %p214 = por %p212, %p213
      %p215 = scmp.ne.s32.totalorder %s203, %s204
      %p216 = scmp.eq.s32.totalorder %s42, 1
      %p217 = por %p215, %p216
      %p219 = scmp.ne.s32.totalorder %s204, %s218
      %p220 = scmp.eq.s32.totalorder %s42, 0
      %p221 = por %p219, %p220
      %s223 = sadd.s32 %s222, 1
      %p226 = scmp.eq.s32.totalorder %s36, 1
      %p227 = scmp.ne.s32.totalorder %s222, %s224
      %p228 = scmp.eq.s32.totalorder %s36, 0
      %p229 = por %p227, %p228
      %p230 = scmp.ne.s32.totalorder %s222, %s224
      %p231 = scmp.eq.s32.totalorder %s41, 1
      %p232 = por %p230, %p231
      %p233 = scmp.ne.s32.totalorder %s224, %s225
      %p234 = scmp.eq.s32.totalorder %s41, 0
      %p235 = por %p233, %p234
      %p236 = scmp.ne.s32.totalorder %s224, %s225
      %p237 = scmp.eq.s32.totalorder %s42, 1
      %p238 = por %p236, %p237
      %p240 = scmp.ne.s32.totalorder %s225, %s239
      %p241 = scmp.eq.s32.totalorder %s42, 0
      %p242 = por %p240, %p241
      %s244 = sadd.s32 %s243, 1
      %p247 = scmp.eq.s32.totalorder %s36, 1
      %p248 = scmp.ne.s32.totalorder %s243, %s245
      %p249 = scmp.eq.s32.totalorder %s36, 0
      %p250 = por %p248, %p249
      %p251 = scmp.ne.s32.totalorder %s243, %s245
      %p252 = scmp.eq.s32.totalorder %s41, 1
      %p253 = por %p251, %p252
      %p254 = scmp.ne.s32.totalorder %s245, %s246
      %p255 = scmp.eq.s32.totalorder %s41, 0
      %p256 = por %p254, %p255
      %p257 = scmp.ne.s32.totalorder %s245, %s246
      %p258 = scmp.eq.s32.totalorder %s42, 1
      %p259 = por %p257, %p258
      %p261 = scmp.ne.s32.totalorder %s246, %s260
      %p262 = scmp.eq.s32.totalorder %s42, 0
      %p263 = por %p261, %p262
      %s265 = sadd.s32 %s264, 1
      %p268 = scmp.eq.s32.totalorder %s36, 1
      %p269 = scmp.ne.s32.totalorder %s264, %s266
      %p270 = scmp.eq.s32.totalorder %s36, 0
      %p271 = por %p269, %p270
      %p272 = scmp.ne.s32.totalorder %s264, %s266
      %p273 = scmp.eq.s32.totalorder %s41, 1
      %p274 = por %p272, %p273
      %p275 = scmp.ne.s32.totalorder %s266, %s267
      %p276 = scmp.eq.s32.totalorder %s41, 0
      %p277 = por %p275, %p276
      %p278 = scmp.ne.s32.totalorder %s266, %s267
      %p279 = scmp.eq.s32.totalorder %s42, 1
      %p280 = por %p278, %p279
      %p282 = scmp.ne.s32.totalorder %s267, %s281
      %p283 = scmp.eq.s32.totalorder %s42, 0
      %p284 = por %p282, %p283
      %s286 = sadd.s32 %s285, 1
      %p289 = scmp.eq.s32.totalorder %s36, 1
      %p290 = scmp.ne.s32.totalorder %s285, %s287
      %p291 = scmp.eq.s32.totalorder %s36, 0
      %p292 = por %p290, %p291
      %p293 = scmp.ne.s32.totalorder %s285, %s287
      %p294 = scmp.eq.s32.totalorder %s41, 1
      %p295 = por %p293, %p294
      %p296 = scmp.ne.s32.totalorder %s287, %s288
      %p297 = scmp.eq.s32.totalorder %s41, 0
      %p298 = por %p296, %p297
      %p299 = scmp.ne.s32.totalorder %s287, %s288
      %p300 = scmp.eq.s32.totalorder %s42, 1
      %p301 = por %p299, %p300
      %p303 = scmp.ne.s32.totalorder %s288, %s302
      %p304 = scmp.eq.s32.totalorder %s42, 0
      %p305 = por %p303, %p304
      %s307 = sadd.s32 %s306, 1
      %p310 = scmp.eq.s32.totalorder %s36, 1
      %p311 = scmp.ne.s32.totalorder %s306, %s308
      %p312 = scmp.eq.s32.totalorder %s36, 0
      %p313 = por %p311, %p312
      %p314 = scmp.ne.s32.totalorder %s306, %s308
      %p315 = scmp.eq.s32.totalorder %s41, 1
      %p316 = por %p314, %p315
      %p317 = scmp.ne.s32.totalorder %s308, %s309
      %p318 = scmp.eq.s32.totalorder %s41, 0
      %p319 = por %p317, %p318
      %p320 = scmp.ne.s32.totalorder %s308, %s309
      %p321 = scmp.eq.s32.totalorder %s42, 1
      %p322 = por %p320, %p321
      %p324 = scmp.ne.s32.totalorder %s309, %s323
      %p325 = scmp.eq.s32.totalorder %s42, 0
      %p326 = por %p324, %p325
      %s327 = ssub.s32 %s36, %s43
      %p328 = scmp.eq.s32.totalorder %s327, 0
      %s330 = sadd.s32 %s329, 1
      %s331 = scalar_select %p328, %s329, %s330
      %p334 = pneg %p328
      %p335 = scmp.eq.s32.totalorder %s36, 1
      %p336 = por %p334, %p335
      %p337 = scmp.ne.s32.totalorder %s329, %s332
      %p338 = scmp.eq.s32.totalorder %s36, 0
      %p339 = por %p337, %p338
      %p340 = scmp.ne.s32.totalorder %s329, %s332
      %p341 = scmp.eq.s32.totalorder %s41, 1
      %p342 = por %p340, %p341
      %p343 = scmp.ne.s32.totalorder %s332, %s333
      %p344 = scmp.eq.s32.totalorder %s41, 0
      %p345 = por %p343, %p344
      %p346 = scmp.ne.s32.totalorder %s332, %s333
      %p347 = scmp.eq.s32.totalorder %s42, 1
      %p348 = por %p346, %p347
      %p350 = scmp.ne.s32.totalorder %s333, %s349
      %p351 = scmp.eq.s32.totalorder %s42, 0
      %p352 = por %p350, %p351
      %s353 = ssub.s32 %s36, %s43
      %p354 = scmp.eq.s32.totalorder %s353, 0
      %s356 = sadd.s32 %s355, 1
      %s357 = scalar_select %p354, %s355, %s356
      %p360 = pneg %p354
      %p361 = scmp.eq.s32.totalorder %s36, 1
      %p362 = por %p360, %p361
      %p363 = scmp.ne.s32.totalorder %s355, %s358
      %p364 = scmp.eq.s32.totalorder %s36, 0
      %p365 = por %p363, %p364
      %p366 = scmp.ne.s32.totalorder %s355, %s358
      %p367 = scmp.eq.s32.totalorder %s41, 1
      %p368 = por %p366, %p367
      %p369 = scmp.ne.s32.totalorder %s358, %s359
      %p370 = scmp.eq.s32.totalorder %s41, 0
      %p371 = por %p369, %p370
      %p372 = scmp.ne.s32.totalorder %s358, %s359
      %p373 = scmp.eq.s32.totalorder %s42, 1
      %p374 = por %p372, %p373
      %p376 = scmp.ne.s32.totalorder %s359, %s375
      %p377 = scmp.eq.s32.totalorder %s42, 0
      %p378 = por %p376, %p377
      %p379 = scmp.le.s32.totalorder 1, %s36
      %p380 = scmp.lt.s32.totalorder %s36, 3
      %p381 = pnand %p379, %p380
      %p382 = pneg %p381
      // Predicated region
      $region9: #{_lambda_.1} parent=5 // pred_check
        _
      $region10: #{_lambda_.1} parent=5 // pred_check_branch
        %384 = sbr.rel (%p381) target = $region12
      $region11: #{_lambda_.1} parent=5 // pred_region
        %s385 = ssub.s32 %s36, 1
        // Predicated region
        $region13: #{_lambda_.1} parent=11 // pred_check
          %p386 = pneg %p109
        $region14: #{_lambda_.1} parent=11 // pred_check_branch
          %388 = sbr.rel (%p386) target = $region16
        $region15: #{_lambda_.1} parent=11 // pred_region
          %s390 = ssub.s32 2048, 2048
          %391 = vsyncadd [#allocation6], %s390
          %s392 = sshll.u32 [#allocation7], 4
          %s393 = int_to_ptr.vmem [resolvable:$true] %s392
          %398 = dma.hbm_to_vmem [thread:$0]  %s2, 2048, %s393, [#allocation6], 128, 128, 8
        $region16: #{_lambda_.1} parent=11 // pred_fallthru
          _
        // Predicated region
        $region17: #{_lambda_.1} parent=11 // pred_check
          %p399 = pneg %p130
        $region18: #{_lambda_.1} parent=11 // pred_check_branch
          %401 = sbr.rel (%p399) target = $region20
        $region19: #{_lambda_.1} parent=11 // pred_region
          %s403 = ssub.s32 2048, 2048
          %404 = vsyncadd [#allocation9], %s403
          %s405 = sshll.u32 [#allocation8], 4
          %s406 = int_to_ptr.vmem [resolvable:$true] %s405
          %411 = dma.hbm_to_vmem [thread:$0]  %s3, 2048, %s406, [#allocation9], 128, 128, 8
        $region20: #{_lambda_.1} parent=11 // pred_fallthru
          _
        // Predicated region
        $region21: #{_lambda_.1} parent=11 // pred_check
          %p412 = pneg %p151
        $region22: #{_lambda_.1} parent=11 // pred_check_branch
          %414 = sbr.rel (%p412) target = $region24
        $region23: #{_lambda_.1} parent=11 // pred_region
          %s416 = ssub.s32 4096, 4096
          %417 = vsyncadd [#allocation9], %s416
          %s418 = sshll.u32 [#allocation10], 4
          %s419 = int_to_ptr.vmem [resolvable:$true] %s418
          %424 = dma.hbm_to_vmem [thread:$0]  %s4, 4096, %s419, [#allocation9], 256, 256, 16
        $region24: #{_lambda_.1} parent=11 // pred_fallthru
          _
        // Predicated region
        $region25: #{_lambda_.1} parent=11 // pred_check
          %p425 = pneg %p172
        $region26: #{_lambda_.1} parent=11 // pred_check_branch
          %427 = sbr.rel (%p425) target = $region28
        $region27: #{_lambda_.1} parent=11 // pred_region
          %s429 = ssub.s32 4096, 4096
          %430 = vsyncadd [#allocation12], %s429
          %s431 = sshll.u32 [#allocation11], 4
          %s432 = int_to_ptr.vmem [resolvable:$true] %s431
          %437 = dma.hbm_to_vmem [thread:$0]  %s5, 4096, %s432, [#allocation12], 256, 256, 16
        $region28: #{_lambda_.1} parent=11 // pred_fallthru
          _
        // Predicated region
        $region29: #{_lambda_.1} parent=11 // pred_check
          %p438 = pneg %p193
        $region30: #{_lambda_.1} parent=11 // pred_check_branch
          %440 = sbr.rel (%p438) target = $region32
        $region31: #{_lambda_.1} parent=11 // pred_region
          _
        $region32: #{_lambda_.1} parent=11 // pred_fallthru
          _
        // Predicated region
        $region33: #{_lambda_.1} parent=11 // pred_check
          %p441 = pneg %p214
        $region34: #{_lambda_.1} parent=11 // pred_check_branch
          %443 = sbr.rel (%p441) target = $region36
        $region35: #{_lambda_.1} parent=11 // pred_region
          %s445 = ssub.s32 2048, 2048
          %446 = vsyncadd [#allocation12], %s445
          %s447 = sshll.u32 [#allocation13], 4
          %s448 = int_to_ptr.vmem [resolvable:$true] %s447
          %453 = dma.hbm_to_vmem [thread:$0]  %s7, 2048, %s448, [#allocation12], 128, 128, 8
        $region36: #{_lambda_.1} parent=11 // pred_fallthru
          _
        // Predicated region
        $region37: #{_lambda_.1} parent=11 // pred_check
          %p454 = pneg %p235
        $region38: #{_lambda_.1} parent=11 // pred_check_branch
          %456 = sbr.rel (%p454) target = $region40
        $region39: #{_lambda_.1} parent=11 // pred_region
          _
        $region40: #{_lambda_.1} parent=11 // pred_fallthru
          _
        // Predicated region
        $region41: #{_lambda_.1} parent=11 // pred_check
          %p457 = pneg %p256
        $region42: #{_lambda_.1} parent=11 // pred_check_branch
          %459 = sbr.rel (%p457) target = $region44
        $region43: #{_lambda_.1} parent=11 // pred_region
          %s461 = ssub.s32 2048, 2048
          %462 = vsyncadd [#allocation15], %s461
          %s463 = sshll.u32 [#allocation14], 4
          %s464 = int_to_ptr.vmem [resolvable:$true] %s463
          %469 = dma.hbm_to_vmem [thread:$0]  %s9, 2048, %s464, [#allocation15], 128, 128, 8
        $region44: #{_lambda_.1} parent=11 // pred_fallthru
          _
        // Predicated region
        $region45: #{_lambda_.1} parent=11 // pred_check
          %p470 = pneg %p277
        $region46: #{_lambda_.1} parent=11 // pred_check_branch
          %472 = sbr.rel (%p470) target = $region48
        $region47: #{_lambda_.1} parent=11 // pred_region
          _
        $region48: #{_lambda_.1} parent=11 // pred_fallthru
          _
        // Predicated region
        $region49: #{_lambda_.1} parent=11 // pred_check
          %p473 = pneg %p298
        $region50: #{_lambda_.1} parent=11 // pred_check_branch
          %475 = sbr.rel (%p473) target = $region52
        $region51: #{_lambda_.1} parent=11 // pred_region
          _
        $region52: #{_lambda_.1} parent=11 // pred_fallthru
          _
        // Predicated region
        $region53: #{_lambda_.1} parent=11 // pred_check
          %p476 = pneg %p319
        $region54: #{_lambda_.1} parent=11 // pred_check_branch
          %478 = sbr.rel (%p476) target = $region56
        $region55: #{_lambda_.1} parent=11 // pred_region
          _
        $region56: #{_lambda_.1} parent=11 // pred_fallthru
          _
      $region12: #{_lambda_.1} parent=5 // pred_fallthru
        _
      %p479 = scmp.lt.s32.totalorder %s36, 2
      // Predicated region
      $region57: #{_lambda_.1} parent=5 // pred_check
        %p480 = pneg %p479
      $region58: #{_lambda_.1} parent=5 // pred_check_branch
        %482 = sbr.rel (%p480) target = $region60
      $region59: #{_lambda_.1} parent=5 // pred_region
        // Predicated region
        $region61: #{_lambda_.1} parent=59 // pred_check
          %p483 = pneg %p56
        $region62: #{_lambda_.1} parent=59 // pred_check_branch
          %485 = sbr.rel (%p483) target = $region64
        $region63: #{_lambda_.1} parent=59 // pred_region
          %s486 = sand.u32 %s46, 1
          %s487 = scalar_lea.sflag [#allocation3], %s486
          %s488 = sand.u32 %s46, 1
          %s489 = smul.addr %s488, 128
          %s490 = scalar_lea.vmem [#allocation2], %s489
          %s491 = smul.u32 16, %s36
          %s493 = ssub.s32 2048, 2048
          %494 = vsyncadd %s487, %s493
          %s495 = smul.addr %s491, 128
          %s496 = scalar_lea.hbm %s0, %s495
          %s497 = sshll.u32 %s490, 4
          %s498 = int_to_ptr.vmem [resolvable:$true] %s497
          %503 = dma.hbm_to_vmem [thread:$0]  %s496, 2048, %s498, %s487, 128, 128, 8
        $region64: #{_lambda_.1} parent=59 // pred_fallthru
          _
        // Predicated region
        $region65: #{_lambda_.1} parent=59 // pred_check
          %p504 = pneg %p82
        $region66: #{_lambda_.1} parent=59 // pred_check_branch
          %506 = sbr.rel (%p504) target = $region68
        $region67: #{_lambda_.1} parent=59 // pred_region
          #allocation20 [shape = 'u32[6]{0}', space=smem, size = 0x18, scoped, tag = 'DMA stride descriptor']
          %s507 = sand.u32 %s36, 1
          %s508 = scalar_lea.sflag [#allocation6], %s507
          %s509 = sand.u32 %s72, 1
          %s510 = smul.addr %s509, 384
          %s511 = scalar_lea.vmem [#allocation5], %s510
          %s512 = smul.u32 16, %s36
          %s514 = ssub.s32 6144, 6144
          %515 = vsyncadd %s508, %s514
          %s516 = smul.addr %s512, 128
          %s517 = scalar_lea.hbm %s1, %s516
          %s519 = sshll.u32 1, 14
          %s520 = sxor.u32 4294967295, %s519
          %s522 = sld [smem:[#allocation0]]
          %s523 = sadd.s32 2, %s522
          %s525 = sshll.u32 7, 26
          %s526 = sxor.u32 4294967295, %s525
          %s527 = sand.u32 0, %s526
          %s528 = sshll.u32 %s523, 26
          %s529 = sor.u32 %s527, %s528
          %s530 = sshll.u32 %s511, 4
          %s531 = int_to_ptr.vmem [resolvable:$true] %s530
          %537 = sst [smem:[#allocation20]] 4096
          %s538 = scalar_lea.smem [#allocation20], 1
          %539 = sst [smem:[%s538]] 2048
          %s540 = scalar_lea.smem [#allocation20], 2
          %541 = sst [smem:[%s540]] 16
          %s542 = scalar_lea.smem [#allocation20], 3
          %543 = sst [smem:[%s542]] 128
          %s544 = scalar_lea.smem [#allocation20], 4
          %545 = sst [smem:[%s544]] 128
          %s546 = scalar_lea.smem [#allocation20], 5
          %547 = sst [smem:[%s546]] 8
          %549 = dma.general %s517, 6144, %s531, %s508, [#allocation19], [#allocation20], %s529, 0
        $region68: #{_lambda_.1} parent=59 // pred_fallthru
          _
      $region60: #{_lambda_.1} parent=5 // pred_fallthru
        _
      %p550 = scmp.le.s32.totalorder 1, %s36
      %p551 = scmp.lt.s32.totalorder %s36, 3
      %p552 = pnand %p550, %p551
      %p553 = pneg %p552
      // Predicated region
      $region69: #{_lambda_.1} parent=5 // pred_check
        _
      $region70: #{_lambda_.1} parent=5 // pred_check_branch
        %555 = sbr.rel (%p552) target = $region72
      $region71: #{_lambda_.1} parent=5 // pred_region
        %s556 = ssub.s32 %s36, 1
        %s557 = sand.u32 %s49, 1
        %s558 = scalar_lea.sflag [#allocation3], %s557
        %s559 = sand.u32 %s49, 1
        %s560 = smul.addr %s559, 128
        %s561 = scalar_lea.vmem [#allocation2], %s560
        // Predicated region
        $region73: #{_lambda_.1} parent=71 // pred_check
          %p562 = pneg %p62
        $region74: #{_lambda_.1} parent=71 // pred_check_branch
          %564 = sbr.rel (%p562) target = $region76
        $region75: #{_lambda_.1} parent=71 // pred_region
          %565 = dma.done %s558, 2048
        $region76: #{_lambda_.1} parent=71 // pred_fallthru
          _
        %s566 = sand.u32 %s41, 1
        %s567 = scalar_lea.sflag [#allocation6], %s566
        %s568 = sand.u32 %s75, 1
        %s569 = smul.addr %s568, 384
        %s570 = scalar_lea.vmem [#allocation5], %s569
        // Predicated region
        $region77: #{_lambda_.1} parent=71 // pred_check
          %p571 = pneg %p88
        $region78: #{_lambda_.1} parent=71 // pred_check_branch
          %573 = sbr.rel (%p571) target = $region80
        $region79: #{_lambda_.1} parent=71 // pred_region
          %574 = dma.done %s567, 6144
        $region80: #{_lambda_.1} parent=71 // pred_fallthru
          _
        // Predicated region
        $region81: #{_lambda_.1} parent=71 // pred_check
          %p575 = pneg %p109
        $region82: #{_lambda_.1} parent=71 // pred_check_branch
          %577 = sbr.rel (%p575) target = $region84
        $region83: #{_lambda_.1} parent=71 // pred_region
          %578 = dma.done [#allocation6], 2048
        $region84: #{_lambda_.1} parent=71 // pred_fallthru
          _
        // Predicated region
        $region85: #{_lambda_.1} parent=71 // pred_check
          %p579 = pneg %p130
        $region86: #{_lambda_.1} parent=71 // pred_check_branch
          %581 = sbr.rel (%p579) target = $region88
        $region87: #{_lambda_.1} parent=71 // pred_region
          %582 = dma.done [#allocation9], 2048
        $region88: #{_lambda_.1} parent=71 // pred_fallthru
          _
        // Predicated region
        $region89: #{_lambda_.1} parent=71 // pred_check
          %p583 = pneg %p151
        $region90: #{_lambda_.1} parent=71 // pred_check_branch
          %585 = sbr.rel (%p583) target = $region92
        $region91: #{_lambda_.1} parent=71 // pred_region
          %586 = dma.done [#allocation9], 4096
        $region92: #{_lambda_.1} parent=71 // pred_fallthru
          _
        // Predicated region
        $region93: #{_lambda_.1} parent=71 // pred_check
          %p587 = pneg %p172
        $region94: #{_lambda_.1} parent=71 // pred_check_branch
          %589 = sbr.rel (%p587) target = $region96
        $region95: #{_lambda_.1} parent=71 // pred_region
          %590 = dma.done [#allocation12], 4096
        $region96: #{_lambda_.1} parent=71 // pred_fallthru
          _
        // Predicated region
        $region97: #{_lambda_.1} parent=71 // pred_check
          %p591 = pneg %p214
        $region98: #{_lambda_.1} parent=71 // pred_check_branch
          %593 = sbr.rel (%p591) target = $region100
        $region99: #{_lambda_.1} parent=71 // pred_region
          %594 = dma.done [#allocation12], 2048
        $region100: #{_lambda_.1} parent=71 // pred_fallthru
          _
        // Predicated region
        $region101: #{_lambda_.1} parent=71 // pred_check
          %p595 = pneg %p256
        $region102: #{_lambda_.1} parent=71 // pred_check_branch
          %597 = sbr.rel (%p595) target = $region104
        $region103: #{_lambda_.1} parent=71 // pred_region
          %598 = dma.done [#allocation15], 2048
        $region104: #{_lambda_.1} parent=71 // pred_fallthru
          _
        %s599 = sand.u32 %s49, 1
        %s600 = scalar_lea.sflag [#allocation3], %s599
        %s601 = sand.u32 %s49, 1
        %s602 = smul.addr %s601, 128
        %s603 = scalar_lea.vmem [#allocation2], %s602
        %p604 = pneg %p62
        %p605 = pneg %p59
        %s606 = sand.u32 %s41, 1
        %s607 = scalar_lea.sflag [#allocation6], %s606
        %s608 = sand.u32 %s75, 1
        %s609 = smul.addr %s608, 384
        %s610 = scalar_lea.vmem [#allocation5], %s609
        %p611 = pneg %p88
        %p612 = pneg %p85
        %p613 = pneg %p109
        %p614 = pneg %p106
        %p615 = pneg %p130
        %p616 = pneg %p127
        %p617 = pneg %p151
        %p618 = pneg %p148
        %p619 = pneg %p172
        %p620 = pneg %p169
        %p621 = pneg %p193
        %p622 = pneg %p190
        %p623 = pneg %p214
        %p624 = pneg %p211
        %p625 = pneg %p235
        %p626 = pneg %p232
        %p627 = pneg %p256
        %p628 = pneg %p253
        %p629 = pneg %p277
        %p630 = pneg %p274
        %p631 = pneg %p298
        %p632 = pneg %p295
        %p633 = pneg %p319
        %p634 = pneg %p316
        %p635 = pneg %p345
        %p636 = pneg %p342
        %s637 = sand.u32 %s332, 1
        %s638 = scalar_lea.sflag [#allocation4], %s637
        %s639 = sand.u32 %s332, 1
        %s640 = smul.addr %s639, 128
        %s641 = scalar_lea.vmem [#allocation16], %s640
        %p642 = pneg %p371
        %p643 = pneg %p368
        %s644 = sand.u32 %s358, 1
        %s645 = scalar_lea.sflag [#allocation18], %s644
        %s646 = sand.u32 %s358, 1
        %s647 = smul.addr %s646, 384
        %s648 = scalar_lea.vmem [#allocation17], %s647
        %s649 = smul.u32 16, %s41
        %s650 = smul.u32 16, %s41
        %s651 = smul.u32 16, %s41
        %s652 = smul.u32 16, %s41
        %v653 = vld [vmem:[%s561] sm:$0xff]
        %v654 = vld [vmem:[%s561 + $0x8] sm:$0xff]
        %v655 = vld [vmem:[%s561 + $0x10] sm:$0xff]
        %v656 = vld [vmem:[%s561 + $0x18] sm:$0xff]
        %v657 = vld [vmem:[%s561 + $0x20] sm:$0xff]
        %v658 = vld [vmem:[%s561 + $0x28] sm:$0xff]
        %v659 = vld [vmem:[%s561 + $0x30] sm:$0xff]
        %v660 = vld [vmem:[%s561 + $0x38] sm:$0xff]
        %v661 = vld [vmem:[%s561 + $0x40] sm:$0xff]
        %v662 = vld [vmem:[%s561 + $0x48] sm:$0xff]
        %v663 = vld [vmem:[%s561 + $0x50] sm:$0xff]
        %v664 = vld [vmem:[%s561 + $0x58] sm:$0xff]
        %v665 = vld [vmem:[%s561 + $0x60] sm:$0xff]
        %v666 = vld [vmem:[%s561 + $0x68] sm:$0xff]
        %v667 = vld [vmem:[%s561 + $0x70] sm:$0xff]
        %v668 = vld [vmem:[%s561 + $0x78] sm:$0xff]
        %v669 = vld [vmem:[%s570] sm:$0xff]
        %v670 = vld [vmem:[%s570 + $0x8] sm:$0xff]
        %v671 = vld [vmem:[%s570 + $0x10] sm:$0xff]
        %v672 = vld [vmem:[%s570 + $0x18] sm:$0xff]
        %v673 = vld [vmem:[%s570 + $0x20] sm:$0xff]
        %v674 = vld [vmem:[%s570 + $0x28] sm:$0xff]
        %v675 = vld [vmem:[%s570 + $0x30] sm:$0xff]
        %v676 = vld [vmem:[%s570 + $0x38] sm:$0xff]
        %v677 = vld [vmem:[%s570 + $0x40] sm:$0xff]
        %v678 = vld [vmem:[%s570 + $0x48] sm:$0xff]
        %v679 = vld [vmem:[%s570 + $0x50] sm:$0xff]
        %v680 = vld [vmem:[%s570 + $0x58] sm:$0xff]
        %v681 = vld [vmem:[%s570 + $0x60] sm:$0xff]
        %v682 = vld [vmem:[%s570 + $0x68] sm:$0xff]
        %v683 = vld [vmem:[%s570 + $0x70] sm:$0xff]
        %v684 = vld [vmem:[%s570 + $0x78] sm:$0xff]
        %v685 = vld [vmem:[%s570 + $0x80] sm:$0xff]
        %v686 = vld [vmem:[%s570 + $0x88] sm:$0xff]
        %v687 = vld [vmem:[%s570 + $0x90] sm:$0xff]
        %v688 = vld [vmem:[%s570 + $0x98] sm:$0xff]
        %v689 = vld [vmem:[%s570 + $0xa0] sm:$0xff]
        %v690 = vld [vmem:[%s570 + $0xa8] sm:$0xff]
        %v691 = vld [vmem:[%s570 + $0xb0] sm:$0xff]
        %v692 = vld [vmem:[%s570 + $0xb8] sm:$0xff]
        %v693 = vld [vmem:[%s570 + $0xc0] sm:$0xff]
        %v694 = vld [vmem:[%s570 + $0xc8] sm:$0xff]
        %v695 = vld [vmem:[%s570 + $0xd0] sm:$0xff]
        %v696 = vld [vmem:[%s570 + $0xd8] sm:$0xff]
        %v697 = vld [vmem:[%s570 + $0xe0] sm:$0xff]
        %v698 = vld [vmem:[%s570 + $0xe8] sm:$0xff]
        %v699 = vld [vmem:[%s570 + $0xf0] sm:$0xff]
        %v700 = vld [vmem:[%s570 + $0xf8] sm:$0xff]
        %v701 = vld [vmem:[%s570 + $0x100] sm:$0xff]
        %v702 = vld [vmem:[%s570 + $0x108] sm:$0xff]
        %v703 = vld [vmem:[%s570 + $0x110] sm:$0xff]
        %v704 = vld [vmem:[%s570 + $0x118] sm:$0xff]
        %v705 = vld [vmem:[%s570 + $0x120] sm:$0xff]
        %v706 = vld [vmem:[%s570 + $0x128] sm:$0xff]
        %v707 = vld [vmem:[%s570 + $0x130] sm:$0xff]
        %v708 = vld [vmem:[%s570 + $0x138] sm:$0xff]
        %v709 = vld [vmem:[%s570 + $0x140] sm:$0xff]
        %v710 = vld [vmem:[%s570 + $0x148] sm:$0xff]
        %v711 = vld [vmem:[%s570 + $0x150] sm:$0xff]
        %v712 = vld [vmem:[%s570 + $0x158] sm:$0xff]
        %v713 = vld [vmem:[%s570 + $0x160] sm:$0xff]
        %v714 = vld [vmem:[%s570 + $0x168] sm:$0xff]
        %v715 = vld [vmem:[%s570 + $0x170] sm:$0xff]
        %v716 = vld [vmem:[%s570 + $0x178] sm:$0xff]
        %v717 = vld [vmem:[#allocation7] sm:$0xff]
        %v718 = vld [vmem:[#allocation7 + $0x8] sm:$0xff]
        %v719 = vld [vmem:[#allocation7 + $0x10] sm:$0xff]
        %v720 = vld [vmem:[#allocation7 + $0x18] sm:$0xff]
        %v721 = vld [vmem:[#allocation7 + $0x20] sm:$0xff]
        %v722 = vld [vmem:[#allocation7 + $0x28] sm:$0xff]
        %v723 = vld [vmem:[#allocation7 + $0x30] sm:$0xff]
        %v724 = vld [vmem:[#allocation7 + $0x38] sm:$0xff]
        %v725 = vld [vmem:[#allocation7 + $0x40] sm:$0xff]
        %v726 = vld [vmem:[#allocation7 + $0x48] sm:$0xff]
        %v727 = vld [vmem:[#allocation7 + $0x50] sm:$0xff]
        %v728 = vld [vmem:[#allocation7 + $0x58] sm:$0xff]
        %v729 = vld [vmem:[#allocation7 + $0x60] sm:$0xff]
        %v730 = vld [vmem:[#allocation7 + $0x68] sm:$0xff]
        %v731 = vld [vmem:[#allocation7 + $0x70] sm:$0xff]
        %v732 = vld [vmem:[#allocation7 + $0x78] sm:$0xff]
        %733 = vmatprep.subr.mxu0 0.0
        %734 = vmatpush1.msra.mxu0 %v717
        %735 = vmatprep.subr.mxu0 0.0
        %736 = vmatpush1.msra.mxu0 %v718
        %737 = vmatprep.subr.mxu0 0.0
        %738 = vmatpush1.msra.mxu0 %v719
        %739 = vmatprep.subr.mxu0 0.0
        %740 = vmatpush1.msra.mxu0 %v720
        %741 = vmatprep.subr.mxu0 0.0
        %742 = vmatpush1.msra.mxu0 %v721
        %743 = vmatprep.subr.mxu0 0.0
        %744 = vmatpush1.msra.mxu0 %v722
        %745 = vmatprep.subr.mxu0 0.0
        %746 = vmatpush1.msra.mxu0 %v723
        %747 = vmatprep.subr.mxu0 0.0
        %748 = vmatpush1.msra.mxu0 %v724
        %749 = vmatprep.subr.mxu0 0.0
        %750 = vmatpush1.msra.mxu0 %v725
        %751 = vmatprep.subr.mxu0 0.0
        %752 = vmatpush1.msra.mxu0 %v726
        %753 = vmatprep.subr.mxu0 0.0
        %754 = vmatpush1.msra.mxu0 %v727
        %755 = vmatprep.subr.mxu0 0.0
        %756 = vmatpush1.msra.mxu0 %v728
        %757 = vmatprep.subr.mxu0 0.0
        %758 = vmatpush1.msra.mxu0 %v729
        %759 = vmatprep.subr.mxu0 0.0
        %760 = vmatpush1.msra.mxu0 %v730
        %761 = vmatprep.subr.mxu0 0.0
        %762 = vmatpush1.msra.mxu0 %v731
        %763 = vmatprep.subr.mxu0 0.0
        %764 = vmatpush1.msra.mxu0 %v732
        %765 = vmatprep.subr.mxu0 0.0
        %766 = vmatpush1.msra.mxu0 0.0
        %767 = vmatprep.subr.mxu0 0.0
        %768 = vmatpush1.msra.mxu0 0.0
        %769 = vmatprep.subr.mxu0 0.0
        %770 = vmatpush1.msra.mxu0 0.0
        %771 = vmatprep.subr.mxu0 0.0
        %772 = vmatpush1.msra.mxu0 0.0
        %773 = vmatprep.subr.mxu0 0.0
        %774 = vmatpush1.msra.mxu0 0.0
        %775 = vmatprep.subr.mxu0 0.0
        %776 = vmatpush1.msra.mxu0 0.0
        %777 = vmatprep.subr.mxu0 0.0
        %778 = vmatpush1.msra.mxu0 0.0
        %779 = vmatprep.subr.mxu0 0.0
        %780 = vmatpush1.msra.mxu0 0.0
        %781 = vmatprep.subr.mxu0 0.0
        %782 = vmatpush1.msra.mxu0 0.0
        %783 = vmatprep.subr.mxu0 0.0
        %784 = vmatpush1.msra.mxu0 0.0
        %785 = vmatprep.subr.mxu0 0.0
        %786 = vmatpush1.msra.mxu0 0.0
        %787 = vmatprep.subr.mxu0 0.0
        %788 = vmatpush1.msra.mxu0 0.0
        %789 = vmatprep.subr.mxu0 0.0
        %790 = vmatpush1.msra.mxu0 0.0
        %791 = vmatprep.subr.mxu0 0.0
        %792 = vmatpush1.msra.mxu0 0.0
        %793 = vmatprep.subr.mxu0 0.0
        %794 = vmatpush1.msra.mxu0 0.0
        %795 = vmatprep.subr.mxu0 0.0
        %796 = vmatpush1.msra.mxu0 0.0
        %797 = vmatprep.mubr.f32.mxu0 0.0
        %798 = vmatmul.mubr.f32.gmra.mrb[0].mxu0 %v669
        %v799 = vpop.f32.mrb[0].mxu0
        %v800 = vadd.f32 0.0, %v799
        %v801 = vpop.f32.mrb[0].mxu0
        %802 = vmatprep.mubr.f32.mxu0 0.0
        %803 = vmatmul.mubr.f32.gmra.mrb[0].mxu0 %v670
        %v804 = vpop.f32.mrb[0].mxu0
        %v805 = vadd.f32 0.0, %v804
        %v806 = vpop.f32.mrb[0].mxu0
        %807 = vmatprep.mubr.f32.mxu0 0.0
        %808 = vmatmul.mubr.f32.gmra.mrb[0].mxu0 %v671
        %v809 = vpop.f32.mrb[0].mxu0
        %v810 = vadd.f32 0.0, %v809
        %v811 = vpop.f32.mrb[0].mxu0
        %812 = vmatprep.mubr.f32.mxu0 0.0
        %813 = vmatmul.mubr.f32.gmra.mrb[0].mxu0 %v672
        %v814 = vpop.f32.mrb[0].mxu0
        %v815 = vadd.f32 0.0, %v814
        %v816 = vpop.f32.mrb[0].mxu0
        %817 = vmatprep.mubr.f32.mxu0 0.0
        %818 = vmatmul.mubr.f32.gmra.mrb[0].mxu0 %v673
        %v819 = vpop.f32.mrb[0].mxu0
        %v820 = vadd.f32 0.0, %v819
        %v821 = vpop.f32.mrb[0].mxu0
        %822 = vmatprep.mubr.f32.mxu0 0.0
        %823 = vmatmul.mubr.f32.gmra.mrb[0].mxu0 %v674
        %v824 = vpop.f32.mrb[0].mxu0
        %v825 = vadd.f32 0.0, %v824
        %v826 = vpop.f32.mrb[0].mxu0
        %827 = vmatprep.mubr.f32.mxu0 0.0
        %828 = vmatmul.mubr.f32.gmra.mrb[0].mxu0 %v675
        %v829 = vpop.f32.mrb[0].mxu0
        %v830 = vadd.f32 0.0, %v829
        %v831 = vpop.f32.mrb[0].mxu0
        %832 = vmatprep.mubr.f32.mxu0 0.0
        %833 = vmatmul.mubr.f32.gmra.mrb[0].mxu0 %v676
        %v834 = vpop.f32.mrb[0].mxu0
        %v835 = vadd.f32 0.0, %v834
        %v836 = vpop.f32.mrb[0].mxu0
        %837 = vmatprep.mubr.f32.mxu0 0.0
        %838 = vmatmul.mubr.f32.gmra.mrb[0].mxu0 %v677
        %v839 = vpop.f32.mrb[0].mxu0
        %v840 = vadd.f32 0.0, %v839
        %v841 = vpop.f32.mrb[0].mxu0
        %842 = vmatprep.mubr.f32.mxu0 0.0
        %843 = vmatmul.mubr.f32.gmra.mrb[0].mxu0 %v678
        %v844 = vpop.f32.mrb[0].mxu0
        %v845 = vadd.f32 0.0, %v844
        %v846 = vpop.f32.mrb[0].mxu0
        %847 = vmatprep.mubr.f32.mxu0 0.0
        %848 = vmatmul.mubr.f32.gmra.mrb[0].mxu0 %v679
        %v849 = vpop.f32.mrb[0].mxu0
        %v850 = vadd.f32 0.0, %v849
        %v851 = vpop.f32.mrb[0].mxu0
        %852 = vmatprep.mubr.f32.mxu0 0.0
        %853 = vmatmul.mubr.f32.gmra.mrb[0].mxu0 %v680
        %v854 = vpop.f32.mrb[0].mxu0
        %v855 = vadd.f32 0.0, %v854
        %v856 = vpop.f32.mrb[0].mxu0
        %857 = vmatprep.mubr.f32.mxu0 0.0
        %858 = vmatmul.mubr.f32.gmra.mrb[0].mxu0 %v681
        %v859 = vpop.f32.mrb[0].mxu0
        %v860 = vadd.f32 0.0, %v859
        %v861 = vpop.f32.mrb[0].mxu0
        %862 = vmatprep.mubr.f32.mxu0 0.0
        %863 = vmatmul.mubr.f32.gmra.mrb[0].mxu0 %v682
        %v864 = vpop.f32.mrb[0].mxu0
        %v865 = vadd.f32 0.0, %v864
        %v866 = vpop.f32.mrb[0].mxu0
        %867 = vmatprep.mubr.f32.mxu0 0.0
        %868 = vmatmul.mubr.f32.gmra.mrb[0].mxu0 %v683
        %v869 = vpop.f32.mrb[0].mxu0
        %v870 = vadd.f32 0.0, %v869
        %v871 = vpop.f32.mrb[0].mxu0
        %872 = vmatprep.mubr.f32.mxu0 0.0
        %873 = vmatmul.mubr.f32.gmra.mrb[0].mxu0 %v684
        %v874 = vpop.f32.mrb[0].mxu0
        %v875 = vadd.f32 0.0, %v874
        %v876 = vpop.f32.mrb[0].mxu0
        %877 = vmatprep.mubr.f32.mxu0 0.0
        %878 = vmatmul.mubr.f32.gmra.mrb[0].mxu0 %v685
        %v879 = vpop.f32.mrb[0].mxu0
        %v880 = vadd.f32 0.0, %v879
        %v881 = vpop.f32.mrb[0].mxu0
        %882 = vmatprep.mubr.f32.mxu0 0.0
        %883 = vmatmul.mubr.f32.gmra.mrb[0].mxu0 %v686
        %v884 = vpop.f32.mrb[0].mxu0
        %v885 = vadd.f32 0.0, %v884
        %v886 = vpop.f32.mrb[0].mxu0
        %887 = vmatprep.mubr.f32.mxu0 0.0
        %888 = vmatmul.mubr.f32.gmra.mrb[0].mxu0 %v687
        %v889 = vpop.f32.mrb[0].mxu0
        %v890 = vadd.f32 0.0, %v889
        %v891 = vpop.f32.mrb[0].mxu0
        %892 = vmatprep.mubr.f32.mxu0 0.0
        %893 = vmatmul.mubr.f32.gmra.mrb[0].mxu0 %v688
        %v894 = vpop.f32.mrb[0].mxu0
        %v895 = vadd.f32 0.0, %v894
        %v896 = vpop.f32.mrb[0].mxu0
        %897 = vmatprep.mubr.f32.mxu0 0.0
        %898 = vmatmul.mubr.f32.gmra.mrb[0].mxu0 %v689
        %v899 = vpop.f32.mrb[0].mxu0
        %v900 = vadd.f32 0.0, %v899
        %v901 = vpop.f32.mrb[0].mxu0
        %902 = vmatprep.mubr.f32.mxu0 0.0
        %903 = vmatmul.mubr.f32.gmra.mrb[0].mxu0 %v690
        %v904 = vpop.f32.mrb[0].mxu0
        %v905 = vadd.f32 0.0, %v904
        %v906 = vpop.f32.mrb[0].mxu0
        %907 = vmatprep.mubr.f32.mxu0 0.0
        %908 = vmatmul.mubr.f32.gmra.mrb[0].mxu0 %v691
        %v909 = vpop.f32.mrb[0].mxu0
        %v910 = vadd.f32 0.0, %v909
        %v911 = vpop.f32.mrb[0].mxu0
        %912 = vmatprep.mubr.f32.mxu0 0.0
        %913 = vmatmul.mubr.f32.gmra.mrb[0].mxu0 %v692
        %v914 = vpop.f32.mrb[0].mxu0
        %v915 = vadd.f32 0.0, %v914
        %v916 = vpop.f32.mrb[0].mxu0
        %917 = vmatprep.mubr.f32.mxu0 0.0
        %918 = vmatmul.mubr.f32.gmra.mrb[0].mxu0 %v693
        %v919 = vpop.f32.mrb[0].mxu0
        %v920 = vadd.f32 0.0, %v919
        %v921 = vpop.f32.mrb[0].mxu0
        %922 = vmatprep.mubr.f32.mxu0 0.0
        %923 = vmatmul.mubr.f32.gmra.mrb[0].mxu0 %v694
        %v924 = vpop.f32.mrb[0].mxu0
        %v925 = vadd.f32 0.0, %v924
        %v926 = vpop.f32.mrb[0].mxu0
        %927 = vmatprep.mubr.f32.mxu0 0.0
        %928 = vmatmul.mubr.f32.gmra.mrb[0].mxu0 %v695
        %v929 = vpop.f32.mrb[0].mxu0
        %v930 = vadd.f32 0.0, %v929
        %v931 = vpop.f32.mrb[0].mxu0
        %932 = vmatprep.mubr.f32.mxu0 0.0
        %933 = vmatmul.mubr.f32.gmra.mrb[0].mxu0 %v696
        %v934 = vpop.f32.mrb[0].mxu0
        %v935 = vadd.f32 0.0, %v934
        %v936 = vpop.f32.mrb[0].mxu0
        %937 = vmatprep.mubr.f32.mxu0 0.0
        %938 = vmatmul.mubr.f32.gmra.mrb[0].mxu0 %v697
        %v939 = vpop.f32.mrb[0].mxu0
        %v940 = vadd.f32 0.0, %v939
        %v941 = vpop.f32.mrb[0].mxu0
        %942 = vmatprep.mubr.f32.mxu0 0.0
        %943 = vmatmul.mubr.f32.gmra.mrb[0].mxu0 %v698
        %v944 = vpop.f32.mrb[0].mxu0
        %v945 = vadd.f32 0.0, %v944
        %v946 = vpop.f32.mrb[0].mxu0
        %947 = vmatprep.mubr.f32.mxu0 0.0
        %948 = vmatmul.mubr.f32.gmra.mrb[0].mxu0 %v699
        %v949 = vpop.f32.mrb[0].mxu0
        %v950 = vadd.f32 0.0, %v949
        %v951 = vpop.f32.mrb[0].mxu0
        %952 = vmatprep.mubr.f32.mxu0 0.0
        %953 = vmatmul.mubr.f32.gmra.mrb[0].mxu0 %v700
        %v954 = vpop.f32.mrb[0].mxu0
        %v955 = vadd.f32 0.0, %v954
        %v956 = vpop.f32.mrb[0].mxu0
        %957 = vmatprep.mubr.f32.mxu0 0.0
        %958 = vmatmul.mubr.f32.gmra.mrb[0].mxu0 %v701
        %v959 = vpop.f32.mrb[0].mxu0
        %v960 = vadd.f32 0.0, %v959
        %v961 = vpop.f32.mrb[0].mxu0
        %962 = vmatprep.mubr.f32.mxu0 0.0
        %963 = vmatmul.mubr.f32.gmra.mrb[0].mxu0 %v702
        %v964 = vpop.f32.mrb[0].mxu0
        %v965 = vadd.f32 0.0, %v964
        %v966 = vpop.f32.mrb[0].mxu0
        %967 = vmatprep.mubr.f32.mxu0 0.0
        %968 = vmatmul.mubr.f32.gmra.mrb[0].mxu0 %v703
        %v969 = vpop.f32.mrb[0].mxu0
        %v970 = vadd.f32 0.0, %v969
        %v971 = vpop.f32.mrb[0].mxu0
        %972 = vmatprep.mubr.f32.mxu0 0.0
        %973 = vmatmul.mubr.f32.gmra.mrb[0].mxu0 %v704
        %v974 = vpop.f32.mrb[0].mxu0
        %v975 = vadd.f32 0.0, %v974
        %v976 = vpop.f32.mrb[0].mxu0
        %977 = vmatprep.mubr.f32.mxu0 0.0
        %978 = vmatmul.mubr.f32.gmra.mrb[0].mxu0 %v705
        %v979 = vpop.f32.mrb[0].mxu0
        %v980 = vadd.f32 0.0, %v979
        %v981 = vpop.f32.mrb[0].mxu0
        %982 = vmatprep.mubr.f32.mxu0 0.0
        %983 = vmatmul.mubr.f32.gmra.mrb[0].mxu0 %v706
        %v984 = vpop.f32.mrb[0].mxu0
        %v985 = vadd.f32 0.0, %v984
        %v986 = vpop.f32.mrb[0].mxu0
        %987 = vmatprep.mubr.f32.mxu0 0.0
        %988 = vmatmul.mubr.f32.gmra.mrb[0].mxu0 %v707
        %v989 = vpop.f32.mrb[0].mxu0
        %v990 = vadd.f32 0.0, %v989
        %v991 = vpop.f32.mrb[0].mxu0
        %992 = vmatprep.mubr.f32.mxu0 0.0
        %993 = vmatmul.mubr.f32.gmra.mrb[0].mxu0 %v708
        %v994 = vpop.f32.mrb[0].mxu0
        %v995 = vadd.f32 0.0, %v994
        %v996 = vpop.f32.mrb[0].mxu0
        %997 = vmatprep.mubr.f32.mxu0 0.0
        %998 = vmatmul.mubr.f32.gmra.mrb[0].mxu0 %v709
        %v999 = vpop.f32.mrb[0].mxu0
        %v1000 = vadd.f32 0.0, %v999
        %v1001 = vpop.f32.mrb[0].mxu0
        %1002 = vmatprep.mubr.f32.mxu0 0.0
        %1003 = vmatmul.mubr.f32.gmra.mrb[0].mxu0 %v710
        %v1004 = vpop.f32.mrb[0].mxu0
        %v1005 = vadd.f32 0.0, %v1004
        %v1006 = vpop.f32.mrb[0].mxu0
        %1007 = vmatprep.mubr.f32.mxu0 0.0
        %1008 = vmatmul.mubr.f32.gmra.mrb[0].mxu0 %v711
        %v1009 = vpop.f32.mrb[0].mxu0
        %v1010 = vadd.f32 0.0, %v1009
        %v1011 = vpop.f32.mrb[0].mxu0
        %1012 = vmatprep.mubr.f32.mxu0 0.0
        %1013 = vmatmul.mubr.f32.gmra.mrb[0].mxu0 %v712
        %v1014 = vpop.f32.mrb[0].mxu0
        %v1015 = vadd.f32 0.0, %v1014
        %v1016 = vpop.f32.mrb[0].mxu0
        %1017 = vmatprep.mubr.f32.mxu0 0.0
        %1018 = vmatmul.mubr.f32.gmra.mrb[0].mxu0 %v713
        %v1019 = vpop.f32.mrb[0].mxu0
        %v1020 = vadd.f32 0.0, %v1019
        %v1021 = vpop.f32.mrb[0].mxu0
        %1022 = vmatprep.mubr.f32.mxu0 0.0
        %1023 = vmatmul.mubr.f32.gmra.mrb[0].mxu0 %v714
        %v1024 = vpop.f32.mrb[0].mxu0
        %v1025 = vadd.f32 0.0, %v1024
        %v1026 = vpop.f32.mrb[0].mxu0
        %1027 = vmatprep.mubr.f32.mxu0 0.0
        %1028 = vmatmul.mubr.f32.gmra.mrb[0].mxu0 %v715
        %v1029 = vpop.f32.mrb[0].mxu0
        %v1030 = vadd.f32 0.0, %v1029
        %v1031 = vpop.f32.mrb[0].mxu0
        %1032 = vmatprep.mubr.f32.mxu0 0.0
        %1033 = vmatmul.mubr.f32.gmra.mrb[0].mxu0 %v716
        %v1034 = vpop.f32.mrb[0].mxu0
        %v1035 = vadd.f32 0.0, %v1034
        %v1036 = vpop.f32.mrb[0].mxu0
        %1037 = vdwg.mxu0
        %v1038 = vmul.f32 %v800, %v800
        %v1039 = vmul.f32 %v805, %v805
        %v1040 = vmul.f32 %v810, %v810
        %v1041 = vmul.f32 %v815, %v815
        %v1042 = vmul.f32 %v820, %v820
        %v1043 = vmul.f32 %v825, %v825
        %v1044 = vmul.f32 %v830, %v830
        %v1045 = vmul.f32 %v835, %v835
        %v1046 = vmul.f32 %v840, %v840
        %v1047 = vmul.f32 %v845, %v845
        %v1048 = vmul.f32 %v850, %v850
        %v1049 = vmul.f32 %v855, %v855
        %v1050 = vmul.f32 %v860, %v860
        %v1051 = vmul.f32 %v865, %v865
        %v1052 = vmul.f32 %v870, %v870
        %v1053 = vmul.f32 %v875, %v875
        %v1054 = vmul.f32 %v880, %v880
        %v1055 = vmul.f32 %v885, %v885
        %v1056 = vmul.f32 %v890, %v890
        %v1057 = vmul.f32 %v895, %v895
        %v1058 = vmul.f32 %v900, %v900
        %v1059 = vmul.f32 %v905, %v905
        %v1060 = vmul.f32 %v910, %v910
        %v1061 = vmul.f32 %v915, %v915
        %v1062 = vmul.f32 %v920, %v920
        %v1063 = vmul.f32 %v925, %v925
        %v1064 = vmul.f32 %v930, %v930
        %v1065 = vmul.f32 %v935, %v935
        %v1066 = vmul.f32 %v940, %v940
        %v1067 = vmul.f32 %v945, %v945
        %v1068 = vmul.f32 %v950, %v950
        %v1069 = vmul.f32 %v955, %v955
        %v1070 = vmul.f32 %v960, %v960
        %v1071 = vmul.f32 %v965, %v965
        %v1072 = vmul.f32 %v970, %v970
        %v1073 = vmul.f32 %v975, %v975
        %v1074 = vmul.f32 %v980, %v980
        %v1075 = vmul.f32 %v985, %v985
        %v1076 = vmul.f32 %v990, %v990
        %v1077 = vmul.f32 %v995, %v995
        %v1078 = vmul.f32 %v1000, %v1000
        %v1079 = vmul.f32 %v1005, %v1005
        %v1080 = vmul.f32 %v1010, %v1010
        %v1081 = vmul.f32 %v1015, %v1015
        %v1082 = vmul.f32 %v1020, %v1020
        %v1083 = vmul.f32 %v1025, %v1025
        %v1084 = vmul.f32 %v1030, %v1030
        %v1085 = vmul.f32 %v1035, %v1035
        %v1086 = vadd.f32 %v1038, %v1054
        %v1087 = vadd.f32 %v1086, %v1070
        %v1088 = vadd.f32 %v1039, %v1055
        %v1089 = vadd.f32 %v1088, %v1071
        %v1090 = vadd.f32 %v1040, %v1056
        %v1091 = vadd.f32 %v1090, %v1072
        %v1092 = vadd.f32 %v1041, %v1057
        %v1093 = vadd.f32 %v1092, %v1073
        %v1094 = vadd.f32 %v1042, %v1058
        %v1095 = vadd.f32 %v1094, %v1074
        %v1096 = vadd.f32 %v1043, %v1059
        %v1097 = vadd.f32 %v1096, %v1075
        %v1098 = vadd.f32 %v1044, %v1060
        %v1099 = vadd.f32 %v1098, %v1076
        %v1100 = vadd.f32 %v1045, %v1061
        %v1101 = vadd.f32 %v1100, %v1077
        %v1102 = vadd.f32 %v1046, %v1062
        %v1103 = vadd.f32 %v1102, %v1078
        %v1104 = vadd.f32 %v1047, %v1063
        %v1105 = vadd.f32 %v1104, %v1079
        %v1106 = vadd.f32 %v1048, %v1064
        %v1107 = vadd.f32 %v1106, %v1080
        %v1108 = vadd.f32 %v1049, %v1065
        %v1109 = vadd.f32 %v1108, %v1081
        %v1110 = vadd.f32 %v1050, %v1066
        %v1111 = vadd.f32 %v1110, %v1082
        %v1112 = vadd.f32 %v1051, %v1067
        %v1113 = vadd.f32 %v1112, %v1083
        %v1114 = vadd.f32 %v1052, %v1068
        %v1115 = vadd.f32 %v1114, %v1084
        %v1116 = vadd.f32 %v1053, %v1069
        %v1117 = vadd.f32 %v1116, %v1085
        %v1118 = vrsqrt.pop %v1087
        %v1119 = vmul.f32 %v1087, %v1118
        %vm1120 = vcmp.eq.f32.partialorder %v1087, inf
        %v1121 = vsel %vm1120, %v1087, %v1119
        %vm1122 = vcmp.eq.f32.partialorder %v1087, 0.0
        %v1123 = vand.u32 %v1087, 2147483648
        %v1124 = vsel %vm1122, %v1123, %v1121
        %v1125 = vrsqrt.pop %v1089
        %v1126 = vmul.f32 %v1089, %v1125
        %vm1127 = vcmp.eq.f32.partialorder %v1089, inf
        %v1128 = vsel %vm1127, %v1089, %v1126
        %vm1129 = vcmp.eq.f32.partialorder %v1089, 0.0
        %v1130 = vand.u32 %v1089, 2147483648
        %v1131 = vsel %vm1129, %v1130, %v1128
        %v1132 = vrsqrt.pop %v1091
        %v1133 = vmul.f32 %v1091, %v1132
        %vm1134 = vcmp.eq.f32.partialorder %v1091, inf
        %v1135 = vsel %vm1134, %v1091, %v1133
        %vm1136 = vcmp.eq.f32.partialorder %v1091, 0.0
        %v1137 = vand.u32 %v1091, 2147483648
        %v1138 = vsel %vm1136, %v1137, %v1135
        %v1139 = vrsqrt.pop %v1093
        %v1140 = vmul.f32 %v1093, %v1139
        %vm1141 = vcmp.eq.f32.partialorder %v1093, inf
        %v1142 = vsel %vm1141, %v1093, %v1140
        %vm1143 = vcmp.eq.f32.partialorder %v1093, 0.0
        %v1144 = vand.u32 %v1093, 2147483648
        %v1145 = vsel %vm1143, %v1144, %v1142
        %v1146 = vrsqrt.pop %v1095
        %v1147 = vmul.f32 %v1095, %v1146
        %vm1148 = vcmp.eq.f32.partialorder %v1095, inf
        %v1149 = vsel %vm1148, %v1095, %v1147
        %vm1150 = vcmp.eq.f32.partialorder %v1095, 0.0
        %v1151 = vand.u32 %v1095, 2147483648
        %v1152 = vsel %vm1150, %v1151, %v1149
        %v1153 = vrsqrt.pop %v1097
        %v1154 = vmul.f32 %v1097, %v1153
        %vm1155 = vcmp.eq.f32.partialorder %v1097, inf
        %v1156 = vsel %vm1155, %v1097, %v1154
        %vm1157 = vcmp.eq.f32.partialorder %v1097, 0.0
        %v1158 = vand.u32 %v1097, 2147483648
        %v1159 = vsel %vm1157, %v1158, %v1156
        %v1160 = vrsqrt.pop %v1099
        %v1161 = vmul.f32 %v1099, %v1160
        %vm1162 = vcmp.eq.f32.partialorder %v1099, inf
        %v1163 = vsel %vm1162, %v1099, %v1161
        %vm1164 = vcmp.eq.f32.partialorder %v1099, 0.0
        %v1165 = vand.u32 %v1099, 2147483648
        %v1166 = vsel %vm1164, %v1165, %v1163
        %v1167 = vrsqrt.pop %v1101
        %v1168 = vmul.f32 %v1101, %v1167
        %vm1169 = vcmp.eq.f32.partialorder %v1101, inf
        %v1170 = vsel %vm1169, %v1101, %v1168
        %vm1171 = vcmp.eq.f32.partialorder %v1101, 0.0
        %v1172 = vand.u32 %v1101, 2147483648
        %v1173 = vsel %vm1171, %v1172, %v1170
        %v1174 = vrsqrt.pop %v1103
        %v1175 = vmul.f32 %v1103, %v1174
        %vm1176 = vcmp.eq.f32.partialorder %v1103, inf
        %v1177 = vsel %vm1176, %v1103, %v1175
        %vm1178 = vcmp.eq.f32.partialorder %v1103, 0.0
        %v1179 = vand.u32 %v1103, 2147483648
        %v1180 = vsel %vm1178, %v1179, %v1177
        %v1181 = vrsqrt.pop %v1105
        %v1182 = vmul.f32 %v1105, %v1181
        %vm1183 = vcmp.eq.f32.partialorder %v1105, inf
        %v1184 = vsel %vm1183, %v1105, %v1182
        %vm1185 = vcmp.eq.f32.partialorder %v1105, 0.0
        %v1186 = vand.u32 %v1105, 2147483648
        %v1187 = vsel %vm1185, %v1186, %v1184
        %v1188 = vrsqrt.pop %v1107
        %v1189 = vmul.f32 %v1107, %v1188
        %vm1190 = vcmp.eq.f32.partialorder %v1107, inf
        %v1191 = vsel %vm1190, %v1107, %v1189
        %vm1192 = vcmp.eq.f32.partialorder %v1107, 0.0
        %v1193 = vand.u32 %v1107, 2147483648
        %v1194 = vsel %vm1192, %v1193, %v1191
        %v1195 = vrsqrt.pop %v1109
        %v1196 = vmul.f32 %v1109, %v1195
        %vm1197 = vcmp.eq.f32.partialorder %v1109, inf
        %v1198 = vsel %vm1197, %v1109, %v1196
        %vm1199 = vcmp.eq.f32.partialorder %v1109, 0.0
        %v1200 = vand.u32 %v1109, 2147483648
        %v1201 = vsel %vm1199, %v1200, %v1198
        %v1202 = vrsqrt.pop %v1111
        %v1203 = vmul.f32 %v1111, %v1202
        %vm1204 = vcmp.eq.f32.partialorder %v1111, inf
        %v1205 = vsel %vm1204, %v1111, %v1203
        %vm1206 = vcmp.eq.f32.partialorder %v1111, 0.0
        %v1207 = vand.u32 %v1111, 2147483648
        %v1208 = vsel %vm1206, %v1207, %v1205
        %v1209 = vrsqrt.pop %v1113
        %v1210 = vmul.f32 %v1113, %v1209
        %vm1211 = vcmp.eq.f32.partialorder %v1113, inf
        %v1212 = vsel %vm1211, %v1113, %v1210
        %vm1213 = vcmp.eq.f32.partialorder %v1113, 0.0
        %v1214 = vand.u32 %v1113, 2147483648
        %v1215 = vsel %vm1213, %v1214, %v1212
        %v1216 = vrsqrt.pop %v1115
        %v1217 = vmul.f32 %v1115, %v1216
        %vm1218 = vcmp.eq.f32.partialorder %v1115, inf
        %v1219 = vsel %vm1218, %v1115, %v1217
        %vm1220 = vcmp.eq.f32.partialorder %v1115, 0.0
        %v1221 = vand.u32 %v1115, 2147483648
        %v1222 = vsel %vm1220, %v1221, %v1219
        %v1223 = vrsqrt.pop %v1117
        %v1224 = vmul.f32 %v1117, %v1223
        %vm1225 = vcmp.eq.f32.partialorder %v1117, inf
        %v1226 = vsel %vm1225, %v1117, %v1224
        %vm1227 = vcmp.eq.f32.partialorder %v1117, 0.0
        %v1228 = vand.u32 %v1117, 2147483648
        %v1229 = vsel %vm1227, %v1228, %v1226
        %v1230 = vld [vmem:[#allocation10] sm:$0xff]
        %v1231 = vld [vmem:[#allocation10 + $0x8] sm:$0xff]
        %v1232 = vld [vmem:[#allocation10 + $0x10] sm:$0xff]
        %v1233 = vld [vmem:[#allocation10 + $0x18] sm:$0xff]
        %v1234 = vld [vmem:[#allocation10 + $0x20] sm:$0xff]
        %v1235 = vld [vmem:[#allocation10 + $0x28] sm:$0xff]
        %v1236 = vld [vmem:[#allocation10 + $0x30] sm:$0xff]
        %v1237 = vld [vmem:[#allocation10 + $0x38] sm:$0xff]
        %v1238 = vld [vmem:[#allocation10 + $0x40] sm:$0xff]
        %v1239 = vld [vmem:[#allocation10 + $0x48] sm:$0xff]
        %v1240 = vld [vmem:[#allocation10 + $0x50] sm:$0xff]
        %v1241 = vld [vmem:[#allocation10 + $0x58] sm:$0xff]
        %v1242 = vld [vmem:[#allocation10 + $0x60] sm:$0xff]
        %v1243 = vld [vmem:[#allocation10 + $0x68] sm:$0xff]
        %v1244 = vld [vmem:[#allocation10 + $0x70] sm:$0xff]
        %v1245 = vld [vmem:[#allocation10 + $0x78] sm:$0xff]
        %v1246 = vld [vmem:[#allocation10 + $0x80] sm:$0xff]
        %v1247 = vld [vmem:[#allocation10 + $0x88] sm:$0xff]
        %v1248 = vld [vmem:[#allocation10 + $0x90] sm:$0xff]
        %v1249 = vld [vmem:[#allocation10 + $0x98] sm:$0xff]
        %v1250 = vld [vmem:[#allocation10 + $0xa0] sm:$0xff]
        %v1251 = vld [vmem:[#allocation10 + $0xa8] sm:$0xff]
        %v1252 = vld [vmem:[#allocation10 + $0xb0] sm:$0xff]
        %v1253 = vld [vmem:[#allocation10 + $0xb8] sm:$0xff]
        %v1254 = vld [vmem:[#allocation10 + $0xc0] sm:$0xff]
        %v1255 = vld [vmem:[#allocation10 + $0xc8] sm:$0xff]
        %v1256 = vld [vmem:[#allocation10 + $0xd0] sm:$0xff]
        %v1257 = vld [vmem:[#allocation10 + $0xd8] sm:$0xff]
        %v1258 = vld [vmem:[#allocation10 + $0xe0] sm:$0xff]
        %v1259 = vld [vmem:[#allocation10 + $0xe8] sm:$0xff]
        %v1260 = vld [vmem:[#allocation10 + $0xf0] sm:$0xff]
        %v1261 = vld [vmem:[#allocation10 + $0xf8] sm:$0xff]
        %v1262 = vld [vmem:[#allocation11] sm:$0xff]
        %v1263 = vld [vmem:[#allocation11 + $0x8] sm:$0xff]
        %v1264 = vld [vmem:[#allocation11 + $0x10] sm:$0xff]
        %v1265 = vld [vmem:[#allocation11 + $0x18] sm:$0xff]
        %v1266 = vld [vmem:[#allocation11 + $0x20] sm:$0xff]
        %v1267 = vld [vmem:[#allocation11 + $0x28] sm:$0xff]
        %v1268 = vld [vmem:[#allocation11 + $0x30] sm:$0xff]
        %v1269 = vld [vmem:[#allocation11 + $0x38] sm:$0xff]
        %v1270 = vld [vmem:[#allocation11 + $0x40] sm:$0xff]
        %v1271 = vld [vmem:[#allocation11 + $0x48] sm:$0xff]
        %v1272 = vld [vmem:[#allocation11 + $0x50] sm:$0xff]
        %v1273 = vld [vmem:[#allocation11 + $0x58] sm:$0xff]
        %v1274 = vld [vmem:[#allocation11 + $0x60] sm:$0xff]
        %v1275 = vld [vmem:[#allocation11 + $0x68] sm:$0xff]
        %v1276 = vld [vmem:[#allocation11 + $0x70] sm:$0xff]
        %v1277 = vld [vmem:[#allocation11 + $0x78] sm:$0xff]
        %v1278 = vld [vmem:[#allocation11 + $0x80] sm:$0xff]
        %v1279 = vld [vmem:[#allocation11 + $0x88] sm:$0xff]
        %v1280 = vld [vmem:[#allocation11 + $0x90] sm:$0xff]
        %v1281 = vld [vmem:[#allocation11 + $0x98] sm:$0xff]
        %v1282 = vld [vmem:[#allocation11 + $0xa0] sm:$0xff]
        %v1283 = vld [vmem:[#allocation11 + $0xa8] sm:$0xff]
        %v1284 = vld [vmem:[#allocation11 + $0xb0] sm:$0xff]
        %v1285 = vld [vmem:[#allocation11 + $0xb8] sm:$0xff]
        %v1286 = vld [vmem:[#allocation11 + $0xc0] sm:$0xff]
        %v1287 = vld [vmem:[#allocation11 + $0xc8] sm:$0xff]
        %v1288 = vld [vmem:[#allocation11 + $0xd0] sm:$0xff]
        %v1289 = vld [vmem:[#allocation11 + $0xd8] sm:$0xff]
        %v1290 = vld [vmem:[#allocation11 + $0xe0] sm:$0xff]
        %v1291 = vld [vmem:[#allocation11 + $0xe8] sm:$0xff]
        %v1292 = vld [vmem:[#allocation11 + $0xf0] sm:$0xff]
        %v1293 = vld [vmem:[#allocation11 + $0xf8] sm:$0xff]
        %1294 = vmatprep.subr.mxu0 %v1263
        %1295 = vmatpush1.msra.mxu0 %v1262
        %1296 = vmatprep.subr.mxu0 %v1265
        %1297 = vmatpush1.msra.mxu0 %v1264
        %1298 = vmatprep.subr.mxu0 %v1267
        %1299 = vmatpush1.msra.mxu0 %v1266
        %1300 = vmatprep.subr.mxu0 %v1269
        %1301 = vmatpush1.msra.mxu0 %v1268
        %1302 = vmatprep.subr.mxu0 %v1271
        %1303 = vmatpush1.msra.mxu0 %v1270
        %1304 = vmatprep.subr.mxu0 %v1273
        %1305 = vmatpush1.msra.mxu0 %v1272
        %1306 = vmatprep.subr.mxu0 %v1275
        %1307 = vmatpush1.msra.mxu0 %v1274
        %1308 = vmatprep.subr.mxu0 %v1277
        %1309 = vmatpush1.msra.mxu0 %v1276
        %1310 = vmatprep.subr.mxu0 %v1279
        %1311 = vmatpush1.msra.mxu0 %v1278
        %1312 = vmatprep.subr.mxu0 %v1281
        %1313 = vmatpush1.msra.mxu0 %v1280
        %1314 = vmatprep.subr.mxu0 %v1283
        %1315 = vmatpush1.msra.mxu0 %v1282
        %1316 = vmatprep.subr.mxu0 %v1285
        %1317 = vmatpush1.msra.mxu0 %v1284
        %1318 = vmatprep.subr.mxu0 %v1287
        %1319 = vmatpush1.msra.mxu0 %v1286
        %1320 = vmatprep.subr.mxu0 %v1289
        %1321 = vmatpush1.msra.mxu0 %v1288
        %1322 = vmatprep.subr.mxu0 %v1291
        %1323 = vmatpush1.msra.mxu0 %v1290
        %1324 = vmatprep.subr.mxu0 %v1293
        %1325 = vmatpush1.msra.mxu0 %v1292
        %1326 = vmatprep.subr.mxu0 0.0
        %1327 = vmatpush1.msra.mxu0 0.0
        %1328 = vmatprep.subr.mxu0 0.0
        %1329 = vmatpush1.msra.mxu0 0.0
        %1330 = vmatprep.subr.mxu0 0.0
        %1331 = vmatpush1.msra.mxu0 0.0
        %1332 = vmatprep.subr.mxu0 0.0
        %1333 = vmatpush1.msra.mxu0 0.0
        %1334 = vmatprep.subr.mxu0 0.0
        %1335 = vmatpush1.msra.mxu0 0.0
        %1336 = vmatprep.subr.mxu0 0.0
        %1337 = vmatpush1.msra.mxu0 0.0
        %1338 = vmatprep.subr.mxu0 0.0
        %1339 = vmatpush1.msra.mxu0 0.0
        %1340 = vmatprep.subr.mxu0 0.0
        %1341 = vmatpush1.msra.mxu0 0.0
        %1342 = vmatprep.subr.mxu0 0.0
        %1343 = vmatpush1.msra.mxu0 0.0
        %1344 = vmatprep.subr.mxu0 0.0
        %1345 = vmatpush1.msra.mxu0 0.0
        %1346 = vmatprep.subr.mxu0 0.0
        %1347 = vmatpush1.msra.mxu0 0.0
        %1348 = vmatprep.subr.mxu0 0.0
        %1349 = vmatpush1.msra.mxu0 0.0
        %1350 = vmatprep.subr.mxu0 0.0
        %1351 = vmatpush1.msra.mxu0 0.0
        %1352 = vmatprep.subr.mxu0 0.0
        %1353 = vmatpush1.msra.mxu0 0.0
        %1354 = vmatprep.subr.mxu0 0.0
        %1355 = vmatpush1.msra.mxu0 0.0
        %1356 = vmatprep.subr.mxu0 0.0
        %1357 = vmatpush1.msra.mxu0 0.0
        %1358 = vmatprep.mubr.f32.mxu0 0.0
        %1359 = vmatmul.mubr.f32.gmra.mrb[0].mxu0 %v1124
        %v1360 = vpop.f32.mrb[0].mxu0
        %v1361 = vadd.f32 0.0, %v1360
        %v1362 = vpop.f32.mrb[0].mxu0
        %v1363 = vadd.f32 0.0, %v1362
        %1364 = vmatprep.mubr.f32.mxu0 0.0
        %1365 = vmatmul.mubr.f32.gmra.mrb[0].mxu0 %v1131
        %v1366 = vpop.f32.mrb[0].mxu0
        %v1367 = vadd.f32 0.0, %v1366
        %v1368 = vpop.f32.mrb[0].mxu0
        %v1369 = vadd.f32 0.0, %v1368
        %1370 = vmatprep.mubr.f32.mxu0 0.0
        %1371 = vmatmul.mubr.f32.gmra.mrb[0].mxu0 %v1138
        %v1372 = vpop.f32.mrb[0].mxu0
        %v1373 = vadd.f32 0.0, %v1372
        %v1374 = vpop.f32.mrb[0].mxu0
        %v1375 = vadd.f32 0.0, %v1374
        %1376 = vmatprep.mubr.f32.mxu0 0.0
        %1377 = vmatmul.mubr.f32.gmra.mrb[0].mxu0 %v1145
        %v1378 = vpop.f32.mrb[0].mxu0
        %v1379 = vadd.f32 0.0, %v1378
        %v1380 = vpop.f32.mrb[0].mxu0
        %v1381 = vadd.f32 0.0, %v1380
        %1382 = vmatprep.mubr.f32.mxu0 0.0
        %1383 = vmatmul.mubr.f32.gmra.mrb[0].mxu0 %v1152
        %v1384 = vpop.f32.mrb[0].mxu0
        %v1385 = vadd.f32 0.0, %v1384
        %v1386 = vpop.f32.mrb[0].mxu0
        %v1387 = vadd.f32 0.0, %v1386
        %1388 = vmatprep.mubr.f32.mxu0 0.0
        %1389 = vmatmul.mubr.f32.gmra.mrb[0].mxu0 %v1159
        %v1390 = vpop.f32.mrb[0].mxu0
        %v1391 = vadd.f32 0.0, %v1390
        %v1392 = vpop.f32.mrb[0].mxu0
        %v1393 = vadd.f32 0.0, %v1392
        %1394 = vmatprep.mubr.f32.mxu0 0.0
        %1395 = vmatmul.mubr.f32.gmra.mrb[0].mxu0 %v1166
        %v1396 = vpop.f32.mrb[0].mxu0
        %v1397 = vadd.f32 0.0, %v1396
        %v1398 = vpop.f32.mrb[0].mxu0
        %v1399 = vadd.f32 0.0, %v1398
        %1400 = vmatprep.mubr.f32.mxu0 0.0
        %1401 = vmatmul.mubr.f32.gmra.mrb[0].mxu0 %v1173
        %v1402 = vpop.f32.mrb[0].mxu0
        %v1403 = vadd.f32 0.0, %v1402
        %v1404 = vpop.f32.mrb[0].mxu0
        %v1405 = vadd.f32 0.0, %v1404
        %1406 = vmatprep.mubr.f32.mxu0 0.0
        %1407 = vmatmul.mubr.f32.gmra.mrb[0].mxu0 %v1180
        %v1408 = vpop.f32.mrb[0].mxu0
        %v1409 = vadd.f32 0.0, %v1408
        %v1410 = vpop.f32.mrb[0].mxu0
        %v1411 = vadd.f32 0.0, %v1410
        %1412 = vmatprep.mubr.f32.mxu0 0.0
        %1413 = vmatmul.mubr.f32.gmra.mrb[0].mxu0 %v1187
        %v1414 = vpop.f32.mrb[0].mxu0
        %v1415 = vadd.f32 0.0, %v1414
        %v1416 = vpop.f32.mrb[0].mxu0
        %v1417 = vadd.f32 0.0, %v1416
        %1418 = vmatprep.mubr.f32.mxu0 0.0
        %1419 = vmatmul.mubr.f32.gmra.mrb[0].mxu0 %v1194
        %v1420 = vpop.f32.mrb[0].mxu0
        %v1421 = vadd.f32 0.0, %v1420
        %v1422 = vpop.f32.mrb[0].mxu0
        %v1423 = vadd.f32 0.0, %v1422
        %1424 = vmatprep.mubr.f32.mxu0 0.0
        %1425 = vmatmul.mubr.f32.gmra.mrb[0].mxu0 %v1201
        %v1426 = vpop.f32.mrb[0].mxu0
        %v1427 = vadd.f32 0.0, %v1426
        %v1428 = vpop.f32.mrb[0].mxu0
        %v1429 = vadd.f32 0.0, %v1428
        %1430 = vmatprep.mubr.f32.mxu0 0.0
        %1431 = vmatmul.mubr.f32.gmra.mrb[0].mxu0 %v1208
        %v1432 = vpop.f32.mrb[0].mxu0
        %v1433 = vadd.f32 0.0, %v1432
        %v1434 = vpop.f32.mrb[0].mxu0
        %v1435 = vadd.f32 0.0, %v1434
        %1436 = vmatprep.mubr.f32.mxu0 0.0
        %1437 = vmatmul.mubr.f32.gmra.mrb[0].mxu0 %v1215
        %v1438 = vpop.f32.mrb[0].mxu0
        %v1439 = vadd.f32 0.0, %v1438
        %v1440 = vpop.f32.mrb[0].mxu0
        %v1441 = vadd.f32 0.0, %v1440
        %1442 = vmatprep.mubr.f32.mxu0 0.0
        %1443 = vmatmul.mubr.f32.gmra.mrb[0].mxu0 %v1222
        %v1444 = vpop.f32.mrb[0].mxu0
        %v1445 = vadd.f32 0.0, %v1444
        %v1446 = vpop.f32.mrb[0].mxu0
        %v1447 = vadd.f32 0.0, %v1446
        %1448 = vmatprep.mubr.f32.mxu0 0.0
        %1449 = vmatmul.mubr.f32.gmra.mrb[0].mxu0 %v1229
        %v1450 = vpop.f32.mrb[0].mxu0
        %v1451 = vadd.f32 0.0, %v1450
        %v1452 = vpop.f32.mrb[0].mxu0
        %v1453 = vadd.f32 0.0, %v1452
        %1454 = vdwg.mxu0
        %1455 = vmatprep.subr.mxu0 %v1231
        %1456 = vmatpush1.msra.mxu0 %v1230
        %1457 = vmatprep.subr.mxu0 %v1233
        %1458 = vmatpush1.msra.mxu0 %v1232
        %1459 = vmatprep.subr.mxu0 %v1235
        %1460 = vmatpush1.msra.mxu0 %v1234
        %1461 = vmatprep.subr.mxu0 %v1237
        %1462 = vmatpush1.msra.mxu0 %v1236
        %1463 = vmatprep.subr.mxu0 %v1239
        %1464 = vmatpush1.msra.mxu0 %v1238
        %1465 = vmatprep.subr.mxu0 %v1241
        %1466 = vmatpush1.msra.mxu0 %v1240
        %1467 = vmatprep.subr.mxu0 %v1243
        %1468 = vmatpush1.msra.mxu0 %v1242
        %1469 = vmatprep.subr.mxu0 %v1245
        %1470 = vmatpush1.msra.mxu0 %v1244
        %1471 = vmatprep.subr.mxu0 %v1247
        %1472 = vmatpush1.msra.mxu0 %v1246
        %1473 = vmatprep.subr.mxu0 %v1249
        %1474 = vmatpush1.msra.mxu0 %v1248
        %1475 = vmatprep.subr.mxu0 %v1251
        %1476 = vmatpush1.msra.mxu0 %v1250
        %1477 = vmatprep.subr.mxu0 %v1253
        %1478 = vmatpush1.msra.mxu0 %v1252
        %1479 = vmatprep.subr.mxu0 %v1255
        %1480 = vmatpush1.msra.mxu0 %v1254
        %1481 = vmatprep.subr.mxu0 %v1257
        %1482 = vmatpush1.msra.mxu0 %v1256
        %1483 = vmatprep.subr.mxu0 %v1259
        %1484 = vmatpush1.msra.mxu0 %v1258
        %1485 = vmatprep.subr.mxu0 %v1261
        %1486 = vmatpush1.msra.mxu0 %v1260
        %1487 = vmatprep.subr.mxu0 0.0
        %1488 = vmatpush1.msra.mxu0 0.0
        %1489 = vmatprep.subr.mxu0 0.0
        %1490 = vmatpush1.msra.mxu0 0.0
        %1491 = vmatprep.subr.mxu0 0.0
        %1492 = vmatpush1.msra.mxu0 0.0
        %1493 = vmatprep.subr.mxu0 0.0
        %1494 = vmatpush1.msra.mxu0 0.0
        %1495 = vmatprep.subr.mxu0 0.0
        %1496 = vmatpush1.msra.mxu0 0.0
        %1497 = vmatprep.subr.mxu0 0.0
        %1498 = vmatpush1.msra.mxu0 0.0
        %1499 = vmatprep.subr.mxu0 0.0
        %1500 = vmatpush1.msra.mxu0 0.0
        %1501 = vmatprep.subr.mxu0 0.0
        %1502 = vmatpush1.msra.mxu0 0.0
        %1503 = vmatprep.subr.mxu0 0.0
        %1504 = vmatpush1.msra.mxu0 0.0
        %1505 = vmatprep.subr.mxu0 0.0
        %1506 = vmatpush1.msra.mxu0 0.0
        %1507 = vmatprep.subr.mxu0 0.0
        %1508 = vmatpush1.msra.mxu0 0.0
        %1509 = vmatprep.subr.mxu0 0.0
        %1510 = vmatpush1.msra.mxu0 0.0
        %1511 = vmatprep.subr.mxu0 0.0
        %1512 = vmatpush1.msra.mxu0 0.0
        %1513 = vmatprep.subr.mxu0 0.0
        %1514 = vmatpush1.msra.mxu0 0.0
        %1515 = vmatprep.subr.mxu0 0.0
        %1516 = vmatpush1.msra.mxu0 0.0
        %1517 = vmatprep.subr.mxu0 0.0
        %1518 = vmatpush1.msra.mxu0 0.0
        %1519 = vmatprep.mubr.f32.mxu0 0.0
        %1520 = vmatmul.mubr.f32.gmra.mrb[0].mxu0 %v653
        %v1521 = vpop.f32.mrb[0].mxu0
        %v1522 = vadd.f32 %v1361, %v1521
        %v1523 = vpop.f32.mrb[0].mxu0
        %v1524 = vadd.f32 %v1363, %v1523
        %1525 = vmatprep.mubr.f32.mxu0 0.0
        %1526 = vmatmul.mubr.f32.gmra.mrb[0].mxu0 %v654
        %v1527 = vpop.f32.mrb[0].mxu0
        %v1528 = vadd.f32 %v1367, %v1527
        %v1529 = vpop.f32.mrb[0].mxu0
        %v1530 = vadd.f32 %v1369, %v1529
        %1531 = vmatprep.mubr.f32.mxu0 0.0
        %1532 = vmatmul.mubr.f32.gmra.mrb[0].mxu0 %v655
        %v1533 = vpop.f32.mrb[0].mxu0
        %v1534 = vadd.f32 %v1373, %v1533
        %v1535 = vpop.f32.mrb[0].mxu0
        %v1536 = vadd.f32 %v1375, %v1535
        %1537 = vmatprep.mubr.f32.mxu0 0.0
        %1538 = vmatmul.mubr.f32.gmra.mrb[0].mxu0 %v656
        %v1539 = vpop.f32.mrb[0].mxu0
        %v1540 = vadd.f32 %v1379, %v1539
        %v1541 = vpop.f32.mrb[0].mxu0
        %v1542 = vadd.f32 %v1381, %v1541
        %1543 = vmatprep.mubr.f32.mxu0 0.0
        %1544 = vmatmul.mubr.f32.gmra.mrb[0].mxu0 %v657
        %v1545 = vpop.f32.mrb[0].mxu0
        %v1546 = vadd.f32 %v1385, %v1545
        %v1547 = vpop.f32.mrb[0].mxu0
        %v1548 = vadd.f32 %v1387, %v1547
        %1549 = vmatprep.mubr.f32.mxu0 0.0
        %1550 = vmatmul.mubr.f32.gmra.mrb[0].mxu0 %v658
        %v1551 = vpop.f32.mrb[0].mxu0
        %v1552 = vadd.f32 %v1391, %v1551
        %v1553 = vpop.f32.mrb[0].mxu0
        %v1554 = vadd.f32 %v1393, %v1553
        %1555 = vmatprep.mubr.f32.mxu0 0.0
        %1556 = vmatmul.mubr.f32.gmra.mrb[0].mxu0 %v659
        %v1557 = vpop.f32.mrb[0].mxu0
        %v1558 = vadd.f32 %v1397, %v1557
        %v1559 = vpop.f32.mrb[0].mxu0
        %v1560 = vadd.f32 %v1399, %v1559
        %1561 = vmatprep.mubr.f32.mxu0 0.0
        %1562 = vmatmul.mubr.f32.gmra.mrb[0].mxu0 %v660
        %v1563 = vpop.f32.mrb[0].mxu0
        %v1564 = vadd.f32 %v1403, %v1563
        %v1565 = vpop.f32.mrb[0].mxu0
        %v1566 = vadd.f32 %v1405, %v1565
        %1567 = vmatprep.mubr.f32.mxu0 0.0
        %1568 = vmatmul.mubr.f32.gmra.mrb[0].mxu0 %v661
        %v1569 = vpop.f32.mrb[0].mxu0
        %v1570 = vadd.f32 %v1409, %v1569
        %v1571 = vpop.f32.mrb[0].mxu0
        %v1572 = vadd.f32 %v1411, %v1571
        %1573 = vmatprep.mubr.f32.mxu0 0.0
        %1574 = vmatmul.mubr.f32.gmra.mrb[0].mxu0 %v662
        %v1575 = vpop.f32.mrb[0].mxu0
        %v1576 = vadd.f32 %v1415, %v1575
        %v1577 = vpop.f32.mrb[0].mxu0
        %v1578 = vadd.f32 %v1417, %v1577
        %1579 = vmatprep.mubr.f32.mxu0 0.0
        %1580 = vmatmul.mubr.f32.gmra.mrb[0].mxu0 %v663
        %v1581 = vpop.f32.mrb[0].mxu0
        %v1582 = vadd.f32 %v1421, %v1581
        %v1583 = vpop.f32.mrb[0].mxu0
        %v1584 = vadd.f32 %v1423, %v1583
        %1585 = vmatprep.mubr.f32.mxu0 0.0
        %1586 = vmatmul.mubr.f32.gmra.mrb[0].mxu0 %v664
        %v1587 = vpop.f32.mrb[0].mxu0
        %v1588 = vadd.f32 %v1427, %v1587
        %v1589 = vpop.f32.mrb[0].mxu0
        %v1590 = vadd.f32 %v1429, %v1589
        %1591 = vmatprep.mubr.f32.mxu0 0.0
        %1592 = vmatmul.mubr.f32.gmra.mrb[0].mxu0 %v665
        %v1593 = vpop.f32.mrb[0].mxu0
        %v1594 = vadd.f32 %v1433, %v1593
        %v1595 = vpop.f32.mrb[0].mxu0
        %v1596 = vadd.f32 %v1435, %v1595
        %1597 = vmatprep.mubr.f32.mxu0 0.0
        %1598 = vmatmul.mubr.f32.gmra.mrb[0].mxu0 %v666
        %v1599 = vpop.f32.mrb[0].mxu0
        %v1600 = vadd.f32 %v1439, %v1599
        %v1601 = vpop.f32.mrb[0].mxu0
        %v1602 = vadd.f32 %v1441, %v1601
        %1603 = vmatprep.mubr.f32.mxu0 0.0
        %1604 = vmatmul.mubr.f32.gmra.mrb[0].mxu0 %v667
        %v1605 = vpop.f32.mrb[0].mxu0
        %v1606 = vadd.f32 %v1445, %v1605
        %v1607 = vpop.f32.mrb[0].mxu0
        %v1608 = vadd.f32 %v1447, %v1607
        %1609 = vmatprep.mubr.f32.mxu0 0.0
        %1610 = vmatmul.mubr.f32.gmra.mrb[0].mxu0 %v668
        %v1611 = vpop.f32.mrb[0].mxu0
        %v1612 = vadd.f32 %v1451, %v1611
        %v1613 = vpop.f32.mrb[0].mxu0
        %v1614 = vadd.f32 %v1453, %v1613
        %1615 = vdwg.mxu0
        %v1616 = vld [vmem:[%s6] sm:$0x3]
        %v1618 = vlaneseq
        %v1619 = vshrl.u32 %v1618, 7
        %v1620 = vsub.s32 0, %v1619
        %v1621 = vrot.slane %v1616, %v1620
        %v1622 = vlaneseq
        %v1623 = vshrl.u32 %v1622, 7
        %v1624 = vsub.s32 1, %v1623
        %v1625 = vrot.slane %v1616, %v1624
        %v1628 = vadd.f32 %v1522, %v1621
        %v1629 = vadd.f32 %v1524, %v1625
        %v1630 = vadd.f32 %v1528, %v1621
        %v1631 = vadd.f32 %v1530, %v1625
        %v1632 = vadd.f32 %v1534, %v1621
        %v1633 = vadd.f32 %v1536, %v1625
        %v1634 = vadd.f32 %v1540, %v1621
        %v1635 = vadd.f32 %v1542, %v1625
        %v1636 = vadd.f32 %v1546, %v1621
        %v1637 = vadd.f32 %v1548, %v1625
        %v1638 = vadd.f32 %v1552, %v1621
        %v1639 = vadd.f32 %v1554, %v1625
        %v1640 = vadd.f32 %v1558, %v1621
        %v1641 = vadd.f32 %v1560, %v1625
        %v1642 = vadd.f32 %v1564, %v1621
        %v1643 = vadd.f32 %v1566, %v1625
        %v1644 = vadd.f32 %v1570, %v1621
        %v1645 = vadd.f32 %v1572, %v1625
        %v1646 = vadd.f32 %v1576, %v1621
        %v1647 = vadd.f32 %v1578, %v1625
        %v1648 = vadd.f32 %v1582, %v1621
        %v1649 = vadd.f32 %v1584, %v1625
        %v1650 = vadd.f32 %v1588, %v1621
        %v1651 = vadd.f32 %v1590, %v1625
        %v1652 = vadd.f32 %v1594, %v1621
        %v1653 = vadd.f32 %v1596, %v1625
        %v1654 = vadd.f32 %v1600, %v1621
        %v1655 = vadd.f32 %v1602, %v1625
        %v1656 = vadd.f32 %v1606, %v1621
        %v1657 = vadd.f32 %v1608, %v1625
        %v1658 = vadd.f32 %v1612, %v1621
        %v1659 = vadd.f32 %v1614, %v1625
        %v1660 = vsub.f32 0.0, %v1628
        %v1661 = vsub.f32 0.0, %v1629
        %v1662 = vsub.f32 0.0, %v1630
        %v1663 = vsub.f32 0.0, %v1631
        %v1664 = vsub.f32 0.0, %v1632
        %v1665 = vsub.f32 0.0, %v1633
        %v1666 = vsub.f32 0.0, %v1634
        %v1667 = vsub.f32 0.0, %v1635
        %v1668 = vsub.f32 0.0, %v1636
        %v1669 = vsub.f32 0.0, %v1637
        %v1670 = vsub.f32 0.0, %v1638
        %v1671 = vsub.f32 0.0, %v1639
        %v1672 = vsub.f32 0.0, %v1640
        %v1673 = vsub.f32 0.0, %v1641
        %v1674 = vsub.f32 0.0, %v1642
        %v1675 = vsub.f32 0.0, %v1643
        %v1676 = vsub.f32 0.0, %v1644
        %v1677 = vsub.f32 0.0, %v1645
        %v1678 = vsub.f32 0.0, %v1646
        %v1679 = vsub.f32 0.0, %v1647
        %v1680 = vsub.f32 0.0, %v1648
        %v1681 = vsub.f32 0.0, %v1649
        %v1682 = vsub.f32 0.0, %v1650
        %v1683 = vsub.f32 0.0, %v1651
        %v1684 = vsub.f32 0.0, %v1652
        %v1685 = vsub.f32 0.0, %v1653
        %v1686 = vsub.f32 0.0, %v1654
        %v1687 = vsub.f32 0.0, %v1655
        %v1688 = vsub.f32 0.0, %v1656
        %v1689 = vsub.f32 0.0, %v1657
        %v1690 = vsub.f32 0.0, %v1658
        %v1691 = vsub.f32 0.0, %v1659
        %v1692 = vmul.f32 %v1660, 1.442695
        %v1693 = vpow.pop %v1692
        %v1694 = vmul.f32 %v1661, 1.442695
        %v1695 = vpow.pop %v1694
        %v1696 = vmul.f32 %v1662, 1.442695
        %v1697 = vpow.pop %v1696
        %v1698 = vmul.f32 %v1663, 1.442695
        %v1699 = vpow.pop %v1698
        %v1700 = vmul.f32 %v1664, 1.442695
        %v1701 = vpow.pop %v1700
        %v1702 = vmul.f32 %v1665, 1.442695
        %v1703 = vpow.pop %v1702
        %v1704 = vmul.f32 %v1666, 1.442695
        %v1705 = vpow.pop %v1704
        %v1706 = vmul.f32 %v1667, 1.442695
        %v1707 = vpow.pop %v1706
        %v1708 = vmul.f32 %v1668, 1.442695
        %v1709 = vpow.pop %v1708
        %v1710 = vmul.f32 %v1669, 1.442695
        %v1711 = vpow.pop %v1710
        %v1712 = vmul.f32 %v1670, 1.442695
        %v1713 = vpow.pop %v1712
        %v1714 = vmul.f32 %v1671, 1.442695
        %v1715 = vpow.pop %v1714
        %v1716 = vmul.f32 %v1672, 1.442695
        %v1717 = vpow.pop %v1716
        %v1718 = vmul.f32 %v1673, 1.442695
        %v1719 = vpow.pop %v1718
        %v1720 = vmul.f32 %v1674, 1.442695
        %v1721 = vpow.pop %v1720
        %v1722 = vmul.f32 %v1675, 1.442695
        %v1723 = vpow.pop %v1722
        %v1724 = vmul.f32 %v1676, 1.442695
        %v1725 = vpow.pop %v1724
        %v1726 = vmul.f32 %v1677, 1.442695
        %v1727 = vpow.pop %v1726
        %v1728 = vmul.f32 %v1678, 1.442695
        %v1729 = vpow.pop %v1728
        %v1730 = vmul.f32 %v1679, 1.442695
        %v1731 = vpow.pop %v1730
        %v1732 = vmul.f32 %v1680, 1.442695
        %v1733 = vpow.pop %v1732
        %v1734 = vmul.f32 %v1681, 1.442695
        %v1735 = vpow.pop %v1734
        %v1736 = vmul.f32 %v1682, 1.442695
        %v1737 = vpow.pop %v1736
        %v1738 = vmul.f32 %v1683, 1.442695
        %v1739 = vpow.pop %v1738
        %v1740 = vmul.f32 %v1684, 1.442695
        %v1741 = vpow.pop %v1740
        %v1742 = vmul.f32 %v1685, 1.442695
        %v1743 = vpow.pop %v1742
        %v1744 = vmul.f32 %v1686, 1.442695
        %v1745 = vpow.pop %v1744
        %v1746 = vmul.f32 %v1687, 1.442695
        %v1747 = vpow.pop %v1746
        %v1748 = vmul.f32 %v1688, 1.442695
        %v1749 = vpow.pop %v1748
        %v1750 = vmul.f32 %v1689, 1.442695
        %v1751 = vpow.pop %v1750
        %v1752 = vmul.f32 %v1690, 1.442695
        %v1753 = vpow.pop %v1752
        %v1754 = vmul.f32 %v1691, 1.442695
        %v1755 = vpow.pop %v1754
        %v1756 = vadd.f32 %v1693, 1.0
        %v1757 = vadd.f32 %v1695, 1.0
        %v1758 = vadd.f32 %v1697, 1.0
        %v1759 = vadd.f32 %v1699, 1.0
        %v1760 = vadd.f32 %v1701, 1.0
        %v1761 = vadd.f32 %v1703, 1.0
        %v1762 = vadd.f32 %v1705, 1.0
        %v1763 = vadd.f32 %v1707, 1.0
        %v1764 = vadd.f32 %v1709, 1.0
        %v1765 = vadd.f32 %v1711, 1.0
        %v1766 = vadd.f32 %v1713, 1.0
        %v1767 = vadd.f32 %v1715, 1.0
        %v1768 = vadd.f32 %v1717, 1.0
        %v1769 = vadd.f32 %v1719, 1.0
        %v1770 = vadd.f32 %v1721, 1.0
        %v1771 = vadd.f32 %v1723, 1.0
        %v1772 = vadd.f32 %v1725, 1.0
        %v1773 = vadd.f32 %v1727, 1.0
        %v1774 = vadd.f32 %v1729, 1.0
        %v1775 = vadd.f32 %v1731, 1.0
        %v1776 = vadd.f32 %v1733, 1.0
        %v1777 = vadd.f32 %v1735, 1.0
        %v1778 = vadd.f32 %v1737, 1.0
        %v1779 = vadd.f32 %v1739, 1.0
        %v1780 = vadd.f32 %v1741, 1.0
        %v1781 = vadd.f32 %v1743, 1.0
        %v1782 = vadd.f32 %v1745, 1.0
        %v1783 = vadd.f32 %v1747, 1.0
        %v1784 = vadd.f32 %v1749, 1.0
        %v1785 = vadd.f32 %v1751, 1.0
        %v1786 = vadd.f32 %v1753, 1.0
        %v1787 = vadd.f32 %v1755, 1.0
        %v1788 = vrcp.pop %v1756
        %v1789 = vmul.f32 1.0, %v1788
        %v1790 = vrcp.pop %v1757
        %v1791 = vmul.f32 1.0, %v1790
        %v1792 = vrcp.pop %v1758
        %v1793 = vmul.f32 1.0, %v1792
        %v1794 = vrcp.pop %v1759
        %v1795 = vmul.f32 1.0, %v1794
        %v1796 = vrcp.pop %v1760
        %v1797 = vmul.f32 1.0, %v1796
        %v1798 = vrcp.pop %v1761
        %v1799 = vmul.f32 1.0, %v1798
        %v1800 = vrcp.pop %v1762
        %v1801 = vmul.f32 1.0, %v1800
        %v1802 = vrcp.pop %v1763
        %v1803 = vmul.f32 1.0, %v1802
        %v1804 = vrcp.pop %v1764
        %v1805 = vmul.f32 1.0, %v1804
        %v1806 = vrcp.pop %v1765
        %v1807 = vmul.f32 1.0, %v1806
        %v1808 = vrcp.pop %v1766
        %v1809 = vmul.f32 1.0, %v1808
        %v1810 = vrcp.pop %v1767
        %v1811 = vmul.f32 1.0, %v1810
        %v1812 = vrcp.pop %v1768
        %v1813 = vmul.f32 1.0, %v1812
        %v1814 = vrcp.pop %v1769
        %v1815 = vmul.f32 1.0, %v1814
        %v1816 = vrcp.pop %v1770
        %v1817 = vmul.f32 1.0, %v1816
        %v1818 = vrcp.pop %v1771
        %v1819 = vmul.f32 1.0, %v1818
        %v1820 = vrcp.pop %v1772
        %v1821 = vmul.f32 1.0, %v1820
        %v1822 = vrcp.pop %v1773
        %v1823 = vmul.f32 1.0, %v1822
        %v1824 = vrcp.pop %v1774
        %v1825 = vmul.f32 1.0, %v1824
        %v1826 = vrcp.pop %v1775
        %v1827 = vmul.f32 1.0, %v1826
        %v1828 = vrcp.pop %v1776
        %v1829 = vmul.f32 1.0, %v1828
        %v1830 = vrcp.pop %v1777
        %v1831 = vmul.f32 1.0, %v1830
        %v1832 = vrcp.pop %v1778
        %v1833 = vmul.f32 1.0, %v1832
        %v1834 = vrcp.pop %v1779
        %v1835 = vmul.f32 1.0, %v1834
        %v1836 = vrcp.pop %v1780
        %v1837 = vmul.f32 1.0, %v1836
        %v1838 = vrcp.pop %v1781
        %v1839 = vmul.f32 1.0, %v1838
        %v1840 = vrcp.pop %v1782
        %v1841 = vmul.f32 1.0, %v1840
        %v1842 = vrcp.pop %v1783
        %v1843 = vmul.f32 1.0, %v1842
        %v1844 = vrcp.pop %v1784
        %v1845 = vmul.f32 1.0, %v1844
        %v1846 = vrcp.pop %v1785
        %v1847 = vmul.f32 1.0, %v1846
        %v1848 = vrcp.pop %v1786
        %v1849 = vmul.f32 1.0, %v1848
        %v1850 = vrcp.pop %v1787
        %v1851 = vmul.f32 1.0, %v1850
        %v1852 = vmul.f32 %v1628, %v1789
        %v1853 = vmul.f32 %v1629, %v1791
        %v1854 = vmul.f32 %v1630, %v1793
        %v1855 = vmul.f32 %v1631, %v1795
        %v1856 = vmul.f32 %v1632, %v1797
        %v1857 = vmul.f32 %v1633, %v1799
        %v1858 = vmul.f32 %v1634, %v1801
        %v1859 = vmul.f32 %v1635, %v1803
        %v1860 = vmul.f32 %v1636, %v1805
        %v1861 = vmul.f32 %v1637, %v1807
        %v1862 = vmul.f32 %v1638, %v1809
        %v1863 = vmul.f32 %v1639, %v1811
        %v1864 = vmul.f32 %v1640, %v1813
        %v1865 = vmul.f32 %v1641, %v1815
        %v1866 = vmul.f32 %v1642, %v1817
        %v1867 = vmul.f32 %v1643, %v1819
        %v1868 = vmul.f32 %v1644, %v1821
        %v1869 = vmul.f32 %v1645, %v1823
        %v1870 = vmul.f32 %v1646, %v1825
        %v1871 = vmul.f32 %v1647, %v1827
        %v1872 = vmul.f32 %v1648, %v1829
        %v1873 = vmul.f32 %v1649, %v1831
        %v1874 = vmul.f32 %v1650, %v1833
        %v1875 = vmul.f32 %v1651, %v1835
        %v1876 = vmul.f32 %v1652, %v1837
        %v1877 = vmul.f32 %v1653, %v1839
        %v1878 = vmul.f32 %v1654, %v1841
        %v1879 = vmul.f32 %v1655, %v1843
        %v1880 = vmul.f32 %v1656, %v1845
        %v1881 = vmul.f32 %v1657, %v1847
        %v1882 = vmul.f32 %v1658, %v1849
        %v1883 = vmul.f32 %v1659, %v1851
        %v1884 = vld [vmem:[#allocation13] sm:$0xff]
        %v1885 = vld [vmem:[#allocation13 + $0x8] sm:$0xff]
        %v1886 = vld [vmem:[#allocation13 + $0x10] sm:$0xff]
        %v1887 = vld [vmem:[#allocation13 + $0x18] sm:$0xff]
        %v1888 = vld [vmem:[#allocation13 + $0x20] sm:$0xff]
        %v1889 = vld [vmem:[#allocation13 + $0x28] sm:$0xff]
        %v1890 = vld [vmem:[#allocation13 + $0x30] sm:$0xff]
        %v1891 = vld [vmem:[#allocation13 + $0x38] sm:$0xff]
        %v1892 = vld [vmem:[#allocation13 + $0x40] sm:$0xff]
        %v1893 = vld [vmem:[#allocation13 + $0x48] sm:$0xff]
        %v1894 = vld [vmem:[#allocation13 + $0x50] sm:$0xff]
        %v1895 = vld [vmem:[#allocation13 + $0x58] sm:$0xff]
        %v1896 = vld [vmem:[#allocation13 + $0x60] sm:$0xff]
        %v1897 = vld [vmem:[#allocation13 + $0x68] sm:$0xff]
        %v1898 = vld [vmem:[#allocation13 + $0x70] sm:$0xff]
        %v1899 = vld [vmem:[#allocation13 + $0x78] sm:$0xff]
        %v1900 = vld [vmem:[%s8] sm:$0x1]
        %v1902 = vlaneseq
        %v1903 = vshrl.u32 %v1902, 7
        %v1904 = vsub.s32 0, %v1903
        %v1905 = vrot.slane %v1900, %v1904
        %1907 = vmatprep.subr.mxu0 0.0
        %1908 = vmatpush1.msra.mxu0 %v1884
        %1909 = vmatprep.subr.mxu0 0.0
        %1910 = vmatpush1.msra.mxu0 %v1885
        %1911 = vmatprep.subr.mxu0 0.0
        %1912 = vmatpush1.msra.mxu0 %v1886
        %1913 = vmatprep.subr.mxu0 0.0
        %1914 = vmatpush1.msra.mxu0 %v1887
        %1915 = vmatprep.subr.mxu0 0.0
        %1916 = vmatpush1.msra.mxu0 %v1888
        %1917 = vmatprep.subr.mxu0 0.0
        %1918 = vmatpush1.msra.mxu0 %v1889
        %1919 = vmatprep.subr.mxu0 0.0
        %1920 = vmatpush1.msra.mxu0 %v1890
        %1921 = vmatprep.subr.mxu0 0.0
        %1922 = vmatpush1.msra.mxu0 %v1891
        %1923 = vmatprep.subr.mxu0 0.0
        %1924 = vmatpush1.msra.mxu0 %v1892
        %1925 = vmatprep.subr.mxu0 0.0
        %1926 = vmatpush1.msra.mxu0 %v1893
        %1927 = vmatprep.subr.mxu0 0.0
        %1928 = vmatpush1.msra.mxu0 %v1894
        %1929 = vmatprep.subr.mxu0 0.0
        %1930 = vmatpush1.msra.mxu0 %v1895
        %1931 = vmatprep.subr.mxu0 0.0
        %1932 = vmatpush1.msra.mxu0 %v1896
        %1933 = vmatprep.subr.mxu0 0.0
        %1934 = vmatpush1.msra.mxu0 %v1897
        %1935 = vmatprep.subr.mxu0 0.0
        %1936 = vmatpush1.msra.mxu0 %v1898
        %1937 = vmatprep.subr.mxu0 0.0
        %1938 = vmatpush1.msra.mxu0 %v1899
        %1939 = vmatprep.subr.mxu0 0.0
        %1940 = vmatpush1.msra.mxu0 0.0
        %1941 = vmatprep.subr.mxu0 0.0
        %1942 = vmatpush1.msra.mxu0 0.0
        %1943 = vmatprep.subr.mxu0 0.0
        %1944 = vmatpush1.msra.mxu0 0.0
        %1945 = vmatprep.subr.mxu0 0.0
        %1946 = vmatpush1.msra.mxu0 0.0
        %1947 = vmatprep.subr.mxu0 0.0
        %1948 = vmatpush1.msra.mxu0 0.0
        %1949 = vmatprep.subr.mxu0 0.0
        %1950 = vmatpush1.msra.mxu0 0.0
        %1951 = vmatprep.subr.mxu0 0.0
        %1952 = vmatpush1.msra.mxu0 0.0
        %1953 = vmatprep.subr.mxu0 0.0
        %1954 = vmatpush1.msra.mxu0 0.0
        %1955 = vmatprep.subr.mxu0 0.0
        %1956 = vmatpush1.msra.mxu0 0.0
        %1957 = vmatprep.subr.mxu0 0.0
        %1958 = vmatpush1.msra.mxu0 0.0
        %1959 = vmatprep.subr.mxu0 0.0
        %1960 = vmatpush1.msra.mxu0 0.0
        %1961 = vmatprep.subr.mxu0 0.0
        %1962 = vmatpush1.msra.mxu0 0.0
        %1963 = vmatprep.subr.mxu0 0.0
        %1964 = vmatpush1.msra.mxu0 0.0
        %1965 = vmatprep.subr.mxu0 0.0
        %1966 = vmatpush1.msra.mxu0 0.0
        %1967 = vmatprep.subr.mxu0 0.0
        %1968 = vmatpush1.msra.mxu0 0.0
        %1969 = vmatprep.subr.mxu0 0.0
        %1970 = vmatpush1.msra.mxu0 0.0
        %1971 = vmatprep.mubr.f32.mxu0 0.0
        %1972 = vmatmul.mubr.f32.gmra.mrb[0].mxu0 %v1852
        %v1973 = vpop.f32.mrb[0].mxu0
        %v1974 = vadd.f32 %v1905, %v1973
        %v1975 = vpop.f32.mrb[0].mxu0
        %1976 = vmatprep.mubr.f32.mxu0 0.0
        %1977 = vmatmul.mubr.f32.gmra.mrb[0].mxu0 %v1854
        %v1978 = vpop.f32.mrb[0].mxu0
        %v1979 = vadd.f32 %v1905, %v1978
        %v1980 = vpop.f32.mrb[0].mxu0
        %1981 = vmatprep.mubr.f32.mxu0 0.0
        %1982 = vmatmul.mubr.f32.gmra.mrb[0].mxu0 %v1856
        %v1983 = vpop.f32.mrb[0].mxu0
        %v1984 = vadd.f32 %v1905, %v1983
        %v1985 = vpop.f32.mrb[0].mxu0
        %1986 = vmatprep.mubr.f32.mxu0 0.0
        %1987 = vmatmul.mubr.f32.gmra.mrb[0].mxu0 %v1858
        %v1988 = vpop.f32.mrb[0].mxu0
        %v1989 = vadd.f32 %v1905, %v1988
        %v1990 = vpop.f32.mrb[0].mxu0
        %1991 = vmatprep.mubr.f32.mxu0 0.0
        %1992 = vmatmul.mubr.f32.gmra.mrb[0].mxu0 %v1860
        %v1993 = vpop.f32.mrb[0].mxu0
        %v1994 = vadd.f32 %v1905, %v1993
        %v1995 = vpop.f32.mrb[0].mxu0
        %1996 = vmatprep.mubr.f32.mxu0 0.0
        %1997 = vmatmul.mubr.f32.gmra.mrb[0].mxu0 %v1862
        %v1998 = vpop.f32.mrb[0].mxu0
        %v1999 = vadd.f32 %v1905, %v1998
        %v2000 = vpop.f32.mrb[0].mxu0
        %2001 = vmatprep.mubr.f32.mxu0 0.0
        %2002 = vmatmul.mubr.f32.gmra.mrb[0].mxu0 %v1864
        %v2003 = vpop.f32.mrb[0].mxu0
        %v2004 = vadd.f32 %v1905, %v2003
        %v2005 = vpop.f32.mrb[0].mxu0
        %2006 = vmatprep.mubr.f32.mxu0 0.0
        %2007 = vmatmul.mubr.f32.gmra.mrb[0].mxu0 %v1866
        %v2008 = vpop.f32.mrb[0].mxu0
        %v2009 = vadd.f32 %v1905, %v2008
        %v2010 = vpop.f32.mrb[0].mxu0
        %2011 = vmatprep.mubr.f32.mxu0 0.0
        %2012 = vmatmul.mubr.f32.gmra.mrb[0].mxu0 %v1868
        %v2013 = vpop.f32.mrb[0].mxu0
        %v2014 = vadd.f32 %v1905, %v2013
        %v2015 = vpop.f32.mrb[0].mxu0
        %2016 = vmatprep.mubr.f32.mxu0 0.0
        %2017 = vmatmul.mubr.f32.gmra.mrb[0].mxu0 %v1870
        %v2018 = vpop.f32.mrb[0].mxu0
        %v2019 = vadd.f32 %v1905, %v2018
        %v2020 = vpop.f32.mrb[0].mxu0
        %2021 = vmatprep.mubr.f32.mxu0 0.0
        %2022 = vmatmul.mubr.f32.gmra.mrb[0].mxu0 %v1872
        %v2023 = vpop.f32.mrb[0].mxu0
        %v2024 = vadd.f32 %v1905, %v2023
        %v2025 = vpop.f32.mrb[0].mxu0
        %2026 = vmatprep.mubr.f32.mxu0 0.0
        %2027 = vmatmul.mubr.f32.gmra.mrb[0].mxu0 %v1874
        %v2028 = vpop.f32.mrb[0].mxu0
        %v2029 = vadd.f32 %v1905, %v2028
        %v2030 = vpop.f32.mrb[0].mxu0
        %2031 = vmatprep.mubr.f32.mxu0 0.0
        %2032 = vmatmul.mubr.f32.gmra.mrb[0].mxu0 %v1876
        %v2033 = vpop.f32.mrb[0].mxu0
        %v2034 = vadd.f32 %v1905, %v2033
        %v2035 = vpop.f32.mrb[0].mxu0
        %2036 = vmatprep.mubr.f32.mxu0 0.0
        %2037 = vmatmul.mubr.f32.gmra.mrb[0].mxu0 %v1878
        %v2038 = vpop.f32.mrb[0].mxu0
        %v2039 = vadd.f32 %v1905, %v2038
        %v2040 = vpop.f32.mrb[0].mxu0
        %2041 = vmatprep.mubr.f32.mxu0 0.0
        %2042 = vmatmul.mubr.f32.gmra.mrb[0].mxu0 %v1880
        %v2043 = vpop.f32.mrb[0].mxu0
        %v2044 = vadd.f32 %v1905, %v2043
        %v2045 = vpop.f32.mrb[0].mxu0
        %2046 = vmatprep.mubr.f32.mxu0 0.0
        %2047 = vmatmul.mubr.f32.gmra.mrb[0].mxu0 %v1882
        %v2048 = vpop.f32.mrb[0].mxu0
        %v2049 = vadd.f32 %v1905, %v2048
        %v2050 = vpop.f32.mrb[0].mxu0
        %2051 = vdwg.mxu0
        %2052 = vst [vmem:[%s641] sm:$0xff] %v1974
        %2053 = vst [vmem:[%s641 + $0x8] sm:$0xff] %v1979
        %2054 = vst [vmem:[%s641 + $0x10] sm:$0xff] %v1984
        %2055 = vst [vmem:[%s641 + $0x18] sm:$0xff] %v1989
        %2056 = vst [vmem:[%s641 + $0x20] sm:$0xff] %v1994
        %2057 = vst [vmem:[%s641 + $0x28] sm:$0xff] %v1999
        %2058 = vst [vmem:[%s641 + $0x30] sm:$0xff] %v2004
        %2059 = vst [vmem:[%s641 + $0x38] sm:$0xff] %v2009
        %2060 = vst [vmem:[%s641 + $0x40] sm:$0xff] %v2014
        %2061 = vst [vmem:[%s641 + $0x48] sm:$0xff] %v2019
        %2062 = vst [vmem:[%s641 + $0x50] sm:$0xff] %v2024
        %2063 = vst [vmem:[%s641 + $0x58] sm:$0xff] %v2029
        %2064 = vst [vmem:[%s641 + $0x60] sm:$0xff] %v2034
        %2065 = vst [vmem:[%s641 + $0x68] sm:$0xff] %v2039
        %2066 = vst [vmem:[%s641 + $0x70] sm:$0xff] %v2044
        %2067 = vst [vmem:[%s641 + $0x78] sm:$0xff] %v2049
        %v2068 = vld [vmem:[#allocation14] sm:$0xff]
        %v2069 = vld [vmem:[#allocation14 + $0x8] sm:$0xff]
        %v2070 = vld [vmem:[#allocation14 + $0x10] sm:$0xff]
        %v2071 = vld [vmem:[#allocation14 + $0x18] sm:$0xff]
        %v2072 = vld [vmem:[#allocation14 + $0x20] sm:$0xff]
        %v2073 = vld [vmem:[#allocation14 + $0x28] sm:$0xff]
        %v2074 = vld [vmem:[#allocation14 + $0x30] sm:$0xff]
        %v2075 = vld [vmem:[#allocation14 + $0x38] sm:$0xff]
        %v2076 = vld [vmem:[#allocation14 + $0x40] sm:$0xff]
        %v2077 = vld [vmem:[#allocation14 + $0x48] sm:$0xff]
        %v2078 = vld [vmem:[#allocation14 + $0x50] sm:$0xff]
        %v2079 = vld [vmem:[#allocation14 + $0x58] sm:$0xff]
        %v2080 = vld [vmem:[#allocation14 + $0x60] sm:$0xff]
        %v2081 = vld [vmem:[#allocation14 + $0x68] sm:$0xff]
        %v2082 = vld [vmem:[#allocation14 + $0x70] sm:$0xff]
        %v2083 = vld [vmem:[#allocation14 + $0x78] sm:$0xff]
        %v2084 = vld [vmem:[%s10] sm:$0x1]
        %v2086 = vlaneseq
        %v2087 = vshrl.u32 %v2086, 7
        %v2088 = vsub.s32 0, %v2087
        %v2089 = vrot.slane %v2084, %v2088
        %2091 = vmatprep.subr.mxu0 0.0
        %2092 = vmatpush1.msra.mxu0 %v2068
        %2093 = vmatprep.subr.mxu0 0.0
        %2094 = vmatpush1.msra.mxu0 %v2069
        %2095 = vmatprep.subr.mxu0 0.0
        %2096 = vmatpush1.msra.mxu0 %v2070
        %2097 = vmatprep.subr.mxu0 0.0
        %2098 = vmatpush1.msra.mxu0 %v2071
        %2099 = vmatprep.subr.mxu0 0.0
        %2100 = vmatpush1.msra.mxu0 %v2072
        %2101 = vmatprep.subr.mxu0 0.0
        %2102 = vmatpush1.msra.mxu0 %v2073
        %2103 = vmatprep.subr.mxu0 0.0
        %2104 = vmatpush1.msra.mxu0 %v2074
        %2105 = vmatprep.subr.mxu0 0.0
        %2106 = vmatpush1.msra.mxu0 %v2075
        %2107 = vmatprep.subr.mxu0 0.0
        %2108 = vmatpush1.msra.mxu0 %v2076
        %2109 = vmatprep.subr.mxu0 0.0
        %2110 = vmatpush1.msra.mxu0 %v2077
        %2111 = vmatprep.subr.mxu0 0.0
        %2112 = vmatpush1.msra.mxu0 %v2078
        %2113 = vmatprep.subr.mxu0 0.0
        %2114 = vmatpush1.msra.mxu0 %v2079
        %2115 = vmatprep.subr.mxu0 0.0
        %2116 = vmatpush1.msra.mxu0 %v2080
        %2117 = vmatprep.subr.mxu0 0.0
        %2118 = vmatpush1.msra.mxu0 %v2081
        %2119 = vmatprep.subr.mxu0 0.0
        %2120 = vmatpush1.msra.mxu0 %v2082
        %2121 = vmatprep.subr.mxu0 0.0
        %2122 = vmatpush1.msra.mxu0 %v2083
        %2123 = vmatprep.subr.mxu0 0.0
        %2124 = vmatpush1.msra.mxu0 0.0
        %2125 = vmatprep.subr.mxu0 0.0
        %2126 = vmatpush1.msra.mxu0 0.0
        %2127 = vmatprep.subr.mxu0 0.0
        %2128 = vmatpush1.msra.mxu0 0.0
        %2129 = vmatprep.subr.mxu0 0.0
        %2130 = vmatpush1.msra.mxu0 0.0
        %2131 = vmatprep.subr.mxu0 0.0
        %2132 = vmatpush1.msra.mxu0 0.0
        %2133 = vmatprep.subr.mxu0 0.0
        %2134 = vmatpush1.msra.mxu0 0.0
        %2135 = vmatprep.subr.mxu0 0.0
        %2136 = vmatpush1.msra.mxu0 0.0
        %2137 = vmatprep.subr.mxu0 0.0
        %2138 = vmatpush1.msra.mxu0 0.0
        %2139 = vmatprep.subr.mxu0 0.0
        %2140 = vmatpush1.msra.mxu0 0.0
        %2141 = vmatprep.subr.mxu0 0.0
        %2142 = vmatpush1.msra.mxu0 0.0
        %2143 = vmatprep.subr.mxu0 0.0
        %2144 = vmatpush1.msra.mxu0 0.0
        %2145 = vmatprep.subr.mxu0 0.0
        %2146 = vmatpush1.msra.mxu0 0.0
        %2147 = vmatprep.subr.mxu0 0.0
        %2148 = vmatpush1.msra.mxu0 0.0
        %2149 = vmatprep.subr.mxu0 0.0
        %2150 = vmatpush1.msra.mxu0 0.0
        %2151 = vmatprep.subr.mxu0 0.0
        %2152 = vmatpush1.msra.mxu0 0.0
        %2153 = vmatprep.subr.mxu0 0.0
        %2154 = vmatpush1.msra.mxu0 0.0
        %2155 = vmatprep.mubr.f32.mxu0 0.0
        %2156 = vmatmul.mubr.f32.gmra.mrb[0].mxu0 %v1853
        %v2157 = vpop.f32.mrb[0].mxu0
        %v2158 = vadd.f32 %v2089, %v2157
        %v2159 = vpop.f32.mrb[0].mxu0
        %2160 = vmatprep.mubr.f32.mxu0 0.0
        %2161 = vmatmul.mubr.f32.gmra.mrb[0].mxu0 %v1855
        %v2162 = vpop.f32.mrb[0].mxu0
        %v2163 = vadd.f32 %v2089, %v2162
        %v2164 = vpop.f32.mrb[0].mxu0
        %2165 = vmatprep.mubr.f32.mxu0 0.0
        %2166 = vmatmul.mubr.f32.gmra.mrb[0].mxu0 %v1857
        %v2167 = vpop.f32.mrb[0].mxu0
        %v2168 = vadd.f32 %v2089, %v2167
        %v2169 = vpop.f32.mrb[0].mxu0
        %2170 = vmatprep.mubr.f32.mxu0 0.0
        %2171 = vmatmul.mubr.f32.gmra.mrb[0].mxu0 %v1859
        %v2172 = vpop.f32.mrb[0].mxu0
        %v2173 = vadd.f32 %v2089, %v2172
        %v2174 = vpop.f32.mrb[0].mxu0
        %2175 = vmatprep.mubr.f32.mxu0 0.0
        %2176 = vmatmul.mubr.f32.gmra.mrb[0].mxu0 %v1861
        %v2177 = vpop.f32.mrb[0].mxu0
        %v2178 = vadd.f32 %v2089, %v2177
        %v2179 = vpop.f32.mrb[0].mxu0
        %2180 = vmatprep.mubr.f32.mxu0 0.0
        %2181 = vmatmul.mubr.f32.gmra.mrb[0].mxu0 %v1863
        %v2182 = vpop.f32.mrb[0].mxu0
        %v2183 = vadd.f32 %v2089, %v2182
        %v2184 = vpop.f32.mrb[0].mxu0
        %2185 = vmatprep.mubr.f32.mxu0 0.0
        %2186 = vmatmul.mubr.f32.gmra.mrb[0].mxu0 %v1865
        %v2187 = vpop.f32.mrb[0].mxu0
        %v2188 = vadd.f32 %v2089, %v2187
        %v2189 = vpop.f32.mrb[0].mxu0
        %2190 = vmatprep.mubr.f32.mxu0 0.0
        %2191 = vmatmul.mubr.f32.gmra.mrb[0].mxu0 %v1867
        %v2192 = vpop.f32.mrb[0].mxu0
        %v2193 = vadd.f32 %v2089, %v2192
        %v2194 = vpop.f32.mrb[0].mxu0
        %2195 = vmatprep.mubr.f32.mxu0 0.0
        %2196 = vmatmul.mubr.f32.gmra.mrb[0].mxu0 %v1869
        %v2197 = vpop.f32.mrb[0].mxu0
        %v2198 = vadd.f32 %v2089, %v2197
        %v2199 = vpop.f32.mrb[0].mxu0
        %2200 = vmatprep.mubr.f32.mxu0 0.0
        %2201 = vmatmul.mubr.f32.gmra.mrb[0].mxu0 %v1871
        %v2202 = vpop.f32.mrb[0].mxu0
        %v2203 = vadd.f32 %v2089, %v2202
        %v2204 = vpop.f32.mrb[0].mxu0
        %2205 = vmatprep.mubr.f32.mxu0 0.0
        %2206 = vmatmul.mubr.f32.gmra.mrb[0].mxu0 %v1873
        %v2207 = vpop.f32.mrb[0].mxu0
        %v2208 = vadd.f32 %v2089, %v2207
        %v2209 = vpop.f32.mrb[0].mxu0
        %2210 = vmatprep.mubr.f32.mxu0 0.0
        %2211 = vmatmul.mubr.f32.gmra.mrb[0].mxu0 %v1875
        %v2212 = vpop.f32.mrb[0].mxu0
        %v2213 = vadd.f32 %v2089, %v2212
        %v2214 = vpop.f32.mrb[0].mxu0
        %2215 = vmatprep.mubr.f32.mxu0 0.0
        %2216 = vmatmul.mubr.f32.gmra.mrb[0].mxu0 %v1877
        %v2217 = vpop.f32.mrb[0].mxu0
        %v2218 = vadd.f32 %v2089, %v2217
        %v2219 = vpop.f32.mrb[0].mxu0
        %2220 = vmatprep.mubr.f32.mxu0 0.0
        %2221 = vmatmul.mubr.f32.gmra.mrb[0].mxu0 %v1879
        %v2222 = vpop.f32.mrb[0].mxu0
        %v2223 = vadd.f32 %v2089, %v2222
        %v2224 = vpop.f32.mrb[0].mxu0
        %2225 = vmatprep.mubr.f32.mxu0 0.0
        %2226 = vmatmul.mubr.f32.gmra.mrb[0].mxu0 %v1881
        %v2227 = vpop.f32.mrb[0].mxu0
        %v2228 = vadd.f32 %v2089, %v2227
        %v2229 = vpop.f32.mrb[0].mxu0
        %2230 = vmatprep.mubr.f32.mxu0 0.0
        %2231 = vmatmul.mubr.f32.gmra.mrb[0].mxu0 %v1883
        %v2232 = vpop.f32.mrb[0].mxu0
        %v2233 = vadd.f32 %v2089, %v2232
        %v2234 = vpop.f32.mrb[0].mxu0
        %2235 = vdwg.mxu0
        %2236 = vadd.xlane.f32.xlu0 %v2158
        %v2237 = vpop.xlane.xlu0 %2236
        %2238 = vadd.xlane.f32.xlu0 %v2163
        %v2239 = vpop.xlane.xlu0 %2238
        %2240 = vadd.xlane.f32.xlu0 %v2168
        %v2241 = vpop.xlane.xlu0 %2240
        %2242 = vadd.xlane.f32.xlu0 %v2173
        %v2243 = vpop.xlane.xlu0 %2242
        %2244 = vadd.xlane.f32.xlu0 %v2178
        %v2245 = vpop.xlane.xlu0 %2244
        %2246 = vadd.xlane.f32.xlu0 %v2183
        %v2247 = vpop.xlane.xlu0 %2246
        %2248 = vadd.xlane.f32.xlu0 %v2188
        %v2249 = vpop.xlane.xlu0 %2248
        %2250 = vadd.xlane.f32.xlu0 %v2193
        %v2251 = vpop.xlane.xlu0 %2250
        %2252 = vadd.xlane.f32.xlu0 %v2198
        %v2253 = vpop.xlane.xlu0 %2252
        %2254 = vadd.xlane.f32.xlu0 %v2203
        %v2255 = vpop.xlane.xlu0 %2254
        %2256 = vadd.xlane.f32.xlu0 %v2208
        %v2257 = vpop.xlane.xlu0 %2256
        %2258 = vadd.xlane.f32.xlu0 %v2213
        %v2259 = vpop.xlane.xlu0 %2258
        %2260 = vadd.xlane.f32.xlu0 %v2218
        %v2261 = vpop.xlane.xlu0 %2260
        %2262 = vadd.xlane.f32.xlu0 %v2223
        %v2263 = vpop.xlane.xlu0 %2262
        %2264 = vadd.xlane.f32.xlu0 %v2228
        %v2265 = vpop.xlane.xlu0 %2264
        %2266 = vadd.xlane.f32.xlu0 %v2233
        %v2267 = vpop.xlane.xlu0 %2266
        %v2268 = vrcp.pop 128.0
        %v2269 = vmul.f32 %v2237, %v2268
        %v2270 = vmul.f32 %v2239, %v2268
        %v2271 = vmul.f32 %v2241, %v2268
        %v2272 = vmul.f32 %v2243, %v2268
        %v2273 = vmul.f32 %v2245, %v2268
        %v2274 = vmul.f32 %v2247, %v2268
        %v2275 = vmul.f32 %v2249, %v2268
        %v2276 = vmul.f32 %v2251, %v2268
        %v2277 = vmul.f32 %v2253, %v2268
        %v2278 = vmul.f32 %v2255, %v2268
        %v2279 = vmul.f32 %v2257, %v2268
        %v2280 = vmul.f32 %v2259, %v2268
        %v2281 = vmul.f32 %v2261, %v2268
        %v2282 = vmul.f32 %v2263, %v2268
        %v2283 = vmul.f32 %v2265, %v2268
        %v2284 = vmul.f32 %v2267, %v2268
        %v2285 = vsub.f32 %v2158, %v2269
        %v2286 = vsub.f32 %v2163, %v2270
        %v2287 = vsub.f32 %v2168, %v2271
        %v2288 = vsub.f32 %v2173, %v2272
        %v2289 = vsub.f32 %v2178, %v2273
        %v2290 = vsub.f32 %v2183, %v2274
        %v2291 = vsub.f32 %v2188, %v2275
        %v2292 = vsub.f32 %v2193, %v2276
        %v2293 = vsub.f32 %v2198, %v2277
        %v2294 = vsub.f32 %v2203, %v2278
        %v2295 = vsub.f32 %v2208, %v2279
        %v2296 = vsub.f32 %v2213, %v2280
        %v2297 = vsub.f32 %v2218, %v2281
        %v2298 = vsub.f32 %v2223, %v2282
        %v2299 = vsub.f32 %v2228, %v2283
        %v2300 = vsub.f32 %v2233, %v2284
        %v2301 = vmul.f32 %v2285, %v2285
        %v2302 = vmul.f32 %v2286, %v2286
        %v2303 = vmul.f32 %v2287, %v2287
        %v2304 = vmul.f32 %v2288, %v2288
        %v2305 = vmul.f32 %v2289, %v2289
        %v2306 = vmul.f32 %v2290, %v2290
        %v2307 = vmul.f32 %v2291, %v2291
        %v2308 = vmul.f32 %v2292, %v2292
        %v2309 = vmul.f32 %v2293, %v2293
        %v2310 = vmul.f32 %v2294, %v2294
        %v2311 = vmul.f32 %v2295, %v2295
        %v2312 = vmul.f32 %v2296, %v2296
        %v2313 = vmul.f32 %v2297, %v2297
        %v2314 = vmul.f32 %v2298, %v2298
        %v2315 = vmul.f32 %v2299, %v2299
        %v2316 = vmul.f32 %v2300, %v2300
        %2317 = vadd.xlane.f32.xlu0 %v2301
        %v2318 = vpop.xlane.xlu0 %2317
        %2319 = vadd.xlane.f32.xlu0 %v2302
        %v2320 = vpop.xlane.xlu0 %2319
        %2321 = vadd.xlane.f32.xlu0 %v2303
        %v2322 = vpop.xlane.xlu0 %2321
        %2323 = vadd.xlane.f32.xlu0 %v2304
        %v2324 = vpop.xlane.xlu0 %2323
        %2325 = vadd.xlane.f32.xlu0 %v2305
        %v2326 = vpop.xlane.xlu0 %2325
        %2327 = vadd.xlane.f32.xlu0 %v2306
        %v2328 = vpop.xlane.xlu0 %2327
        %2329 = vadd.xlane.f32.xlu0 %v2307
        %v2330 = vpop.xlane.xlu0 %2329
        %2331 = vadd.xlane.f32.xlu0 %v2308
        %v2332 = vpop.xlane.xlu0 %2331
        %2333 = vadd.xlane.f32.xlu0 %v2309
        %v2334 = vpop.xlane.xlu0 %2333
        %2335 = vadd.xlane.f32.xlu0 %v2310
        %v2336 = vpop.xlane.xlu0 %2335
        %2337 = vadd.xlane.f32.xlu0 %v2311
        %v2338 = vpop.xlane.xlu0 %2337
        %2339 = vadd.xlane.f32.xlu0 %v2312
        %v2340 = vpop.xlane.xlu0 %2339
        %2341 = vadd.xlane.f32.xlu0 %v2313
        %v2342 = vpop.xlane.xlu0 %2341
        %2343 = vadd.xlane.f32.xlu0 %v2314
        %v2344 = vpop.xlane.xlu0 %2343
        %2345 = vadd.xlane.f32.xlu0 %v2315
        %v2346 = vpop.xlane.xlu0 %2345
        %2347 = vadd.xlane.f32.xlu0 %v2316
        %v2348 = vpop.xlane.xlu0 %2347
        %v2349 = vmul.f32 %v2318, %v2268
        %v2350 = vmul.f32 %v2320, %v2268
        %v2351 = vmul.f32 %v2322, %v2268
        %v2352 = vmul.f32 %v2324, %v2268
        %v2353 = vmul.f32 %v2326, %v2268
        %v2354 = vmul.f32 %v2328, %v2268
        %v2355 = vmul.f32 %v2330, %v2268
        %v2356 = vmul.f32 %v2332, %v2268
        %v2357 = vmul.f32 %v2334, %v2268
        %v2358 = vmul.f32 %v2336, %v2268
        %v2359 = vmul.f32 %v2338, %v2268
        %v2360 = vmul.f32 %v2340, %v2268
        %v2361 = vmul.f32 %v2342, %v2268
        %v2362 = vmul.f32 %v2344, %v2268
        %v2363 = vmul.f32 %v2346, %v2268
        %v2364 = vmul.f32 %v2348, %v2268
        %v2365 = vadd.f32 %v2349, 1e-05
        %v2366 = vadd.f32 %v2350, 1e-05
        %v2367 = vadd.f32 %v2351, 1e-05
        %v2368 = vadd.f32 %v2352, 1e-05
        %v2369 = vadd.f32 %v2353, 1e-05
        %v2370 = vadd.f32 %v2354, 1e-05
        %v2371 = vadd.f32 %v2355, 1e-05
        %v2372 = vadd.f32 %v2356, 1e-05
        %v2373 = vadd.f32 %v2357, 1e-05
        %v2374 = vadd.f32 %v2358, 1e-05
        %v2375 = vadd.f32 %v2359, 1e-05
        %v2376 = vadd.f32 %v2360, 1e-05
        %v2377 = vadd.f32 %v2361, 1e-05
        %v2378 = vadd.f32 %v2362, 1e-05
        %v2379 = vadd.f32 %v2363, 1e-05
        %v2380 = vadd.f32 %v2364, 1e-05
        %v2381 = vrsqrt.pop %v2365
        %v2382 = vrsqrt.pop %v2366
        %v2383 = vrsqrt.pop %v2367
        %v2384 = vrsqrt.pop %v2368
        %v2385 = vrsqrt.pop %v2369
        %v2386 = vrsqrt.pop %v2370
        %v2387 = vrsqrt.pop %v2371
        %v2388 = vrsqrt.pop %v2372
        %v2389 = vrsqrt.pop %v2373
        %v2390 = vrsqrt.pop %v2374
        %v2391 = vrsqrt.pop %v2375
        %v2392 = vrsqrt.pop %v2376
        %v2393 = vrsqrt.pop %v2377
        %v2394 = vrsqrt.pop %v2378
        %v2395 = vrsqrt.pop %v2379
        %v2396 = vrsqrt.pop %v2380
        %v2397 = vmul.f32 %v2285, %v2381
        %v2398 = vmul.f32 %v2286, %v2382
        %v2399 = vmul.f32 %v2287, %v2383
        %v2400 = vmul.f32 %v2288, %v2384
        %v2401 = vmul.f32 %v2289, %v2385
        %v2402 = vmul.f32 %v2290, %v2386
        %v2403 = vmul.f32 %v2291, %v2387
        %v2404 = vmul.f32 %v2292, %v2388
        %v2405 = vmul.f32 %v2293, %v2389
        %v2406 = vmul.f32 %v2294, %v2390
        %v2407 = vmul.f32 %v2295, %v2391
        %v2408 = vmul.f32 %v2296, %v2392
        %v2409 = vmul.f32 %v2297, %v2393
        %v2410 = vmul.f32 %v2298, %v2394
        %v2411 = vmul.f32 %v2299, %v2395
        %v2412 = vmul.f32 %v2300, %v2396
        %v2413 = vld [vmem:[%s11] sm:$0x1]
        %v2415 = vlaneseq
        %v2416 = vshrl.u32 %v2415, 7
        %v2417 = vsub.s32 0, %v2416
        %v2418 = vrot.slane %v2413, %v2417
        %v2420 = vmul.f32 %v2397, %v2418
        %v2421 = vmul.f32 %v2398, %v2418
        %v2422 = vmul.f32 %v2399, %v2418
        %v2423 = vmul.f32 %v2400, %v2418
        %v2424 = vmul.f32 %v2401, %v2418
        %v2425 = vmul.f32 %v2402, %v2418
        %v2426 = vmul.f32 %v2403, %v2418
        %v2427 = vmul.f32 %v2404, %v2418
        %v2428 = vmul.f32 %v2405, %v2418
        %v2429 = vmul.f32 %v2406, %v2418
        %v2430 = vmul.f32 %v2407, %v2418
        %v2431 = vmul.f32 %v2408, %v2418
        %v2432 = vmul.f32 %v2409, %v2418
        %v2433 = vmul.f32 %v2410, %v2418
        %v2434 = vmul.f32 %v2411, %v2418
        %v2435 = vmul.f32 %v2412, %v2418
        %v2436 = vld [vmem:[%s12] sm:$0x1]
        %v2438 = vlaneseq
        %v2439 = vshrl.u32 %v2438, 7
        %v2440 = vsub.s32 0, %v2439
        %v2441 = vrot.slane %v2436, %v2440
        %v2443 = vadd.f32 %v2420, %v2441
        %v2444 = vadd.f32 %v2421, %v2441
        %v2445 = vadd.f32 %v2422, %v2441
        %v2446 = vadd.f32 %v2423, %v2441
        %v2447 = vadd.f32 %v2424, %v2441
        %v2448 = vadd.f32 %v2425, %v2441
        %v2449 = vadd.f32 %v2426, %v2441
        %v2450 = vadd.f32 %v2427, %v2441
        %v2451 = vadd.f32 %v2428, %v2441
        %v2452 = vadd.f32 %v2429, %v2441
        %v2453 = vadd.f32 %v2430, %v2441
        %v2454 = vadd.f32 %v2431, %v2441
        %v2455 = vadd.f32 %v2432, %v2441
        %v2456 = vadd.f32 %v2433, %v2441
        %v2457 = vadd.f32 %v2434, %v2441
        %v2458 = vadd.f32 %v2435, %v2441
        %v2459 = vld [vmem:[#allocation8] sm:$0xff]
        %v2460 = vld [vmem:[#allocation8 + $0x8] sm:$0xff]
        %v2461 = vld [vmem:[#allocation8 + $0x10] sm:$0xff]
        %v2462 = vld [vmem:[#allocation8 + $0x18] sm:$0xff]
        %v2463 = vld [vmem:[#allocation8 + $0x20] sm:$0xff]
        %v2464 = vld [vmem:[#allocation8 + $0x28] sm:$0xff]
        %v2465 = vld [vmem:[#allocation8 + $0x30] sm:$0xff]
        %v2466 = vld [vmem:[#allocation8 + $0x38] sm:$0xff]
        %v2467 = vld [vmem:[#allocation8 + $0x40] sm:$0xff]
        %v2468 = vld [vmem:[#allocation8 + $0x48] sm:$0xff]
        %v2469 = vld [vmem:[#allocation8 + $0x50] sm:$0xff]
        %v2470 = vld [vmem:[#allocation8 + $0x58] sm:$0xff]
        %v2471 = vld [vmem:[#allocation8 + $0x60] sm:$0xff]
        %v2472 = vld [vmem:[#allocation8 + $0x68] sm:$0xff]
        %v2473 = vld [vmem:[#allocation8 + $0x70] sm:$0xff]
        %v2474 = vld [vmem:[#allocation8 + $0x78] sm:$0xff]
        %2475 = vmatprep.subr.mxu0 0.0
        %2476 = vmatpush1.msra.mxu0 %v2459
        %2477 = vmatprep.subr.mxu0 0.0
        %2478 = vmatpush1.msra.mxu0 %v2460
        %2479 = vmatprep.subr.mxu0 0.0
        %2480 = vmatpush1.msra.mxu0 %v2461
        %2481 = vmatprep.subr.mxu0 0.0
        %2482 = vmatpush1.msra.mxu0 %v2462
        %2483 = vmatprep.subr.mxu0 0.0
        %2484 = vmatpush1.msra.mxu0 %v2463
        %2485 = vmatprep.subr.mxu0 0.0
        %2486 = vmatpush1.msra.mxu0 %v2464
        %2487 = vmatprep.subr.mxu0 0.0
        %2488 = vmatpush1.msra.mxu0 %v2465
        %2489 = vmatprep.subr.mxu0 0.0
        %2490 = vmatpush1.msra.mxu0 %v2466
        %2491 = vmatprep.subr.mxu0 0.0
        %2492 = vmatpush1.msra.mxu0 %v2467
        %2493 = vmatprep.subr.mxu0 0.0
        %2494 = vmatpush1.msra.mxu0 %v2468
        %2495 = vmatprep.subr.mxu0 0.0
        %2496 = vmatpush1.msra.mxu0 %v2469
        %2497 = vmatprep.subr.mxu0 0.0
        %2498 = vmatpush1.msra.mxu0 %v2470
        %2499 = vmatprep.subr.mxu0 0.0
        %2500 = vmatpush1.msra.mxu0 %v2471
        %2501 = vmatprep.subr.mxu0 0.0
        %2502 = vmatpush1.msra.mxu0 %v2472
        %2503 = vmatprep.subr.mxu0 0.0
        %2504 = vmatpush1.msra.mxu0 %v2473
        %2505 = vmatprep.subr.mxu0 0.0
        %2506 = vmatpush1.msra.mxu0 %v2474
        %2507 = vmatprep.subr.mxu0 0.0
        %2508 = vmatpush1.msra.mxu0 0.0
        %2509 = vmatprep.subr.mxu0 0.0
        %2510 = vmatpush1.msra.mxu0 0.0
        %2511 = vmatprep.subr.mxu0 0.0
        %2512 = vmatpush1.msra.mxu0 0.0
        %2513 = vmatprep.subr.mxu0 0.0
        %2514 = vmatpush1.msra.mxu0 0.0
        %2515 = vmatprep.subr.mxu0 0.0
        %2516 = vmatpush1.msra.mxu0 0.0
        %2517 = vmatprep.subr.mxu0 0.0
        %2518 = vmatpush1.msra.mxu0 0.0
        %2519 = vmatprep.subr.mxu0 0.0
        %2520 = vmatpush1.msra.mxu0 0.0
        %2521 = vmatprep.subr.mxu0 0.0
        %2522 = vmatpush1.msra.mxu0 0.0
        %2523 = vmatprep.subr.mxu0 0.0
        %2524 = vmatpush1.msra.mxu0 0.0
        %2525 = vmatprep.subr.mxu0 0.0
        %2526 = vmatpush1.msra.mxu0 0.0
        %2527 = vmatprep.subr.mxu0 0.0
        %2528 = vmatpush1.msra.mxu0 0.0
        %2529 = vmatprep.subr.mxu0 0.0
        %2530 = vmatpush1.msra.mxu0 0.0
        %2531 = vmatprep.subr.mxu0 0.0
        %2532 = vmatpush1.msra.mxu0 0.0
        %2533 = vmatprep.subr.mxu0 0.0
        %2534 = vmatpush1.msra.mxu0 0.0
        %2535 = vmatprep.subr.mxu0 0.0
        %2536 = vmatpush1.msra.mxu0 0.0
        %2537 = vmatprep.subr.mxu0 0.0
        %2538 = vmatpush1.msra.mxu0 0.0
        %2539 = vmatprep.mubr.f32.mxu0 0.0
        %2540 = vmatmul.mubr.f32.gmra.mrb[0].mxu0 %v669
        %v2541 = vpop.f32.mrb[0].mxu0
        %v2542 = vadd.f32 0.0, %v2541
        %v2543 = vpop.f32.mrb[0].mxu0
        %2544 = vmatprep.mubr.f32.mxu0 0.0
        %2545 = vmatmul.mubr.f32.gmra.mrb[0].mxu0 %v670
        %v2546 = vpop.f32.mrb[0].mxu0
        %v2547 = vadd.f32 0.0, %v2546
        %v2548 = vpop.f32.mrb[0].mxu0
        %2549 = vmatprep.mubr.f32.mxu0 0.0
        %2550 = vmatmul.mubr.f32.gmra.mrb[0].mxu0 %v671
        %v2551 = vpop.f32.mrb[0].mxu0
        %v2552 = vadd.f32 0.0, %v2551
        %v2553 = vpop.f32.mrb[0].mxu0
        %2554 = vmatprep.mubr.f32.mxu0 0.0
        %2555 = vmatmul.mubr.f32.gmra.mrb[0].mxu0 %v672
        %v2556 = vpop.f32.mrb[0].mxu0
        %v2557 = vadd.f32 0.0, %v2556
        %v2558 = vpop.f32.mrb[0].mxu0
        %2559 = vmatprep.mubr.f32.mxu0 0.0
        %2560 = vmatmul.mubr.f32.gmra.mrb[0].mxu0 %v673
        %v2561 = vpop.f32.mrb[0].mxu0
        %v2562 = vadd.f32 0.0, %v2561
        %v2563 = vpop.f32.mrb[0].mxu0
        %2564 = vmatprep.mubr.f32.mxu0 0.0
        %2565 = vmatmul.mubr.f32.gmra.mrb[0].mxu0 %v674
        %v2566 = vpop.f32.mrb[0].mxu0
        %v2567 = vadd.f32 0.0, %v2566
        %v2568 = vpop.f32.mrb[0].mxu0
        %2569 = vmatprep.mubr.f32.mxu0 0.0
        %2570 = vmatmul.mubr.f32.gmra.mrb[0].mxu0 %v675
        %v2571 = vpop.f32.mrb[0].mxu0
        %v2572 = vadd.f32 0.0, %v2571
        %v2573 = vpop.f32.mrb[0].mxu0
        %2574 = vmatprep.mubr.f32.mxu0 0.0
        %2575 = vmatmul.mubr.f32.gmra.mrb[0].mxu0 %v676
        %v2576 = vpop.f32.mrb[0].mxu0
        %v2577 = vadd.f32 0.0, %v2576
        %v2578 = vpop.f32.mrb[0].mxu0
        %2579 = vmatprep.mubr.f32.mxu0 0.0
        %2580 = vmatmul.mubr.f32.gmra.mrb[0].mxu0 %v677
        %v2581 = vpop.f32.mrb[0].mxu0
        %v2582 = vadd.f32 0.0, %v2581
        %v2583 = vpop.f32.mrb[0].mxu0
        %2584 = vmatprep.mubr.f32.mxu0 0.0
        %2585 = vmatmul.mubr.f32.gmra.mrb[0].mxu0 %v678
        %v2586 = vpop.f32.mrb[0].mxu0
        %v2587 = vadd.f32 0.0, %v2586
        %v2588 = vpop.f32.mrb[0].mxu0
        %2589 = vmatprep.mubr.f32.mxu0 0.0
        %2590 = vmatmul.mubr.f32.gmra.mrb[0].mxu0 %v679
        %v2591 = vpop.f32.mrb[0].mxu0
        %v2592 = vadd.f32 0.0, %v2591
        %v2593 = vpop.f32.mrb[0].mxu0
        %2594 = vmatprep.mubr.f32.mxu0 0.0
        %2595 = vmatmul.mubr.f32.gmra.mrb[0].mxu0 %v680
        %v2596 = vpop.f32.mrb[0].mxu0
        %v2597 = vadd.f32 0.0, %v2596
        %v2598 = vpop.f32.mrb[0].mxu0
        %2599 = vmatprep.mubr.f32.mxu0 0.0
        %2600 = vmatmul.mubr.f32.gmra.mrb[0].mxu0 %v681
        %v2601 = vpop.f32.mrb[0].mxu0
        %v2602 = vadd.f32 0.0, %v2601
        %v2603 = vpop.f32.mrb[0].mxu0
        %2604 = vmatprep.mubr.f32.mxu0 0.0
        %2605 = vmatmul.mubr.f32.gmra.mrb[0].mxu0 %v682
        %v2606 = vpop.f32.mrb[0].mxu0
        %v2607 = vadd.f32 0.0, %v2606
        %v2608 = vpop.f32.mrb[0].mxu0
        %2609 = vmatprep.mubr.f32.mxu0 0.0
        %2610 = vmatmul.mubr.f32.gmra.mrb[0].mxu0 %v683
        %v2611 = vpop.f32.mrb[0].mxu0
        %v2612 = vadd.f32 0.0, %v2611
        %v2613 = vpop.f32.mrb[0].mxu0
        %2614 = vmatprep.mubr.f32.mxu0 0.0
        %2615 = vmatmul.mubr.f32.gmra.mrb[0].mxu0 %v684
        %v2616 = vpop.f32.mrb[0].mxu0
        %v2617 = vadd.f32 0.0, %v2616
        %v2618 = vpop.f32.mrb[0].mxu0
        %2619 = vmatprep.mubr.f32.mxu0 0.0
        %2620 = vmatmul.mubr.f32.gmra.mrb[0].mxu0 %v685
        %v2621 = vpop.f32.mrb[0].mxu0
        %v2622 = vadd.f32 0.0, %v2621
        %v2623 = vpop.f32.mrb[0].mxu0
        %2624 = vmatprep.mubr.f32.mxu0 0.0
        %2625 = vmatmul.mubr.f32.gmra.mrb[0].mxu0 %v686
        %v2626 = vpop.f32.mrb[0].mxu0
        %v2627 = vadd.f32 0.0, %v2626
        %v2628 = vpop.f32.mrb[0].mxu0
        %2629 = vmatprep.mubr.f32.mxu0 0.0
        %2630 = vmatmul.mubr.f32.gmra.mrb[0].mxu0 %v687
        %v2631 = vpop.f32.mrb[0].mxu0
        %v2632 = vadd.f32 0.0, %v2631
        %v2633 = vpop.f32.mrb[0].mxu0
        %2634 = vmatprep.mubr.f32.mxu0 0.0
        %2635 = vmatmul.mubr.f32.gmra.mrb[0].mxu0 %v688
        %v2636 = vpop.f32.mrb[0].mxu0
        %v2637 = vadd.f32 0.0, %v2636
        %v2638 = vpop.f32.mrb[0].mxu0
        %2639 = vmatprep.mubr.f32.mxu0 0.0
        %2640 = vmatmul.mubr.f32.gmra.mrb[0].mxu0 %v689
        %v2641 = vpop.f32.mrb[0].mxu0
        %v2642 = vadd.f32 0.0, %v2641
        %v2643 = vpop.f32.mrb[0].mxu0
        %2644 = vmatprep.mubr.f32.mxu0 0.0
        %2645 = vmatmul.mubr.f32.gmra.mrb[0].mxu0 %v690
        %v2646 = vpop.f32.mrb[0].mxu0
        %v2647 = vadd.f32 0.0, %v2646
        %v2648 = vpop.f32.mrb[0].mxu0
        %2649 = vmatprep.mubr.f32.mxu0 0.0
        %2650 = vmatmul.mubr.f32.gmra.mrb[0].mxu0 %v691
        %v2651 = vpop.f32.mrb[0].mxu0
        %v2652 = vadd.f32 0.0, %v2651
        %v2653 = vpop.f32.mrb[0].mxu0
        %2654 = vmatprep.mubr.f32.mxu0 0.0
        %2655 = vmatmul.mubr.f32.gmra.mrb[0].mxu0 %v692
        %v2656 = vpop.f32.mrb[0].mxu0
        %v2657 = vadd.f32 0.0, %v2656
        %v2658 = vpop.f32.mrb[0].mxu0
        %2659 = vmatprep.mubr.f32.mxu0 0.0
        %2660 = vmatmul.mubr.f32.gmra.mrb[0].mxu0 %v693
        %v2661 = vpop.f32.mrb[0].mxu0
        %v2662 = vadd.f32 0.0, %v2661
        %v2663 = vpop.f32.mrb[0].mxu0
        %2664 = vmatprep.mubr.f32.mxu0 0.0
        %2665 = vmatmul.mubr.f32.gmra.mrb[0].mxu0 %v694
        %v2666 = vpop.f32.mrb[0].mxu0
        %v2667 = vadd.f32 0.0, %v2666
        %v2668 = vpop.f32.mrb[0].mxu0
        %2669 = vmatprep.mubr.f32.mxu0 0.0
        %2670 = vmatmul.mubr.f32.gmra.mrb[0].mxu0 %v695
        %v2671 = vpop.f32.mrb[0].mxu0
        %v2672 = vadd.f32 0.0, %v2671
        %v2673 = vpop.f32.mrb[0].mxu0
        %2674 = vmatprep.mubr.f32.mxu0 0.0
        %2675 = vmatmul.mubr.f32.gmra.mrb[0].mxu0 %v696
        %v2676 = vpop.f32.mrb[0].mxu0
        %v2677 = vadd.f32 0.0, %v2676
        %v2678 = vpop.f32.mrb[0].mxu0
        %2679 = vmatprep.mubr.f32.mxu0 0.0
        %2680 = vmatmul.mubr.f32.gmra.mrb[0].mxu0 %v697
        %v2681 = vpop.f32.mrb[0].mxu0
        %v2682 = vadd.f32 0.0, %v2681
        %v2683 = vpop.f32.mrb[0].mxu0
        %2684 = vmatprep.mubr.f32.mxu0 0.0
        %2685 = vmatmul.mubr.f32.gmra.mrb[0].mxu0 %v698
        %v2686 = vpop.f32.mrb[0].mxu0
        %v2687 = vadd.f32 0.0, %v2686
        %v2688 = vpop.f32.mrb[0].mxu0
        %2689 = vmatprep.mubr.f32.mxu0 0.0
        %2690 = vmatmul.mubr.f32.gmra.mrb[0].mxu0 %v699
        %v2691 = vpop.f32.mrb[0].mxu0
        %v2692 = vadd.f32 0.0, %v2691
        %v2693 = vpop.f32.mrb[0].mxu0
        %2694 = vmatprep.mubr.f32.mxu0 0.0
        %2695 = vmatmul.mubr.f32.gmra.mrb[0].mxu0 %v700
        %v2696 = vpop.f32.mrb[0].mxu0
        %v2697 = vadd.f32 0.0, %v2696
        %v2698 = vpop.f32.mrb[0].mxu0
        %2699 = vmatprep.mubr.f32.mxu0 0.0
        %2700 = vmatmul.mubr.f32.gmra.mrb[0].mxu0 %v701
        %v2701 = vpop.f32.mrb[0].mxu0
        %v2702 = vadd.f32 0.0, %v2701
        %v2703 = vpop.f32.mrb[0].mxu0
        %2704 = vmatprep.mubr.f32.mxu0 0.0
        %2705 = vmatmul.mubr.f32.gmra.mrb[0].mxu0 %v702
        %v2706 = vpop.f32.mrb[0].mxu0
        %v2707 = vadd.f32 0.0, %v2706
        %v2708 = vpop.f32.mrb[0].mxu0
        %2709 = vmatprep.mubr.f32.mxu0 0.0
        %2710 = vmatmul.mubr.f32.gmra.mrb[0].mxu0 %v703
        %v2711 = vpop.f32.mrb[0].mxu0
        %v2712 = vadd.f32 0.0, %v2711
        %v2713 = vpop.f32.mrb[0].mxu0
        %2714 = vmatprep.mubr.f32.mxu0 0.0
        %2715 = vmatmul.mubr.f32.gmra.mrb[0].mxu0 %v704
        %v2716 = vpop.f32.mrb[0].mxu0
        %v2717 = vadd.f32 0.0, %v2716
        %v2718 = vpop.f32.mrb[0].mxu0
        %2719 = vmatprep.mubr.f32.mxu0 0.0
        %2720 = vmatmul.mubr.f32.gmra.mrb[0].mxu0 %v705
        %v2721 = vpop.f32.mrb[0].mxu0
        %v2722 = vadd.f32 0.0, %v2721
        %v2723 = vpop.f32.mrb[0].mxu0
        %2724 = vmatprep.mubr.f32.mxu0 0.0
        %2725 = vmatmul.mubr.f32.gmra.mrb[0].mxu0 %v706
        %v2726 = vpop.f32.mrb[0].mxu0
        %v2727 = vadd.f32 0.0, %v2726
        %v2728 = vpop.f32.mrb[0].mxu0
        %2729 = vmatprep.mubr.f32.mxu0 0.0
        %2730 = vmatmul.mubr.f32.gmra.mrb[0].mxu0 %v707
        %v2731 = vpop.f32.mrb[0].mxu0
        %v2732 = vadd.f32 0.0, %v2731
        %v2733 = vpop.f32.mrb[0].mxu0
        %2734 = vmatprep.mubr.f32.mxu0 0.0
        %2735 = vmatmul.mubr.f32.gmra.mrb[0].mxu0 %v708
        %v2736 = vpop.f32.mrb[0].mxu0
        %v2737 = vadd.f32 0.0, %v2736
        %v2738 = vpop.f32.mrb[0].mxu0
        %2739 = vmatprep.mubr.f32.mxu0 0.0
        %2740 = vmatmul.mubr.f32.gmra.mrb[0].mxu0 %v709
        %v2741 = vpop.f32.mrb[0].mxu0
        %v2742 = vadd.f32 0.0, %v2741
        %v2743 = vpop.f32.mrb[0].mxu0
        %2744 = vmatprep.mubr.f32.mxu0 0.0
        %2745 = vmatmul.mubr.f32.gmra.mrb[0].mxu0 %v710
        %v2746 = vpop.f32.mrb[0].mxu0
        %v2747 = vadd.f32 0.0, %v2746
        %v2748 = vpop.f32.mrb[0].mxu0
        %2749 = vmatprep.mubr.f32.mxu0 0.0
        %2750 = vmatmul.mubr.f32.gmra.mrb[0].mxu0 %v711
        %v2751 = vpop.f32.mrb[0].mxu0
        %v2752 = vadd.f32 0.0, %v2751
        %v2753 = vpop.f32.mrb[0].mxu0
        %2754 = vmatprep.mubr.f32.mxu0 0.0
        %2755 = vmatmul.mubr.f32.gmra.mrb[0].mxu0 %v712
        %v2756 = vpop.f32.mrb[0].mxu0
        %v2757 = vadd.f32 0.0, %v2756
        %v2758 = vpop.f32.mrb[0].mxu0
        %2759 = vmatprep.mubr.f32.mxu0 0.0
        %2760 = vmatmul.mubr.f32.gmra.mrb[0].mxu0 %v713
        %v2761 = vpop.f32.mrb[0].mxu0
        %v2762 = vadd.f32 0.0, %v2761
        %v2763 = vpop.f32.mrb[0].mxu0
        %2764 = vmatprep.mubr.f32.mxu0 0.0
        %2765 = vmatmul.mubr.f32.gmra.mrb[0].mxu0 %v714
        %v2766 = vpop.f32.mrb[0].mxu0
        %v2767 = vadd.f32 0.0, %v2766
        %v2768 = vpop.f32.mrb[0].mxu0
        %2769 = vmatprep.mubr.f32.mxu0 0.0
        %2770 = vmatmul.mubr.f32.gmra.mrb[0].mxu0 %v715
        %v2771 = vpop.f32.mrb[0].mxu0
        %v2772 = vadd.f32 0.0, %v2771
        %v2773 = vpop.f32.mrb[0].mxu0
        %2774 = vmatprep.mubr.f32.mxu0 0.0
        %2775 = vmatmul.mubr.f32.gmra.mrb[0].mxu0 %v716
        %v2776 = vpop.f32.mrb[0].mxu0
        %v2777 = vadd.f32 0.0, %v2776
        %v2778 = vpop.f32.mrb[0].mxu0
        %2779 = vdwg.mxu0
        %v2780 = vmul.f32 %v2443, %v2542
        %v2781 = vmul.f32 %v2444, %v2547
        %v2782 = vmul.f32 %v2445, %v2552
        %v2783 = vmul.f32 %v2446, %v2557
        %v2784 = vmul.f32 %v2447, %v2562
        %v2785 = vmul.f32 %v2448, %v2567
        %v2786 = vmul.f32 %v2449, %v2572
        %v2787 = vmul.f32 %v2450, %v2577
        %v2788 = vmul.f32 %v2451, %v2582
        %v2789 = vmul.f32 %v2452, %v2587
        %v2790 = vmul.f32 %v2453, %v2592
        %v2791 = vmul.f32 %v2454, %v2597
        %v2792 = vmul.f32 %v2455, %v2602
        %v2793 = vmul.f32 %v2456, %v2607
        %v2794 = vmul.f32 %v2457, %v2612
        %v2795 = vmul.f32 %v2458, %v2617
        %v2796 = vmul.f32 %v2443, %v2622
        %v2797 = vmul.f32 %v2444, %v2627
        %v2798 = vmul.f32 %v2445, %v2632
        %v2799 = vmul.f32 %v2446, %v2637
        %v2800 = vmul.f32 %v2447, %v2642
        %v2801 = vmul.f32 %v2448, %v2647
        %v2802 = vmul.f32 %v2449, %v2652
        %v2803 = vmul.f32 %v2450, %v2657
        %v2804 = vmul.f32 %v2451, %v2662
        %v2805 = vmul.f32 %v2452, %v2667
        %v2806 = vmul.f32 %v2453, %v2672
        %v2807 = vmul.f32 %v2454, %v2677
        %v2808 = vmul.f32 %v2455, %v2682
        %v2809 = vmul.f32 %v2456, %v2687
        %v2810 = vmul.f32 %v2457, %v2692
        %v2811 = vmul.f32 %v2458, %v2697
        %v2812 = vmul.f32 %v2443, %v2702
        %v2813 = vmul.f32 %v2444, %v2707
        %v2814 = vmul.f32 %v2445, %v2712
        %v2815 = vmul.f32 %v2446, %v2717
        %v2816 = vmul.f32 %v2447, %v2722
        %v2817 = vmul.f32 %v2448, %v2727
        %v2818 = vmul.f32 %v2449, %v2732
        %v2819 = vmul.f32 %v2450, %v2737
        %v2820 = vmul.f32 %v2451, %v2742
        %v2821 = vmul.f32 %v2452, %v2747
        %v2822 = vmul.f32 %v2453, %v2752
        %v2823 = vmul.f32 %v2454, %v2757
        %v2824 = vmul.f32 %v2455, %v2762
        %v2825 = vmul.f32 %v2456, %v2767
        %v2826 = vmul.f32 %v2457, %v2772
        %v2827 = vmul.f32 %v2458, %v2777
        %2828 = vst [vmem:[%s648] sm:$0xff] %v2780
        %2829 = vst [vmem:[%s648 + $0x8] sm:$0xff] %v2781
        %2830 = vst [vmem:[%s648 + $0x10] sm:$0xff] %v2782
        %2831 = vst [vmem:[%s648 + $0x18] sm:$0xff] %v2783
        %2832 = vst [vmem:[%s648 + $0x20] sm:$0xff] %v2784
        %2833 = vst [vmem:[%s648 + $0x28] sm:$0xff] %v2785
        %2834 = vst [vmem:[%s648 + $0x30] sm:$0xff] %v2786
        %2835 = vst [vmem:[%s648 + $0x38] sm:$0xff] %v2787
        %2836 = vst [vmem:[%s648 + $0x40] sm:$0xff] %v2788
        %2837 = vst [vmem:[%s648 + $0x48] sm:$0xff] %v2789
        %2838 = vst [vmem:[%s648 + $0x50] sm:$0xff] %v2790
        %2839 = vst [vmem:[%s648 + $0x58] sm:$0xff] %v2791
        %2840 = vst [vmem:[%s648 + $0x60] sm:$0xff] %v2792
        %2841 = vst [vmem:[%s648 + $0x68] sm:$0xff] %v2793
        %2842 = vst [vmem:[%s648 + $0x70] sm:$0xff] %v2794
        %2843 = vst [vmem:[%s648 + $0x78] sm:$0xff] %v2795
        %2844 = vst [vmem:[%s648 + $0x80] sm:$0xff] %v2796
        %2845 = vst [vmem:[%s648 + $0x88] sm:$0xff] %v2797
        %2846 = vst [vmem:[%s648 + $0x90] sm:$0xff] %v2798
        %2847 = vst [vmem:[%s648 + $0x98] sm:$0xff] %v2799
        %2848 = vst [vmem:[%s648 + $0xa0] sm:$0xff] %v2800
        %2849 = vst [vmem:[%s648 + $0xa8] sm:$0xff] %v2801
        %2850 = vst [vmem:[%s648 + $0xb0] sm:$0xff] %v2802
        %2851 = vst [vmem:[%s648 + $0xb8] sm:$0xff] %v2803
        %2852 = vst [vmem:[%s648 + $0xc0] sm:$0xff] %v2804
        %2853 = vst [vmem:[%s648 + $0xc8] sm:$0xff] %v2805
        %2854 = vst [vmem:[%s648 + $0xd0] sm:$0xff] %v2806
        %2855 = vst [vmem:[%s648 + $0xd8] sm:$0xff] %v2807
        %2856 = vst [vmem:[%s648 + $0xe0] sm:$0xff] %v2808
        %2857 = vst [vmem:[%s648 + $0xe8] sm:$0xff] %v2809
        %2858 = vst [vmem:[%s648 + $0xf0] sm:$0xff] %v2810
        %2859 = vst [vmem:[%s648 + $0xf8] sm:$0xff] %v2811
        %2860 = vst [vmem:[%s648 + $0x100] sm:$0xff] %v2812
        %2861 = vst [vmem:[%s648 + $0x108] sm:$0xff] %v2813
        %2862 = vst [vmem:[%s648 + $0x110] sm:$0xff] %v2814
        %2863 = vst [vmem:[%s648 + $0x118] sm:$0xff] %v2815
        %2864 = vst [vmem:[%s648 + $0x120] sm:$0xff] %v2816
        %2865 = vst [vmem:[%s648 + $0x128] sm:$0xff] %v2817
        %2866 = vst [vmem:[%s648 + $0x130] sm:$0xff] %v2818
        %2867 = vst [vmem:[%s648 + $0x138] sm:$0xff] %v2819
        %2868 = vst [vmem:[%s648 + $0x140] sm:$0xff] %v2820
        %2869 = vst [vmem:[%s648 + $0x148] sm:$0xff] %v2821
        %2870 = vst [vmem:[%s648 + $0x150] sm:$0xff] %v2822
        %2871 = vst [vmem:[%s648 + $0x158] sm:$0xff] %v2823
        %2872 = vst [vmem:[%s648 + $0x160] sm:$0xff] %v2824
        %2873 = vst [vmem:[%s648 + $0x168] sm:$0xff] %v2825
        %2874 = vst [vmem:[%s648 + $0x170] sm:$0xff] %v2826
        %2875 = vst [vmem:[%s648 + $0x178] sm:$0xff] %v2827
        %s2876 = sand.u32 %s332, 1
        %s2877 = scalar_lea.sflag [#allocation4], %s2876
        %s2878 = sand.u32 %s332, 1
        %s2879 = smul.addr %s2878, 128
        %s2880 = scalar_lea.vmem [#allocation16], %s2879
        %s2881 = sand.u32 %s358, 1
        %s2882 = scalar_lea.sflag [#allocation18], %s2881
        %s2883 = sand.u32 %s358, 1
        %s2884 = smul.addr %s2883, 384
        %s2885 = scalar_lea.vmem [#allocation17], %s2884
        // Predicated region
        $region105: #{_lambda_.1} parent=71 // pred_check
          %p2886 = pneg %p342
        $region106: #{_lambda_.1} parent=71 // pred_check_branch
          %2888 = sbr.rel (%p2886) target = $region108
        $region107: #{_lambda_.1} parent=71 // pred_region
          %s2889 = smul.u32 16, %s41
          %s2891 = ssub.s32 2048, 2048
          %2892 = vsyncadd %s2877, %s2891
          %s2893 = smul.addr %s2889, 128
          %s2894 = scalar_lea.hbm %s13, %s2893
          %s2895 = sshll.u32 %s2880, 4
          %s2896 = int_to_ptr.vmem [resolvable:$true] %s2895
          %2901 = dma.vmem_to_hbm [thread:$0]  %s2896, 2048, %s2894, %s2877, 128, 128, 8
        $region108: #{_lambda_.1} parent=71 // pred_fallthru
          _
        // Predicated region
        $region109: #{_lambda_.1} parent=71 // pred_check
          %p2902 = pneg %p368
        $region110: #{_lambda_.1} parent=71 // pred_check_branch
          %2904 = sbr.rel (%p2902) target = $region112
        $region111: #{_lambda_.1} parent=71 // pred_region
          #allocation22 [shape = 'u32[6]{0}', space=smem, size = 0x18, scoped, tag = 'DMA stride descriptor']
          %s2905 = smul.u32 16, %s41
          %s2907 = ssub.s32 6144, 6144
          %2908 = vsyncadd %s2882, %s2907
          %s2909 = smul.addr %s2905, 128
          %s2910 = scalar_lea.hbm %s14, %s2909
          %s2912 = sshll.u32 1, 14
          %s2913 = sxor.u32 4294967295, %s2912
          %s2916 = sshll.u32 7, 18
          %s2917 = sxor.u32 4294967295, %s2916
          %s2918 = sand.u32 0, %s2917
          %s2920 = sor.u32 %s2918, 0
          %s2922 = sshll.u32 3, 24
          %s2923 = sxor.u32 4294967295, %s2922
          %s2924 = sand.u32 %s2920, %s2923
          %s2926 = sor.u32 %s2924, 0
          %s2927 = sshll.u32 %s2885, 4
          %s2928 = int_to_ptr.vmem [resolvable:$true] %s2927
          %2934 = sst [smem:[#allocation22]] 2048
          %s2935 = scalar_lea.smem [#allocation22], 1
          %2936 = sst [smem:[%s2935]] 4096
          %s2937 = scalar_lea.smem [#allocation22], 2
          %2938 = sst [smem:[%s2937]] 16
          %s2939 = scalar_lea.smem [#allocation22], 3
          %2940 = sst [smem:[%s2939]] 128
          %s2941 = scalar_lea.smem [#allocation22], 4
          %2942 = sst [smem:[%s2941]] 128
          %s2943 = scalar_lea.smem [#allocation22], 5
          %2944 = sst [smem:[%s2943]] 8
          %2946 = dma.general %s2928, 6144, %s2910, %s2882, [#allocation21], [#allocation22], %s2926, 0
        $region112: #{_lambda_.1} parent=71 // pred_fallthru
          _
      $region72: #{_lambda_.1} parent=5 // pred_fallthru
        _
      %p2947 = scmp.le.s32.totalorder 2, %s36
      // Predicated region
      $region113: #{_lambda_.1} parent=5 // pred_check
        %p2948 = pneg %p2947
      $region114: #{_lambda_.1} parent=5 // pred_check_branch
        %2950 = sbr.rel (%p2948) target = $region116
      $region115: #{_lambda_.1} parent=5 // pred_region
        %s2951 = ssub.s32 %s36, 2
        // Predicated region
        $region117: #{_lambda_.1} parent=115 // pred_check
          %p2952 = pneg %p348
        $region118: #{_lambda_.1} parent=115 // pred_check_branch
          %2954 = sbr.rel (%p2952) target = $region120
        $region119: #{_lambda_.1} parent=115 // pred_region
          %s2955 = sand.u32 %s333, 1
          %s2956 = scalar_lea.sflag [#allocation4], %s2955
          %s2957 = sand.u32 %s333, 1
          %s2958 = smul.addr %s2957, 128
          %s2959 = scalar_lea.vmem [#allocation16], %s2958
          %2960 = dma.done %s2956, 2048
        $region120: #{_lambda_.1} parent=115 // pred_fallthru
          _
        // Predicated region
        $region121: #{_lambda_.1} parent=115 // pred_check
          %p2961 = pneg %p374
        $region122: #{_lambda_.1} parent=115 // pred_check_branch
          %2963 = sbr.rel (%p2961) target = $region124
        $region123: #{_lambda_.1} parent=115 // pred_region
          %s2964 = sand.u32 %s359, 1
          %s2965 = scalar_lea.sflag [#allocation18], %s2964
          %s2966 = sand.u32 %s359, 1
          %s2967 = smul.addr %s2966, 384
          %s2968 = scalar_lea.vmem [#allocation17], %s2967
          %2969 = dma.done %s2965, 6144
        $region124: #{_lambda_.1} parent=115 // pred_fallthru
          _
      $region116: #{_lambda_.1} parent=5 // pred_fallthru
        _
    $region6: #{_lambda_.1} parent=1 // loop_footer
      %s40 = sadd.s32 1, %s36
    $region7: #{_lambda_.1} parent=1 // loop_footer_branch
      %35 = sbr.rel target = $region3
    $region8: #{_lambda_.1} parent=1 // loop_exit
      _
    %2970 = vsyncpa [#allocation3], 1
    %s2971 = scalar_lea.sflag [#allocation3], 1
    %2972 = vsyncpa %s2971, 1
    %2973 = vsyncpa [#allocation6], 1
    %s2974 = scalar_lea.sflag [#allocation6], 1
    %2975 = vsyncpa %s2974, 1
    %2976 = vsyncpa [#allocation9], 1
    %2977 = vsyncpa [#allocation12], 1
    %2978 = vsyncpa [#allocation15], 1
    %2979 = vsyncpa [#allocation4], 1
    %s2980 = scalar_lea.sflag [#allocation4], 1
    %2981 = vsyncpa %s2980, 1
    %2982 = vsyncpa [#allocation18], 1
    %s2983 = scalar_lea.sflag [#allocation18], 1
    %2984 = vsyncpa %s2983, 1

</llo_original>
